<compile_context>
chip_gen: v5e
topology: v5e:2x2
jax: 0.10.0
libtpu: 0.0.40
codegen_flags: <defaults>
</compile_context>

<pallas_src>
import functools

import jax
import jax.numpy as jnp
from jax.experimental import pallas as pl
from jax.experimental.pallas import tpu as pltpu

BN_EPS = 1e-5             # nn.BatchNorm2d default
LANE = 128                # vreg lane width; channels padded to a multiple of this
MXU_DTYPE = jnp.float32   # set to jnp.bfloat16 on v6e/v7x for ~2x MXU throughput
VMEM_LIMIT = 64 * 1024 * 1024   # re-derived for v7x's 64 MiB physical VMEM


def _round_up(x, m):
    return (x + m - 1) // m * m


# --------------------------------------------------------------------------- #
# Conv 3x3 (pad=1, no bias) + optional fused BN/ReLU prologue + BN partials    #
# --------------------------------------------------------------------------- #
def _conv3x3_kernel(x_main_ref, x_halo_ref, w_ref, scale_ref, shift_ref,
                    y_ref, stats_ref, patch_ref, *, fuse_prologue):
    """One (tile_h x W) row-tile of one image.

    x_main_ref : (1, TH, W+2, Cin)  padded-input rows [h*TH, (h+1)*TH)
    x_halo_ref : (1, 8,  W+2, Cin)  padded-input rows [(h+1)*TH, (h+1)*TH+8)
    w_ref      : (9*Cin, Cout)      3x3 taps flattened (ky, kx, cin)
    scale_ref  : (1, W+2, Cin)      fused BN+ReLU prologue scale (0 on pad cols)
    shift_ref  : (1, W+2, Cin)      fused BN+ReLU prologue shift (0 on pad cols)
    y_ref      : (1, TH, W, Cout)   raw (pre-BN) conv output
    stats_ref  : (1, 1, 2, Cout)    per-tile [sum, sum_of_squares]
    patch_ref  : (TH, W, 9*Cin)     VMEM scratch: im2col patch
    """
    th = x_main_ref.shape[1]
    cin = x_main_ref.shape[3]
    w_out = y_ref.shape[2]
    cout = y_ref.shape[3]
    h = pl.program_id(1)

    # Assemble the (TH+2, W+2, Cin) window: TH main rows + 2 halo rows.
    xw = jnp.concatenate([x_main_ref[0], x_halo_ref[0, :2]], axis=0)

    if fuse_prologue:
        # Previous block's BatchNorm + ReLU fused into this conv's load.
        # scale/shift are zero on the two W-padding columns, so those stay 0.
        xw = jnp.maximum(xw * scale_ref[...] + shift_ref[...], 0.0)
        # The top/bottom zero-pad rows must also stay exactly zero after the
        # affine+ReLU; they only appear as window row 0 of the first tile and
        # window row TH+1 of the last tile.
        keep_top = jnp.where(h == 0, 0.0, 1.0)
        keep_bot = jnp.where(h == pl.num_programs(1) - 1, 0.0, 1.0)
        xw = jnp.concatenate(
            [xw[0:1] * keep_top, xw[1:th + 1], xw[th + 1:th + 2] * keep_bot],
            axis=0)

    # im2col into VMEM scratch (lane-aligned 128-wide column writes), then a
    # single K = 9*Cin MXU contraction (accumulation stays inside the MXU).
    for dy in range(3):
        for dx in range(3):
            t = dy * 3 + dx
            patch_ref[:, :, t * cin:(t + 1) * cin] = xw[dy:dy + th, dx:dx + w_out, :]
    patch = patch_ref[...].reshape(th * w_out, 9 * cin)
    y = jnp.dot(patch.astype(MXU_DTYPE), w_ref[...].astype(MXU_DTYPE),
                preferred_element_type=jnp.float32)          # (TH*W, Cout)

    # One-pass BatchNorm partials for this tile.
    s = jnp.sum(y, axis=0, keepdims=True)
    ss = jnp.sum(y * y, axis=0, keepdims=True)
    stats_ref[0, 0] = jnp.concatenate([s, ss], axis=0)

    y_ref[...] = y.reshape(1, th, w_out, cout).astype(y_ref.dtype)


def _conv_block(x_nhwc, w_hwio, prologue_scale, prologue_shift, *, tile_h,
                fuse_prologue):
    """One 3x3 conv (pad=1, no bias): raw output + per-tile BN partial stats."""
    n, h, w, cin = x_nhwc.shape
    cout = w_hwio.shape[-1]
    nh = h // tile_h
    hb = tile_h // 8
    hpad = h + 8          # 1 top pad row, 1 bottom pad row, 6 spare for the 8-row halo block
    wp = w + 2

    xp = jnp.pad(x_nhwc, ((0, 0), (1, hpad - h - 1), (1, 1), (0, 0)))
    w2d = w_hwio.reshape(9 * cin, cout)

    # Fold the column padding mask into the prologue scale/shift so the fused
    # BN+ReLU maps the W-padding columns back to exact zeros.
    colmask = jnp.pad(jnp.ones((1, w, 1), jnp.float32), ((0, 0), (1, 1), (0, 0)))
    scale_arr = colmask * prologue_scale.reshape(1, 1, cin)
    shift_arr = colmask * prologue_shift.reshape(1, 1, cin)

    kernel = functools.partial(_conv3x3_kernel, fuse_prologue=fuse_prologue)
    y_raw, stats = pl.pallas_call(
        kernel,
        grid=(n, nh),
        in_specs=[
            pl.BlockSpec((1, tile_h, wp, cin), lambda i, j: (i, j, 0, 0)),       # main rows
            pl.BlockSpec((1, 8, wp, cin), lambda i, j: (i, (j + 1) * hb, 0, 0)),  # 1-row halo (+spare)
            pl.BlockSpec((9 * cin, cout), lambda i, j: (0, 0)),                   # weights (resident)
            pl.BlockSpec((1, wp, cin), lambda i, j: (0, 0, 0)),                   # prologue scale
            pl.BlockSpec((1, wp, cin), lambda i, j: (0, 0, 0)),                   # prologue shift
        ],
        out_specs=[
            pl.BlockSpec((1, tile_h, w, cout), lambda i, j: (i, j, 0, 0)),
            pl.BlockSpec((1, 1, 2, cout), lambda i, j: (i, j, 0, 0)),
        ],
        out_shape=[
            jax.ShapeDtypeStruct((n, h, w, cout), jnp.float32),
            jax.ShapeDtypeStruct((n, nh, 2, cout), jnp.float32),
        ],
        scratch_shapes=[pltpu.VMEM((tile_h, w, 9 * cin), jnp.float32)],
        compiler_params=pltpu.CompilerParams(
            dimension_semantics=("parallel", "parallel"),
            vmem_limit_bytes=VMEM_LIMIT),
    )(xp, xp, w2d, scale_arr, shift_arr)
    return y_raw, stats


def _bn_scale_shift(stats, count, gamma, beta):
    """Fold training-mode batch-stat BN into one per-channel scale/shift."""
    s = jnp.sum(stats[:, :, 0, :], axis=(0, 1))
    ss = jnp.sum(stats[:, :, 1, :], axis=(0, 1))
    mean = s / count
    var = jnp.maximum(ss / count - mean * mean, 0.0)   # biased variance (PyTorch fwd)
    inv = jax.lax.rsqrt(var + BN_EPS)
    scale = gamma * inv
    shift = beta - mean * scale
    return scale, shift


# --------------------------------------------------------------------------- #
# Final BN + ReLU (lane-dense elementwise kernel)                              #
# --------------------------------------------------------------------------- #
def _bn_relu_kernel(x_ref, scale_ref, shift_ref, o_ref):
    o_ref[...] = jnp.maximum(x_ref[...] * scale_ref[...] + shift_ref[...], 0.0)


def _bn_relu(y_raw, scale, shift, *, tile_h):
    n, h, w, c = y_raw.shape
    nh = h // tile_h
    return pl.pallas_call(
        _bn_relu_kernel,
        grid=(n, nh),
        in_specs=[
            pl.BlockSpec((1, tile_h, w, c), lambda i, j: (i, j, 0, 0)),
            pl.BlockSpec((1, c), lambda i, j: (0, 0)),
            pl.BlockSpec((1, c), lambda i, j: (0, 0)),
        ],
        out_specs=pl.BlockSpec((1, tile_h, w, c), lambda i, j: (i, j, 0, 0)),
        out_shape=jax.ShapeDtypeStruct((n, h, w, c), jnp.float32),
        compiler_params=pltpu.CompilerParams(
            dimension_semantics=("parallel", "parallel"),
            vmem_limit_bytes=VMEM_LIMIT),
    )(y_raw, scale.reshape(1, c), shift.reshape(1, c))


# --------------------------------------------------------------------------- #
# DoubleConv forward (NCHW in / NCHW out, like PyTorch)                        #
# --------------------------------------------------------------------------- #
def _double_conv_impl(x_nchw, params, *, tile_h=8):
    n, cin, h, w = x_nchw.shape
    cout = params["w1"].shape[-1]
    assert h % tile_h == 0 and tile_h % 8 == 0, \
        "tile_h must divide H and be a multiple of 8"

    cin_p = _round_up(cin, LANE)
    cmid_p = _round_up(cout, LANE)
    cout_p = _round_up(cout, LANE)

    # NCHW -> NHWC once; channels zero-padded to the 128-lane width.
    x = jnp.transpose(x_nchw, (0, 2, 3, 1)).astype(jnp.float32)
    x = jnp.pad(x, ((0, 0), (0, 0), (0, 0), (0, cin_p - cin)))

    w1 = jnp.pad(params["w1"], ((0, 0), (0, 0), (0, cin_p - cin), (0, cmid_p - cout)))
    w2 = jnp.pad(params["w2"], ((0, 0), (0, 0), (0, cmid_p - cout), (0, cout_p - cout)))
    g1 = jnp.pad(params["gamma1"], (0, cmid_p - cout), constant_values=1.0)
    b1 = jnp.pad(params["beta1"], (0, cmid_p - cout))
    g2 = jnp.pad(params["gamma2"], (0, cout_p - cout), constant_values=1.0)
    b2 = jnp.pad(params["beta2"], (0, cout_p - cout))

    count = n * h * w

    # Block 1: conv1 (+ BN1 partial stats).
    one = jnp.ones((cin_p,), jnp.float32)
    zero = jnp.zeros((cin_p,), jnp.float32)
    y1_raw, st1 = _conv_block(x, w1, one, zero, tile_h=tile_h, fuse_prologue=False)
    sc1, sh1 = _bn_scale_shift(st1, count, g1, b1)

    # Block 2: BN1 + ReLU1 fused into conv2's load (+ BN2 partial stats).
    y2_raw, st2 = _conv_block(y1_raw, w2, sc1, sh1, tile_h=tile_h, fuse_prologue=True)
    sc2, sh2 = _bn_scale_shift(st2, count, g2, b2)

    # Final BN2 + ReLU2; drop the channel padding; back to NCHW.
    out = _bn_relu(y2_raw, sc2, sh2, tile_h=tile_h)
    return jnp.transpose(out[:, :, :, :cout], (0, 3, 1, 2))


double_conv = jax.jit(_double_conv_impl, static_argnames=("tile_h",))


# ---- pure-JAX reference (for correctness check only) ------------------------
def _block_ref(x, w_hwio, gamma, beta):
    w_oihw = jnp.transpose(w_hwio, (3, 2, 0, 1))
    y = jax.lax.conv_general_dilated(
        x, w_oihw, window_strides=(1, 1), padding=((1, 1), (1, 1)),
        dimension_numbers=("NCHW", "OIHW", "NCHW"))
    mean = jnp.mean(y, axis=(0, 2, 3), keepdims=True)
    var = jnp.mean((y - mean) ** 2, axis=(0, 2, 3), keepdims=True)
    y = (y - mean) * jax.lax.rsqrt(var + BN_EPS) * gamma.reshape(1, -1, 1, 1) \
        + beta.reshape(1, -1, 1, 1)
    return jnp.maximum(y, 0.0)


def double_conv_ref(x_nchw, params):
    y = _block_ref(x_nchw, params["w1"], params["gamma1"], params["beta1"])
    return _block_ref(y, params["w2"], params["gamma2"], params["beta2"])


if __name__ == "__main__":
    key = jax.random.PRNGKey(0)
    kx, k1, k2, kg1, kb1, kg2, kb2 = jax.random.split(key, 7)

    N, Cin, Cout, H, W = 2, 4, 8, 16, 16
    x = jax.random.normal(kx, (N, Cin, H, W), jnp.float32)

    # Deterministic synthetic parameters (shapes per nn.Conv2d / nn.BatchNorm2d).
    params = {
        "w1": 0.1 * jax.random.normal(k1, (3, 3, Cin, Cout), jnp.float32),   # HWIO
        "gamma1": 1.0 + 0.1 * jax.random.normal(kg1, (Cout,), jnp.float32),
        "beta1": 0.1 * jax.random.normal(kb1, (Cout,), jnp.float32),
        "w2": 0.1 * jax.random.normal(k2, (3, 3, Cout, Cout), jnp.float32),  # HWIO
        "gamma2": 1.0 + 0.1 * jax.random.normal(kg2, (Cout,), jnp.float32),
        "beta2": 0.1 * jax.random.normal(kb2, (Cout,), jnp.float32),
    }

    out = jax.block_until_ready(double_conv(x, params))
    assert out.shape == (N, Cout, H, W), out.shape

    ref = jax.block_until_ready(double_conv_ref(x, params))
    max_err = float(jnp.max(jnp.abs(out - ref)))
    assert max_err < 1e-2, f"max abs error vs reference: {max_err}"

    print("KERNEL_OK")
</pallas_src>

<mosaic_0001>
module attributes {stable_mosaic.version = 11 : i64} {
  func.func @_conv3x3_kernel(%arg0: i32, %arg1: i32, %arg2: memref<1x8x18x128xf32, #tpu.memory_space<vmem>>, %arg3: memref<1x8x18x128xf32, #tpu.memory_space<vmem>>, %arg4: memref<1152x128xf32, #tpu.memory_space<vmem>>, %arg5: memref<1x18x128xf32, #tpu.memory_space<vmem>>, %arg6: memref<1x18x128xf32, #tpu.memory_space<vmem>>, %arg7: memref<1x8x16x128xf32, #tpu.memory_space<vmem>>, %arg8: memref<1x1x2x128xf32, #tpu.memory_space<vmem>>, %arg9: memref<8x16x1152xf32, #tpu.memory_space<vmem>>) attributes {dimension_semantics = [#tpu.dimension_semantics<parallel>, #tpu.dimension_semantics<parallel>], iteration_bounds = array<i64: 2, 2>, scalar_prefetch = 0 : i64, scratch_operands = 1 : i64, tpu.core_type = #tpu.core_type<tc>, window_params = [{transform_indices = @transform_0, window_bounds = array<i64: 1, 8, 18, 128>}, {transform_indices = @transform_1, window_bounds = array<i64: 1, 8, 18, 128>}, {pipeline_mode = #tpu.pipeline_mode<synchronous>, transform_indices = @transform_2, window_bounds = array<i64: 1152, 128>}, {pipeline_mode = #tpu.pipeline_mode<synchronous>, transform_indices = @transform_3, window_bounds = array<i64: 1, 18, 128>}, {pipeline_mode = #tpu.pipeline_mode<synchronous>, transform_indices = @transform_4, window_bounds = array<i64: 1, 18, 128>}, {transform_indices = @transform_5, window_bounds = array<i64: 1, 8, 16, 128>}, {transform_indices = @transform_6, window_bounds = array<i64: 1, 1, 2, 128>}]} {
    %c0 = arith.constant 0 : index
    %c0_0 = arith.constant 0 : index
    %c0_1 = arith.constant 0 : index
    %c0_2 = arith.constant 0 : index
    %0 = vector.load %arg2[%c0, %c0_0, %c0_1, %c0_2] : memref<1x8x18x128xf32, #tpu.memory_space<vmem>>, vector<1x8x18x128xf32>
    %1 = vector.shape_cast %0 : vector<1x8x18x128xf32> to vector<8x18x128xf32>
    %c0_3 = arith.constant 0 : index
    %c0_4 = arith.constant 0 : index
    %c0_5 = arith.constant 0 : index
    %c0_6 = arith.constant 0 : index
    %2 = vector.load %arg3[%c0_3, %c0_4, %c0_5, %c0_6] : memref<1x8x18x128xf32, #tpu.memory_space<vmem>>, vector<1x2x18x128xf32>
    %3 = vector.shape_cast %2 : vector<1x2x18x128xf32> to vector<2x18x128xf32>
    %4 = tpu.concatenate %1, %3 in 0 : vector<8x18x128xf32>, vector<2x18x128xf32> -> vector<10x18x128xf32>
    %5 = vector.extract_strided_slice %4 {offsets = [0, 0, 0], sizes = [8, 16, 128], strides = [1, 1, 1]} : vector<10x18x128xf32> to vector<8x16x128xf32>
    %c0_7 = arith.constant 0 : index
    %c0_8 = arith.constant 0 : index
    %c0_9 = arith.constant 0 : index
    %6 = vector.load %arg9[%c0_7, %c0_8, %c0_9] : memref<8x16x1152xf32, #tpu.memory_space<vmem>>, vector<8x16x128xf32>
    tpu.vector_store %arg9[%c0_7, %c0_8, %c0_9], %5 {strides = array<i32>} : memref<8x16x1152xf32, #tpu.memory_space<vmem>>, vector<8x16x128xf32>,
    %7 = vector.extract_strided_slice %4 {offsets = [0, 1, 0], sizes = [8, 16, 128], strides = [1, 1, 1]} : vector<10x18x128xf32> to vector<8x16x128xf32>
    %c0_10 = arith.constant 0 : index
    %c0_11 = arith.constant 0 : index
    %c128 = arith.constant 128 : index
    %8 = vector.load %arg9[%c0_10, %c0_11, %c128] : memref<8x16x1152xf32, #tpu.memory_space<vmem>>, vector<8x16x128xf32>
    tpu.vector_store %arg9[%c0_10, %c0_11, %c128], %7 {strides = array<i32>} : memref<8x16x1152xf32, #tpu.memory_space<vmem>>, vector<8x16x128xf32>,
    %9 = vector.extract_strided_slice %4 {offsets = [0, 2, 0], sizes = [8, 16, 128], strides = [1, 1, 1]} : vector<10x18x128xf32> to vector<8x16x128xf32>
    %c0_12 = arith.constant 0 : index
    %c0_13 = arith.constant 0 : index
    %c256 = arith.constant 256 : index
    %10 = vector.load %arg9[%c0_12, %c0_13, %c256] : memref<8x16x1152xf32, #tpu.memory_space<vmem>>, vector<8x16x128xf32>
    tpu.vector_store %arg9[%c0_12, %c0_13, %c256], %9 {strides = array<i32>} : memref<8x16x1152xf32, #tpu.memory_space<vmem>>, vector<8x16x128xf32>,
    %11 = vector.extract_strided_slice %4 {offsets = [1, 0, 0], sizes = [8, 16, 128], strides = [1, 1, 1]} : vector<10x18x128xf32> to vector<8x16x128xf32>
    %c0_14 = arith.constant 0 : index
    %c0_15 = arith.constant 0 : index
    %c384 = arith.constant 384 : index
    %12 = vector.load %arg9[%c0_14, %c0_15, %c384] : memref<8x16x1152xf32, #tpu.memory_space<vmem>>, vector<8x16x128xf32>
    tpu.vector_store %arg9[%c0_14, %c0_15, %c384], %11 {strides = array<i32>} : memref<8x16x1152xf32, #tpu.memory_space<vmem>>, vector<8x16x128xf32>,
    %13 = vector.extract_strided_slice %4 {offsets = [1, 1, 0], sizes = [8, 16, 128], strides = [1, 1, 1]} : vector<10x18x128xf32> to vector<8x16x128xf32>
    %c0_16 = arith.constant 0 : index
    %c0_17 = arith.constant 0 : index
    %c512 = arith.constant 512 : index
    %14 = vector.load %arg9[%c0_16, %c0_17, %c512] : memref<8x16x1152xf32, #tpu.memory_space<vmem>>, vector<8x16x128xf32>
    tpu.vector_store %arg9[%c0_16, %c0_17, %c512], %13 {strides = array<i32>} : memref<8x16x1152xf32, #tpu.memory_space<vmem>>, vector<8x16x128xf32>,
    %15 = vector.extract_strided_slice %4 {offsets = [1, 2, 0], sizes = [8, 16, 128], strides = [1, 1, 1]} : vector<10x18x128xf32> to vector<8x16x128xf32>
    %c0_18 = arith.constant 0 : index
    %c0_19 = arith.constant 0 : index
    %c640 = arith.constant 640 : index
    %16 = vector.load %arg9[%c0_18, %c0_19, %c640] : memref<8x16x1152xf32, #tpu.memory_space<vmem>>, vector<8x16x128xf32>
    tpu.vector_store %arg9[%c0_18, %c0_19, %c640], %15 {strides = array<i32>} : memref<8x16x1152xf32, #tpu.memory_space<vmem>>, vector<8x16x128xf32>,
    %17 = vector.extract_strided_slice %4 {offsets = [2, 0, 0], sizes = [8, 16, 128], strides = [1, 1, 1]} : vector<10x18x128xf32> to vector<8x16x128xf32>
    %c0_20 = arith.constant 0 : index
    %c0_21 = arith.constant 0 : index
    %c768 = arith.constant 768 : index
    %18 = vector.load %arg9[%c0_20, %c0_21, %c768] : memref<8x16x1152xf32, #tpu.memory_space<vmem>>, vector<8x16x128xf32>
    tpu.vector_store %arg9[%c0_20, %c0_21, %c768], %17 {strides = array<i32>} : memref<8x16x1152xf32, #tpu.memory_space<vmem>>, vector<8x16x128xf32>,
    %19 = vector.extract_strided_slice %4 {offsets = [2, 1, 0], sizes = [8, 16, 128], strides = [1, 1, 1]} : vector<10x18x128xf32> to vector<8x16x128xf32>
    %c0_22 = arith.constant 0 : index
    %c0_23 = arith.constant 0 : index
    %c896 = arith.constant 896 : index
    %20 = vector.load %arg9[%c0_22, %c0_23, %c896] : memref<8x16x1152xf32, #tpu.memory_space<vmem>>, vector<8x16x128xf32>
    tpu.vector_store %arg9[%c0_22, %c0_23, %c896], %19 {strides = array<i32>} : memref<8x16x1152xf32, #tpu.memory_space<vmem>>, vector<8x16x128xf32>,
    %21 = vector.extract_strided_slice %4 {offsets = [2, 2, 0], sizes = [8, 16, 128], strides = [1, 1, 1]} : vector<10x18x128xf32> to vector<8x16x128xf32>
    %c0_24 = arith.constant 0 : index
    %c0_25 = arith.constant 0 : index
    %c1024 = arith.constant 1024 : index
    %22 = vector.load %arg9[%c0_24, %c0_25, %c1024] : memref<8x16x1152xf32, #tpu.memory_space<vmem>>, vector<8x16x128xf32>
    tpu.vector_store %arg9[%c0_24, %c0_25, %c1024], %21 {strides = array<i32>} : memref<8x16x1152xf32, #tpu.memory_space<vmem>>, vector<8x16x128xf32>,
    %c0_26 = arith.constant 0 : index
    %c0_27 = arith.constant 0 : index
    %c0_28 = arith.constant 0 : index
    %23 = vector.load %arg9[%c0_26, %c0_27, %c0_28] : memref<8x16x1152xf32, #tpu.memory_space<vmem>>, vector<8x16x1152xf32>
    %24 = vector.shape_cast %23 : vector<8x16x1152xf32> to vector<128x1152xf32>
    %c0_29 = arith.constant 0 : index
    %c0_30 = arith.constant 0 : index
    %25 = vector.load %arg4[%c0_29, %c0_30] : memref<1152x128xf32, #tpu.memory_space<vmem>>, vector<1152x128xf32>
    %cst = arith.constant dense<0.000000e+00> : vector<128x128xf32>
    %26 = tpu.matmul %24, %25, %cst {dimension_numbers = #tpu.dot_dimension_numbers<[1], [0], [0], [1], [0, 0, 1, 1], [], []>} : vector<128x1152xf32>, vector<1152x128xf32>, vector<128x128xf32> -> vector<128x128xf32>
    %cst_31 = arith.constant dense<0.000000e+00> : vector<128xf32>
    %27 = vector.multi_reduction <add>, %26, %cst_31 [0] : vector<128x128xf32> to vector<128xf32>
    %28 = vector.shape_cast %27 : vector<128xf32> to vector<1x128xf32>
    %29 = arith.mulf %26, %26 : vector<128x128xf32>
    %cst_32 = arith.constant dense<0.000000e+00> : vector<128xf32>
    %30 = vector.multi_reduction <add>, %29, %cst_32 [0] : vector<128x128xf32> to vector<128xf32>
    %31 = vector.shape_cast %30 : vector<128xf32> to vector<1x128xf32>
    %32 = tpu.concatenate %28, %31 in 0 : vector<1x128xf32>, vector<1x128xf32> -> vector<2x128xf32>
    %c0_33 = arith.constant 0 : index
    %c0_34 = arith.constant 0 : index
    %c0_35 = arith.constant 0 : index
    %c0_36 = arith.constant 0 : index
    %33 = vector.load %arg8[%c0_33, %c0_34, %c0_35, %c0_36] : memref<1x1x2x128xf32, #tpu.memory_space<vmem>>, vector<1x1x2x128xf32>
    %34 = vector.shape_cast %33 : vector<1x1x2x128xf32> to vector<2x128xf32>
    %35 = vector.shape_cast %32 : vector<2x128xf32> to vector<1x1x2x128xf32>
    tpu.vector_store %arg8[%c0_33, %c0_34, %c0_35, %c0_36], %35 {strides = array<i32>} : memref<1x1x2x128xf32, #tpu.memory_space<vmem>>, vector<1x1x2x128xf32>,
    %36 = vector.shape_cast %26 : vector<128x128xf32> to vector<1x8x16x128xf32>
    %c0_37 = arith.constant 0 : index
    %c0_38 = arith.constant 0 : index
    %c0_39 = arith.constant 0 : index
    %c0_40 = arith.constant 0 : index
    %37 = vector.load %arg7[%c0_37, %c0_38, %c0_39, %c0_40] : memref<1x8x16x128xf32, #tpu.memory_space<vmem>>, vector<1x8x16x128xf32>
    tpu.vector_store %arg7[%c0_37, %c0_38, %c0_39, %c0_40], %36 {strides = array<i32>} : memref<1x8x16x128xf32, #tpu.memory_space<vmem>>, vector<1x8x16x128xf32>,
    return
  }
  func.func @transform_0(%arg0: i32, %arg1: i32) -> (i32, i32, i32, i32) {
    %c0_i32 = arith.constant 0 : i32
    %c0_i32_0 = arith.constant 0 : i32
    %c0_i32_1 = arith.constant 0 : i32
    return %arg0, %arg1, %c0_i32, %c0_i32_0 : i32, i32, i32, i32
  }
  func.func @transform_1(%arg0: i32, %arg1: i32) -> (i32, i32, i32, i32) {
    %c1_i32 = arith.constant 1 : i32
    %0 = arith.addi %arg1, %c1_i32 : i32
    %c1_i32_0 = arith.constant 1 : i32
    %1 = arith.muli %0, %c1_i32_0 : i32
    %c0_i32 = arith.constant 0 : i32
    %c0_i32_1 = arith.constant 0 : i32
    %c0_i32_2 = arith.constant 0 : i32
    return %arg0, %1, %c0_i32, %c0_i32_1 : i32, i32, i32, i32
  }
  func.func @transform_2(%arg0: i32, %arg1: i32) -> (i32, i32) {
    %c0_i32 = arith.constant 0 : i32
    %c0_i32_0 = arith.constant 0 : i32
    %c0_i32_1 = arith.constant 0 : i32
    return %c0_i32, %c0_i32_0 : i32, i32
  }
  func.func @transform_3(%arg0: i32, %arg1: i32) -> (i32, i32, i32) {
    %c0_i32 = arith.constant 0 : i32
    %c0_i32_0 = arith.constant 0 : i32
    %c0_i32_1 = arith.constant 0 : i32
    %c0_i32_2 = arith.constant 0 : i32
    return %c0_i32, %c0_i32_0, %c0_i32_1 : i32, i32, i32
  }
  func.func @transform_4(%arg0: i32, %arg1: i32) -> (i32, i32, i32) {
    %c0_i32 = arith.constant 0 : i32
    %c0_i32_0 = arith.constant 0 : i32
    %c0_i32_1 = arith.constant 0 : i32
    %c0_i32_2 = arith.constant 0 : i32
    return %c0_i32, %c0_i32_0, %c0_i32_1 : i32, i32, i32
  }
  func.func @transform_5(%arg0: i32, %arg1: i32) -> (i32, i32, i32, i32) {
    %c0_i32 = arith.constant 0 : i32
    %c0_i32_0 = arith.constant 0 : i32
    %c0_i32_1 = arith.constant 0 : i32
    return %arg0, %arg1, %c0_i32, %c0_i32_0 : i32, i32, i32, i32
  }
  func.func @transform_6(%arg0: i32, %arg1: i32) -> (i32, i32, i32, i32) {
    %c0_i32 = arith.constant 0 : i32
    %c0_i32_0 = arith.constant 0 : i32
    %c0_i32_1 = arith.constant 0 : i32
    return %arg0, %arg1, %c0_i32, %c0_i32_0 : i32, i32, i32, i32
  }
}

module attributes {stable_mosaic.version = 11 : i64} {
  func.func @_conv3x3_kernel(%arg0: i32, %arg1: i32, %arg2: memref<1x8x18x128xf32, #tpu.memory_space<vmem>>, %arg3: memref<1x8x18x128xf32, #tpu.memory_space<vmem>>, %arg4: memref<1152x128xf32, #tpu.memory_space<vmem>>, %arg5: memref<1x18x128xf32, #tpu.memory_space<vmem>>, %arg6: memref<1x18x128xf32, #tpu.memory_space<vmem>>, %arg7: memref<1x8x16x128xf32, #tpu.memory_space<vmem>>, %arg8: memref<1x1x2x128xf32, #tpu.memory_space<vmem>>, %arg9: memref<8x16x1152xf32, #tpu.memory_space<vmem>>) attributes {dimension_semantics = [#tpu.dimension_semantics<parallel>, #tpu.dimension_semantics<parallel>], iteration_bounds = array<i64: 2, 2>, scalar_prefetch = 0 : i64, scratch_operands = 1 : i64, tpu.core_type = #tpu.core_type<tc>, window_params = [{transform_indices = @transform_0, window_bounds = array<i64: 1, 8, 18, 128>}, {transform_indices = @transform_1, window_bounds = array<i64: 1, 8, 18, 128>}, {pipeline_mode = #tpu.pipeline_mode<synchronous>, transform_indices = @transform_2, window_bounds = array<i64: 1152, 128>}, {pipeline_mode = #tpu.pipeline_mode<synchronous>, transform_indices = @transform_3, window_bounds = array<i64: 1, 18, 128>}, {pipeline_mode = #tpu.pipeline_mode<synchronous>, transform_indices = @transform_4, window_bounds = array<i64: 1, 18, 128>}, {transform_indices = @transform_5, window_bounds = array<i64: 1, 8, 16, 128>}, {transform_indices = @transform_6, window_bounds = array<i64: 1, 1, 2, 128>}]} {
    %c0 = arith.constant 0 : index
    %c0_0 = arith.constant 0 : index
    %c0_1 = arith.constant 0 : index
    %c0_2 = arith.constant 0 : index
    %0 = vector.load %arg2[%c0, %c0_0, %c0_1, %c0_2] : memref<1x8x18x128xf32, #tpu.memory_space<vmem>>, vector<1x8x18x128xf32>
    %1 = vector.shape_cast %0 : vector<1x8x18x128xf32> to vector<8x18x128xf32>
    %c0_3 = arith.constant 0 : index
    %c0_4 = arith.constant 0 : index
    %c0_5 = arith.constant 0 : index
    %c0_6 = arith.constant 0 : index
    %2 = vector.load %arg3[%c0_3, %c0_4, %c0_5, %c0_6] : memref<1x8x18x128xf32, #tpu.memory_space<vmem>>, vector<1x2x18x128xf32>
    %3 = vector.shape_cast %2 : vector<1x2x18x128xf32> to vector<2x18x128xf32>
    %4 = tpu.concatenate %1, %3 in 0 : vector<8x18x128xf32>, vector<2x18x128xf32> -> vector<10x18x128xf32>
    %c0_7 = arith.constant 0 : index
    %c0_8 = arith.constant 0 : index
    %c0_9 = arith.constant 0 : index
    %5 = vector.load %arg5[%c0_7, %c0_8, %c0_9] : memref<1x18x128xf32, #tpu.memory_space<vmem>>, vector<1x18x128xf32>
    %6 = vector.broadcast %5 : vector<1x18x128xf32> to vector<10x18x128xf32>
    %7 = arith.mulf %4, %6 : vector<10x18x128xf32>
    %c0_10 = arith.constant 0 : index
    %c0_11 = arith.constant 0 : index
    %c0_12 = arith.constant 0 : index
    %8 = vector.load %arg6[%c0_10, %c0_11, %c0_12] : memref<1x18x128xf32, #tpu.memory_space<vmem>>, vector<1x18x128xf32>
    %9 = vector.broadcast %8 : vector<1x18x128xf32> to vector<10x18x128xf32>
    %10 = arith.addf %7, %9 : vector<10x18x128xf32>
    %cst = arith.constant 0.000000e+00 : f32
    %11 = vector.broadcast %cst : f32 to vector<10x18x128xf32>
    %12 = arith.maximumf %10, %11 : vector<10x18x128xf32>
    %c0_i32 = arith.constant 0 : i32
    %13 = arith.cmpi eq, %arg1, %c0_i32 : i32
    %cst_13 = arith.constant 0.000000e+00 : f32
    %cst_14 = arith.constant 1.000000e+00 : f32
    %14 = arith.select %13, %cst_13, %cst_14 : f32
    %c1_i32 = arith.constant 1 : i32
    %15 = arith.cmpi eq, %arg1, %c1_i32 : i32
    %cst_15 = arith.constant 0.000000e+00 : f32
    %cst_16 = arith.constant 1.000000e+00 : f32
    %16 = arith.select %15, %cst_15, %cst_16 : f32
    %17 = vector.extract_strided_slice %12 {offsets = [0, 0, 0], sizes = [1, 18, 128], strides = [1, 1, 1]} : vector<10x18x128xf32> to vector<1x18x128xf32>
    %18 = vector.broadcast %14 : f32 to vector<1x18x128xf32>
    %19 = arith.mulf %17, %18 : vector<1x18x128xf32>
    %20 = vector.extract_strided_slice %12 {offsets = [1, 0, 0], sizes = [8, 18, 128], strides = [1, 1, 1]} : vector<10x18x128xf32> to vector<8x18x128xf32>
    %21 = vector.extract_strided_slice %12 {offsets = [9, 0, 0], sizes = [1, 18, 128], strides = [1, 1, 1]} : vector<10x18x128xf32> to vector<1x18x128xf32>
    %22 = vector.broadcast %16 : f32 to vector<1x18x128xf32>
    %23 = arith.mulf %21, %22 : vector<1x18x128xf32>
    %24 = tpu.concatenate %19, %20, %23 in 0 : vector<1x18x128xf32>, vector<8x18x128xf32>, vector<1x18x128xf32> -> vector<10x18x128xf32>
    %25 = vector.extract_strided_slice %24 {offsets = [0, 0, 0], sizes = [8, 16, 128], strides = [1, 1, 1]} : vector<10x18x128xf32> to vector<8x16x128xf32>
    %c0_17 = arith.constant 0 : index
    %c0_18 = arith.constant 0 : index
    %c0_19 = arith.constant 0 : index
    %26 = vector.load %arg9[%c0_17, %c0_18, %c0_19] : memref<8x16x1152xf32, #tpu.memory_space<vmem>>, vector<8x16x128xf32>
    tpu.vector_store %arg9[%c0_17, %c0_18, %c0_19], %25 {strides = array<i32>} : memref<8x16x1152xf32, #tpu.memory_space<vmem>>, vector<8x16x128xf32>,
    %27 = vector.extract_strided_slice %24 {offsets = [0, 1, 0], sizes = [8, 16, 128], strides = [1, 1, 1]} : vector<10x18x128xf32> to vector<8x16x128xf32>
    %c0_20 = arith.constant 0 : index
    %c0_21 = arith.constant 0 : index
    %c128 = arith.constant 128 : index
    %28 = vector.load %arg9[%c0_20, %c0_21, %c128] : memref<8x16x1152xf32, #tpu.memory_space<vmem>>, vector<8x16x128xf32>
    tpu.vector_store %arg9[%c0_20, %c0_21, %c128], %27 {strides = array<i32>} : memref<8x16x1152xf32, #tpu.memory_space<vmem>>, vector<8x16x128xf32>,
    %29 = vector.extract_strided_slice %24 {offsets = [0, 2, 0], sizes = [8, 16, 128], strides = [1, 1, 1]} : vector<10x18x128xf32> to vector<8x16x128xf32>
    %c0_22 = arith.constant 0 : index
    %c0_23 = arith.constant 0 : index
    %c256 = arith.constant 256 : index
    %30 = vector.load %arg9[%c0_22, %c0_23, %c256] : memref<8x16x1152xf32, #tpu.memory_space<vmem>>, vector<8x16x128xf32>
    tpu.vector_store %arg9[%c0_22, %c0_23, %c256], %29 {strides = array<i32>} : memref<8x16x1152xf32, #tpu.memory_space<vmem>>, vector<8x16x128xf32>,
    %31 = vector.extract_strided_slice %24 {offsets = [1, 0, 0], sizes = [8, 16, 128], strides = [1, 1, 1]} : vector<10x18x128xf32> to vector<8x16x128xf32>
    %c0_24 = arith.constant 0 : index
    %c0_25 = arith.constant 0 : index
    %c384 = arith.constant 384 : index
    %32 = vector.load %arg9[%c0_24, %c0_25, %c384] : memref<8x16x1152xf32, #tpu.memory_space<vmem>>, vector<8x16x128xf32>
    tpu.vector_store %arg9[%c0_24, %c0_25, %c384], %31 {strides = array<i32>} : memref<8x16x1152xf32, #tpu.memory_space<vmem>>, vector<8x16x128xf32>,
    %33 = vector.extract_strided_slice %24 {offsets = [1, 1, 0], sizes = [8, 16, 128], strides = [1, 1, 1]} : vector<10x18x128xf32> to vector<8x16x128xf32>
    %c0_26 = arith.constant 0 : index
    %c0_27 = arith.constant 0 : index
    %c512 = arith.constant 512 : index
    %34 = vector.load %arg9[%c0_26, %c0_27, %c512] : memref<8x16x1152xf32, #tpu.memory_space<vmem>>, vector<8x16x128xf32>
    tpu.vector_store %arg9[%c0_26, %c0_27, %c512], %33 {strides = array<i32>} : memref<8x16x1152xf32, #tpu.memory_space<vmem>>, vector<8x16x128xf32>,
    %35 = vector.extract_strided_slice %24 {offsets = [1, 2, 0], sizes = [8, 16, 128], strides = [1, 1, 1]} : vector<10x18x128xf32> to vector<8x16x128xf32>
    %c0_28 = arith.constant 0 : index
    %c0_29 = arith.constant 0 : index
    %c640 = arith.constant 640 : index
    %36 = vector.load %arg9[%c0_28, %c0_29, %c640] : memref<8x16x1152xf32, #tpu.memory_space<vmem>>, vector<8x16x128xf32>
    tpu.vector_store %arg9[%c0_28, %c0_29, %c640], %35 {strides = array<i32>} : memref<8x16x1152xf32, #tpu.memory_space<vmem>>, vector<8x16x128xf32>,
    %37 = vector.extract_strided_slice %24 {offsets = [2, 0, 0], sizes = [8, 16, 128], strides = [1, 1, 1]} : vector<10x18x128xf32> to vector<8x16x128xf32>
    %c0_30 = arith.constant 0 : index
    %c0_31 = arith.constant 0 : index
    %c768 = arith.constant 768 : index
    %38 = vector.load %arg9[%c0_30, %c0_31, %c768] : memref<8x16x1152xf32, #tpu.memory_space<vmem>>, vector<8x16x128xf32>
    tpu.vector_store %arg9[%c0_30, %c0_31, %c768], %37 {strides = array<i32>} : memref<8x16x1152xf32, #tpu.memory_space<vmem>>, vector<8x16x128xf32>,
    %39 = vector.extract_strided_slice %24 {offsets = [2, 1, 0], sizes = [8, 16, 128], strides = [1, 1, 1]} : vector<10x18x128xf32> to vector<8x16x128xf32>
    %c0_32 = arith.constant 0 : index
    %c0_33 = arith.constant 0 : index
    %c896 = arith.constant 896 : index
    %40 = vector.load %arg9[%c0_32, %c0_33, %c896] : memref<8x16x1152xf32, #tpu.memory_space<vmem>>, vector<8x16x128xf32>
    tpu.vector_store %arg9[%c0_32, %c0_33, %c896], %39 {strides = array<i32>} : memref<8x16x1152xf32, #tpu.memory_space<vmem>>, vector<8x16x128xf32>,
    %41 = vector.extract_strided_slice %24 {offsets = [2, 2, 0], sizes = [8, 16, 128], strides = [1, 1, 1]} : vector<10x18x128xf32> to vector<8x16x128xf32>
    %c0_34 = arith.constant 0 : index
    %c0_35 = arith.constant 0 : index
    %c1024 = arith.constant 1024 : index
    %42 = vector.load %arg9[%c0_34, %c0_35, %c1024] : memref<8x16x1152xf32, #tpu.memory_space<vmem>>, vector<8x16x128xf32>
    tpu.vector_store %arg9[%c0_34, %c0_35, %c1024], %41 {strides = array<i32>} : memref<8x16x1152xf32, #tpu.memory_space<vmem>>, vector<8x16x128xf32>,
    %c0_36 = arith.constant 0 : index
    %c0_37 = arith.constant 0 : index
    %c0_38 = arith.constant 0 : index
    %43 = vector.load %arg9[%c0_36, %c0_37, %c0_38] : memref<8x16x1152xf32, #tpu.memory_space<vmem>>, vector<8x16x1152xf32>
    %44 = vector.shape_cast %43 : vector<8x16x1152xf32> to vector<128x1152xf32>
    %c0_39 = arith.constant 0 : index
    %c0_40 = arith.constant 0 : index
    %45 = vector.load %arg4[%c0_39, %c0_40] : memref<1152x128xf32, #tpu.memory_space<vmem>>, vector<1152x128xf32>
    %cst_41 = arith.constant dense<0.000000e+00> : vector<128x128xf32>
    %46 = tpu.matmul %44, %45, %cst_41 {dimension_numbers = #tpu.dot_dimension_numbers<[1], [0], [0], [1], [0, 0, 1, 1], [], []>} : vector<128x1152xf32>, vector<1152x128xf32>, vector<128x128xf32> -> vector<128x128xf32>
    %cst_42 = arith.constant dense<0.000000e+00> : vector<128xf32>
    %47 = vector.multi_reduction <add>, %46, %cst_42 [0] : vector<128x128xf32> to vector<128xf32>
    %48 = vector.shape_cast %47 : vector<128xf32> to vector<1x128xf32>
    %49 = arith.mulf %46, %46 : vector<128x128xf32>
    %cst_43 = arith.constant dense<0.000000e+00> : vector<128xf32>
    %50 = vector.multi_reduction <add>, %49, %cst_43 [0] : vector<128x128xf32> to vector<128xf32>
    %51 = vector.shape_cast %50 : vector<128xf32> to vector<1x128xf32>
    %52 = tpu.concatenate %48, %51 in 0 : vector<1x128xf32>, vector<1x128xf32> -> vector<2x128xf32>
    %c0_44 = arith.constant 0 : index
    %c0_45 = arith.constant 0 : index
    %c0_46 = arith.constant 0 : index
    %c0_47 = arith.constant 0 : index
    %53 = vector.load %arg8[%c0_44, %c0_45, %c0_46, %c0_47] : memref<1x1x2x128xf32, #tpu.memory_space<vmem>>, vector<1x1x2x128xf32>
    %54 = vector.shape_cast %53 : vector<1x1x2x128xf32> to vector<2x128xf32>
    %55 = vector.shape_cast %52 : vector<2x128xf32> to vector<1x1x2x128xf32>
    tpu.vector_store %arg8[%c0_44, %c0_45, %c0_46, %c0_47], %55 {strides = array<i32>} : memref<1x1x2x128xf32, #tpu.memory_space<vmem>>, vector<1x1x2x128xf32>,
    %56 = vector.shape_cast %46 : vector<128x128xf32> to vector<1x8x16x128xf32>
    %c0_48 = arith.constant 0 : index
    %c0_49 = arith.constant 0 : index
    %c0_50 = arith.constant 0 : index
    %c0_51 = arith.constant 0 : index
    %57 = vector.load %arg7[%c0_48, %c0_49, %c0_50, %c0_51] : memref<1x8x16x128xf32, #tpu.memory_space<vmem>>, vector<1x8x16x128xf32>
    tpu.vector_store %arg7[%c0_48, %c0_49, %c0_50, %c0_51], %56 {strides = array<i32>} : memref<1x8x16x128xf32, #tpu.memory_space<vmem>>, vector<1x8x16x128xf32>,
    return
  }
  func.func @transform_0(%arg0: i32, %arg1: i32) -> (i32, i32, i32, i32) {
    %c0_i32 = arith.constant 0 : i32
    %c0_i32_0 = arith.constant 0 : i32
    %c0_i32_1 = arith.constant 0 : i32
    return %arg0, %arg1, %c0_i32, %c0_i32_0 : i32, i32, i32, i32
  }
  func.func @transform_1(%arg0: i32, %arg1: i32) -> (i32, i32, i32, i32) {
    %c1_i32 = arith.constant 1 : i32
    %0 = arith.addi %arg1, %c1_i32 : i32
    %c1_i32_0 = arith.constant 1 : i32
    %1 = arith.muli %0, %c1_i32_0 : i32
    %c0_i32 = arith.constant 0 : i32
    %c0_i32_1 = arith.constant 0 : i32
    %c0_i32_2 = arith.constant 0 : i32
    return %arg0, %1, %c0_i32, %c0_i32_1 : i32, i32, i32, i32
  }
  func.func @transform_2(%arg0: i32, %arg1: i32) -> (i32, i32) {
    %c0_i32 = arith.constant 0 : i32
    %c0_i32_0 = arith.constant 0 : i32
    %c0_i32_1 = arith.constant 0 : i32
    return %c0_i32, %c0_i32_0 : i32, i32
  }
  func.func @transform_3(%arg0: i32, %arg1: i32) -> (i32, i32, i32) {
    %c0_i32 = arith.constant 0 : i32
    %c0_i32_0 = arith.constant 0 : i32
    %c0_i32_1 = arith.constant 0 : i32
    %c0_i32_2 = arith.constant 0 : i32
    return %c0_i32, %c0_i32_0, %c0_i32_1 : i32, i32, i32
  }
  func.func @transform_4(%arg0: i32, %arg1: i32) -> (i32, i32, i32) {
    %c0_i32 = arith.constant 0 : i32
    %c0_i32_0 = arith.constant 0 : i32
    %c0_i32_1 = arith.constant 0 : i32
    %c0_i32_2 = arith.constant 0 : i32
    return %c0_i32, %c0_i32_0, %c0_i32_1 : i32, i32, i32
  }
  func.func @transform_5(%arg0: i32, %arg1: i32) -> (i32, i32, i32, i32) {
    %c0_i32 = arith.constant 0 : i32
    %c0_i32_0 = arith.constant 0 : i32
    %c0_i32_1 = arith.constant 0 : i32
    return %arg0, %arg1, %c0_i32, %c0_i32_0 : i32, i32, i32, i32
  }
  func.func @transform_6(%arg0: i32, %arg1: i32) -> (i32, i32, i32, i32) {
    %c0_i32 = arith.constant 0 : i32
    %c0_i32_0 = arith.constant 0 : i32
    %c0_i32_1 = arith.constant 0 : i32
    return %arg0, %arg1, %c0_i32, %c0_i32_0 : i32, i32, i32, i32
  }
}

module attributes {stable_mosaic.version = 11 : i64} {
  func.func @_bn_relu_kernel(%arg0: i32, %arg1: i32, %arg2: memref<1x8x16x128xf32, #tpu.memory_space<vmem>>, %arg3: memref<1x128xf32, #tpu.memory_space<vmem>>, %arg4: memref<1x128xf32, #tpu.memory_space<vmem>>, %arg5: memref<1x8x16x128xf32, #tpu.memory_space<vmem>>) attributes {dimension_semantics = [#tpu.dimension_semantics<parallel>, #tpu.dimension_semantics<parallel>], iteration_bounds = array<i64: 2, 2>, scalar_prefetch = 0 : i64, scratch_operands = 0 : i64, tpu.core_type = #tpu.core_type<tc>, window_params = [{transform_indices = @transform_0, window_bounds = array<i64: 1, 8, 16, 128>}, {pipeline_mode = #tpu.pipeline_mode<synchronous>, transform_indices = @transform_1, window_bounds = array<i64: 1, 128>}, {pipeline_mode = #tpu.pipeline_mode<synchronous>, transform_indices = @transform_2, window_bounds = array<i64: 1, 128>}, {transform_indices = @transform_3, window_bounds = array<i64: 1, 8, 16, 128>}]} {
    %c0 = arith.constant 0 : index
    %c0_0 = arith.constant 0 : index
    %c0_1 = arith.constant 0 : index
    %c0_2 = arith.constant 0 : index
    %0 = vector.load %arg2[%c0, %c0_0, %c0_1, %c0_2] : memref<1x8x16x128xf32, #tpu.memory_space<vmem>>, vector<1x8x16x128xf32>
    %c0_3 = arith.constant 0 : index
    %c0_4 = arith.constant 0 : index
    %1 = vector.load %arg3[%c0_3, %c0_4] : memref<1x128xf32, #tpu.memory_space<vmem>>, vector<1x128xf32>
    %2 = vector.shape_cast %1 : vector<1x128xf32> to vector<1x1x1x128xf32>
    %3 = vector.broadcast %2 : vector<1x1x1x128xf32> to vector<1x8x16x128xf32>
    %4 = arith.mulf %0, %3 : vector<1x8x16x128xf32>
    %c0_5 = arith.constant 0 : index
    %c0_6 = arith.constant 0 : index
    %5 = vector.load %arg4[%c0_5, %c0_6] : memref<1x128xf32, #tpu.memory_space<vmem>>, vector<1x128xf32>
    %6 = vector.shape_cast %5 : vector<1x128xf32> to vector<1x1x1x128xf32>
    %7 = vector.broadcast %6 : vector<1x1x1x128xf32> to vector<1x8x16x128xf32>
    %8 = arith.addf %4, %7 : vector<1x8x16x128xf32>
    %cst = arith.constant 0.000000e+00 : f32
    %9 = vector.broadcast %cst : f32 to vector<1x8x16x128xf32>
    %10 = arith.maximumf %8, %9 : vector<1x8x16x128xf32>
    %c0_7 = arith.constant 0 : index
    %c0_8 = arith.constant 0 : index
    %c0_9 = arith.constant 0 : index
    %c0_10 = arith.constant 0 : index
    %11 = vector.load %arg5[%c0_7, %c0_8, %c0_9, %c0_10] : memref<1x8x16x128xf32, #tpu.memory_space<vmem>>, vector<1x8x16x128xf32>
    tpu.vector_store %arg5[%c0_7, %c0_8, %c0_9, %c0_10], %10 {strides = array<i32>} : memref<1x8x16x128xf32, #tpu.memory_space<vmem>>, vector<1x8x16x128xf32>,
    return
  }
  func.func @transform_0(%arg0: i32, %arg1: i32) -> (i32, i32, i32, i32) {
    %c0_i32 = arith.constant 0 : i32
    %c0_i32_0 = arith.constant 0 : i32
    %c0_i32_1 = arith.constant 0 : i32
    return %arg0, %arg1, %c0_i32, %c0_i32_0 : i32, i32, i32, i32
  }
  func.func @transform_1(%arg0: i32, %arg1: i32) -> (i32, i32) {
    %c0_i32 = arith.constant 0 : i32
    %c0_i32_0 = arith.constant 0 : i32
    %c0_i32_1 = arith.constant 0 : i32
    return %c0_i32, %c0_i32_0 : i32, i32
  }
  func.func @transform_2(%arg0: i32, %arg1: i32) -> (i32, i32) {
    %c0_i32 = arith.constant 0 : i32
    %c0_i32_0 = arith.constant 0 : i32
    %c0_i32_1 = arith.constant 0 : i32
    return %c0_i32, %c0_i32_0 : i32, i32
  }
  func.func @transform_3(%arg0: i32, %arg1: i32) -> (i32, i32, i32, i32) {
    %c0_i32 = arith.constant 0 : i32
    %c0_i32_0 = arith.constant 0 : i32
    %c0_i32_1 = arith.constant 0 : i32
    return %arg0, %arg1, %c0_i32, %c0_i32_0 : i32, i32, i32, i32
  }
}

</mosaic_0001>

<llo_original>
// kernel: _double_conv_impl.5
$region0: #{_double_conv_impl.5}
  #allocation0 [shape = 'u32[]', space=smem, size = 0x4, offset = 0x4, fixed_abs, tag = 'smem constant byte address 0x4 - core index']
  #allocation1 [shape = 'u32[72,128]{1,0:T(1,128)}', space=vmem, size = 0x9000, scoped, tag = 'internal scratch']
  %s0 = inlined_call_operand.vmem [shape: f32[2,16,16,128], index: 0, kind: input, shape index: {}]
  %s1 = inlined_call_operand.vmem [shape: f32[1,128], index: 1, kind: input, shape index: {}]
  %s2 = inlined_call_operand.vmem [shape: f32[1,128], index: 2, kind: input, shape index: {}]
  %s3 = inlined_call_operand.vmem [shape: f32[2,16,16,128], index: 3, kind: output, shape index: {}]
  %s4 = sld [smem:[#allocation0]]
  $region45: #{_double_conv_impl.5} parent=0
    _
  %s6 = ssub.s32 1, %s4
  %s7 = scalar_select 0, %s6, %s4
  loop: start=0, step=1, limit=6
  $region2: #{_double_conv_impl.5} parent=0 // loop_pre_header
    _
  $region3: #{_double_conv_impl.5} parent=0 // loop_header
    %s9 = sphi 0, %s13
    %p10 = scmp.ge.s32.totalorder %s9, 6
    %s16 = sphi 0, %s28
    %s17 = sphi 0, %s24
    %s18 = sphi 0, %s16
    %s19 = sphi 0, %s17
    %s20 = sphi 0, %s18
    %s21 = sphi 0, %s19
    %s33 = sphi 0, %s35
    %s36 = sphi 0, %s33
    %s37 = sphi 0, %s36
    %s53 = sphi 0, %s37
    %s57 = sphi 0, %s57
    %s59 = sphi 0, %s57
    %s60 = sphi 0, %s59
    %s74 = sphi 0, %s60
    %s78 = sphi 0, %s78
    %s80 = sphi 0, %s78
    %s81 = sphi 0, %s80
    %s95 = sphi 0, %s81
    %s103 = sphi 0, %s105
    %s106 = sphi 0, %s103
    %s107 = sphi 0, %s106
    %s123 = sphi 0, %s107
  $region4: #{_double_conv_impl.5} parent=0 // loop_header_branch
    %12 = sbr.rel (%p10) target = $region8
  $region5: #{_double_conv_impl.5} parent=0 // loop_body
    %s14 = ssub.s32 %s9, 1
    %s15 = ssub.s32 %s9, 2
    %s22 = sadd.s32 1, %s17
    %p23 = scmp.ge.s32.totalorder %s22, 2
    %s24 = scalar_select %p23, 0, %s22
    %s25 = sadd.s32 1, %s16
    %s26 = scalar_select %p23, %s25, %s16
    %p27 = scmp.ge.s32.totalorder %s26, 2
    %s28 = scalar_select %p27, 0, %s26
    %s29 = ssub.s32 %s16, %s28
    %s30 = ssub.s32 %s17, %s24
    %s31 = sor.u32 %s29, %s30
    %p32 = scmp.eq.s32.totalorder %s31, 0
    %s34 = sadd.s32 %s33, 1
    %s35 = scalar_select %p32, %s33, %s34
    %p38 = pneg %p32
    %p39 = scmp.eq.s32.totalorder %s9, 3
    %p40 = por %p38, %p39
    %p41 = scmp.ne.s32.totalorder %s33, %s36
    %p42 = scmp.eq.s32.totalorder %s9, 0
    %p43 = por %p41, %p42
    %p44 = scmp.ne.s32.totalorder %s33, %s36
    %p45 = scmp.eq.s32.totalorder %s14, 3
    %p46 = por %p44, %p45
    %p47 = scmp.ne.s32.totalorder %s36, %s37
    %p48 = scmp.eq.s32.totalorder %s14, 0
    %p49 = por %p47, %p48
    %p50 = scmp.ne.s32.totalorder %s36, %s37
    %p51 = scmp.eq.s32.totalorder %s15, 3
    %p52 = por %p50, %p51
    %p54 = scmp.ne.s32.totalorder %s37, %s53
    %p55 = scmp.eq.s32.totalorder %s15, 0
    %p56 = por %p54, %p55
    %s58 = sadd.s32 %s57, 1
    %p61 = scmp.eq.s32.totalorder %s9, 3
    %p62 = scmp.ne.s32.totalorder %s57, %s59
    %p63 = scmp.eq.s32.totalorder %s9, 0
    %p64 = por %p62, %p63
    %p65 = scmp.ne.s32.totalorder %s57, %s59
    %p66 = scmp.eq.s32.totalorder %s14, 3
    %p67 = por %p65, %p66
    %p68 = scmp.ne.s32.totalorder %s59, %s60
    %p69 = scmp.eq.s32.totalorder %s14, 0
    %p70 = por %p68, %p69
    %p71 = scmp.ne.s32.totalorder %s59, %s60
    %p72 = scmp.eq.s32.totalorder %s15, 3
    %p73 = por %p71, %p72
    %p75 = scmp.ne.s32.totalorder %s60, %s74
    %p76 = scmp.eq.s32.totalorder %s15, 0
    %p77 = por %p75, %p76
    %s79 = sadd.s32 %s78, 1
    %p82 = scmp.eq.s32.totalorder %s9, 3
    %p83 = scmp.ne.s32.totalorder %s78, %s80
    %p84 = scmp.eq.s32.totalorder %s9, 0
    %p85 = por %p83, %p84
    %p86 = scmp.ne.s32.totalorder %s78, %s80
    %p87 = scmp.eq.s32.totalorder %s14, 3
    %p88 = por %p86, %p87
    %p89 = scmp.ne.s32.totalorder %s80, %s81
    %p90 = scmp.eq.s32.totalorder %s14, 0
    %p91 = por %p89, %p90
    %p92 = scmp.ne.s32.totalorder %s80, %s81
    %p93 = scmp.eq.s32.totalorder %s15, 3
    %p94 = por %p92, %p93
    %p96 = scmp.ne.s32.totalorder %s81, %s95
    %p97 = scmp.eq.s32.totalorder %s15, 0
    %p98 = por %p96, %p97
    %s99 = ssub.s32 %s16, %s28
    %s100 = ssub.s32 %s17, %s24
    %s101 = sor.u32 %s99, %s100
    %p102 = scmp.eq.s32.totalorder %s101, 0
    %s104 = sadd.s32 %s103, 1
    %s105 = scalar_select %p102, %s103, %s104
    %p108 = pneg %p102
    %p109 = scmp.eq.s32.totalorder %s9, 3
    %p110 = por %p108, %p109
    %p111 = scmp.ne.s32.totalorder %s103, %s106
    %p112 = scmp.eq.s32.totalorder %s9, 0
    %p113 = por %p111, %p112
    %p114 = scmp.ne.s32.totalorder %s103, %s106
    %p115 = scmp.eq.s32.totalorder %s14, 3
    %p116 = por %p114, %p115
    %p117 = scmp.ne.s32.totalorder %s106, %s107
    %p118 = scmp.eq.s32.totalorder %s14, 0
    %p119 = por %p117, %p118
    %p120 = scmp.ne.s32.totalorder %s106, %s107
    %p121 = scmp.eq.s32.totalorder %s15, 3
    %p122 = por %p120, %p121
    %p124 = scmp.ne.s32.totalorder %s107, %s123
    %p125 = scmp.eq.s32.totalorder %s15, 0
    %p126 = por %p124, %p125
    %p127 = scmp.le.s32.totalorder 1, %s9
    %p128 = scmp.lt.s32.totalorder %s9, 5
    %p129 = pnand %p127, %p128
    %p130 = pneg %p129
    // Predicated region
    $region9: #{_double_conv_impl.5} parent=5 // pred_check
      _
    $region10: #{_double_conv_impl.5} parent=5 // pred_check_branch
      %132 = sbr.rel (%p129) target = $region12
    $region11: #{_double_conv_impl.5} parent=5 // pred_region
      %s133 = ssub.s32 %s9, 1
      // Predicated region
      $region13: #{_double_conv_impl.5} parent=11 // pred_check
        %p134 = pneg %p70
      $region14: #{_double_conv_impl.5} parent=11 // pred_check_branch
        %136 = sbr.rel (%p134) target = $region16
      $region15: #{_double_conv_impl.5} parent=11 // pred_region
        _
      $region16: #{_double_conv_impl.5} parent=11 // pred_fallthru
        _
      // Predicated region
      $region17: #{_double_conv_impl.5} parent=11 // pred_check
        %p137 = pneg %p91
      $region18: #{_double_conv_impl.5} parent=11 // pred_check_branch
        %139 = sbr.rel (%p137) target = $region20
      $region19: #{_double_conv_impl.5} parent=11 // pred_region
        _
      $region20: #{_double_conv_impl.5} parent=11 // pred_fallthru
        _
    $region12: #{_double_conv_impl.5} parent=5 // pred_fallthru
      _
    %p140 = scmp.lt.s32.totalorder %s9, 4
    // Predicated region
    $region21: #{_double_conv_impl.5} parent=5 // pred_check
      %p141 = pneg %p140
    $region22: #{_double_conv_impl.5} parent=5 // pred_check_branch
      %143 = sbr.rel (%p141) target = $region24
    $region23: #{_double_conv_impl.5} parent=5 // pred_region
      // Predicated region
      $region25: #{_double_conv_impl.5} parent=23 // pred_check
        %p144 = pneg %p43
      $region26: #{_double_conv_impl.5} parent=23 // pred_check_branch
        %146 = sbr.rel (%p144) target = $region28
      $region27: #{_double_conv_impl.5} parent=23 // pred_region
        %s147 = smul.u32 8, %s17
        %p148 = scmp.lt.s32.totalorder %s16, 1
        %s149 = scalar_select %p148, %s16, 1
        %p150 = scmp.lt.s32.totalorder %s147, 15
        %s151 = scalar_select %p150, %s147, 15
        %s152 = smul.addr %s151, 2
        %s153 = smul.addr %s149, 32
        %s154 = sadd.s32 %s152, %s153
        %s155 = smul.addr %s154, 8
        %s156 = scalar_lea.vmem %s0, %s155
        %s157 = smul.u32 8, %s17
      $region28: #{_double_conv_impl.5} parent=23 // pred_fallthru
        _
    $region24: #{_double_conv_impl.5} parent=5 // pred_fallthru
      _
    %p158 = scmp.le.s32.totalorder 1, %s9
    %p159 = scmp.lt.s32.totalorder %s9, 5
    %p160 = pnand %p158, %p159
    %p161 = pneg %p160
    // Predicated region
    $region29: #{_double_conv_impl.5} parent=5 // pred_check
      _
    $region30: #{_double_conv_impl.5} parent=5 // pred_check_branch
      %163 = sbr.rel (%p160) target = $region32
    $region31: #{_double_conv_impl.5} parent=5 // pred_region
      %s164 = ssub.s32 %s9, 1
      %s165 = smul.u32 8, %s19
      %p166 = scmp.lt.s32.totalorder %s18, 1
      %s167 = scalar_select %p166, %s18, 1
      %p168 = scmp.lt.s32.totalorder %s165, 15
      %s169 = scalar_select %p168, %s165, 15
      %s170 = smul.addr %s169, 2
      %s171 = smul.addr %s167, 32
      %s172 = sadd.s32 %s170, %s171
      %s173 = smul.addr %s172, 8
      %s174 = scalar_lea.vmem %s0, %s173
      %p175 = pneg %p49
      %p176 = pneg %p46
      %p177 = pneg %p70
      %p178 = pneg %p67
      %p179 = pneg %p91
      %p180 = pneg %p88
      %p181 = pneg %p119
      %p182 = pneg %p116
      %s183 = smul.u32 8, %s19
      %p184 = scmp.lt.s32.totalorder %s18, 1
      %s185 = scalar_select %p184, %s18, 1
      %p186 = scmp.lt.s32.totalorder %s183, 15
      %s187 = scalar_select %p186, %s183, 15
      %s188 = smul.addr %s187, 2
      %s189 = smul.addr %s185, 32
      %s190 = sadd.s32 %s188, %s189
      %s191 = smul.addr %s190, 8
      %s192 = scalar_lea.vmem %s3, %s191
      %s193 = smul.u32 8, %s19
      %p194 = scmp.lt.s32.totalorder %s18, 1
      %s195 = scalar_select %p194, %s18, 1
      %p196 = scmp.lt.s32.totalorder %s193, 15
      %s197 = scalar_select %p196, %s193, 15
      %s198 = smul.addr %s197, 2
      %s199 = smul.addr %s195, 32
      %s200 = sadd.s32 %s198, %s199
      %s201 = smul.addr %s200, 8
      %s202 = scalar_lea.vmem %s0, %s201
      %s203 = smul.u32 8, %s19
      %s204 = smul.u32 8, %s19
      %p205 = scmp.lt.s32.totalorder %s18, 1
      %s206 = scalar_select %p205, %s18, 1
      %p207 = scmp.lt.s32.totalorder %s204, 15
      %s208 = scalar_select %p207, %s204, 15
      %s209 = smul.addr %s208, 2
      %s210 = smul.addr %s206, 32
      %s211 = sadd.s32 %s209, %s210
      %s212 = smul.addr %s211, 8
      %s213 = scalar_lea.vmem %s3, %s212
      %s214 = smul.u32 8, %s19
      %v215 = vld [vmem:[%s202] sm:$0xff]
      %v216 = vld [vmem:[%s202 + $0x8] sm:$0xff]
      %v217 = vld [vmem:[%s202 + $0x10] sm:$0xff]
      %v218 = vld [vmem:[%s202 + $0x18] sm:$0xff]
      %v219 = vld [vmem:[%s202 + $0x20] sm:$0xff]
      %v220 = vld [vmem:[%s202 + $0x28] sm:$0xff]
      %v221 = vld [vmem:[%s202 + $0x30] sm:$0xff]
      %v222 = vld [vmem:[%s202 + $0x38] sm:$0xff]
      %v223 = vld [vmem:[%s202 + $0x40] sm:$0xff]
      %v224 = vld [vmem:[%s202 + $0x48] sm:$0xff]
      %v225 = vld [vmem:[%s202 + $0x50] sm:$0xff]
      %v226 = vld [vmem:[%s202 + $0x58] sm:$0xff]
      %v227 = vld [vmem:[%s202 + $0x60] sm:$0xff]
      %v228 = vld [vmem:[%s202 + $0x68] sm:$0xff]
      %v229 = vld [vmem:[%s202 + $0x70] sm:$0xff]
      %v230 = vld [vmem:[%s202 + $0x78] sm:$0xff]
      %v231 = vld [vmem:[%s1] sm:$0x1]
      %v233 = vperm.slane %v231, 0
      %v235 = vmul.f32 %v215, %v233
      %v236 = vmul.f32 %v216, %v233
      %v237 = vmul.f32 %v217, %v233
      %v238 = vmul.f32 %v218, %v233
      %v239 = vmul.f32 %v219, %v233
      %v240 = vmul.f32 %v220, %v233
      %v241 = vmul.f32 %v221, %v233
      %v242 = vmul.f32 %v222, %v233
      %v243 = vmul.f32 %v223, %v233
      %v244 = vmul.f32 %v224, %v233
      %v245 = vmul.f32 %v225, %v233
      %v246 = vmul.f32 %v226, %v233
      %v247 = vmul.f32 %v227, %v233
      %v248 = vmul.f32 %v228, %v233
      %v249 = vmul.f32 %v229, %v233
      %v250 = vmul.f32 %v230, %v233
      %v251 = vld [vmem:[%s2] sm:$0x1]
      %v253 = vperm.slane %v251, 0
      %v255 = vadd.f32 %v235, %v253
      %v256 = vadd.f32 %v236, %v253
      %v257 = vadd.f32 %v237, %v253
      %v258 = vadd.f32 %v238, %v253
      %v259 = vadd.f32 %v239, %v253
      %v260 = vadd.f32 %v240, %v253
      %v261 = vadd.f32 %v241, %v253
      %v262 = vadd.f32 %v242, %v253
      %v263 = vadd.f32 %v243, %v253
      %v264 = vadd.f32 %v244, %v253
      %v265 = vadd.f32 %v245, %v253
      %v266 = vadd.f32 %v246, %v253
      %v267 = vadd.f32 %v247, %v253
      %v268 = vadd.f32 %v248, %v253
      %v269 = vadd.f32 %v249, %v253
      %v270 = vadd.f32 %v250, %v253
      %v271 = vmax.f32 %v255, 0.0
      %v272 = vmax.f32 %v256, 0.0
      %v273 = vmax.f32 %v257, 0.0
      %v274 = vmax.f32 %v258, 0.0
      %v275 = vmax.f32 %v259, 0.0
      %v276 = vmax.f32 %v260, 0.0
      %v277 = vmax.f32 %v261, 0.0
      %v278 = vmax.f32 %v262, 0.0
      %v279 = vmax.f32 %v263, 0.0
      %v280 = vmax.f32 %v264, 0.0
      %v281 = vmax.f32 %v265, 0.0
      %v282 = vmax.f32 %v266, 0.0
      %v283 = vmax.f32 %v267, 0.0
      %v284 = vmax.f32 %v268, 0.0
      %v285 = vmax.f32 %v269, 0.0
      %v286 = vmax.f32 %v270, 0.0
      %287 = vst [vmem:[%s213] sm:$0xff] %v271
      %288 = vst [vmem:[%s213 + $0x8] sm:$0xff] %v272
      %289 = vst [vmem:[%s213 + $0x10] sm:$0xff] %v273
      %290 = vst [vmem:[%s213 + $0x18] sm:$0xff] %v274
      %291 = vst [vmem:[%s213 + $0x20] sm:$0xff] %v275
      %292 = vst [vmem:[%s213 + $0x28] sm:$0xff] %v276
      %293 = vst [vmem:[%s213 + $0x30] sm:$0xff] %v277
      %294 = vst [vmem:[%s213 + $0x38] sm:$0xff] %v278
      %295 = vst [vmem:[%s213 + $0x40] sm:$0xff] %v279
      %296 = vst [vmem:[%s213 + $0x48] sm:$0xff] %v280
      %297 = vst [vmem:[%s213 + $0x50] sm:$0xff] %v281
      %298 = vst [vmem:[%s213 + $0x58] sm:$0xff] %v282
      %299 = vst [vmem:[%s213 + $0x60] sm:$0xff] %v283
      %300 = vst [vmem:[%s213 + $0x68] sm:$0xff] %v284
      %301 = vst [vmem:[%s213 + $0x70] sm:$0xff] %v285
      %302 = vst [vmem:[%s213 + $0x78] sm:$0xff] %v286
      %s303 = smul.u32 8, %s19
      %p304 = scmp.lt.s32.totalorder %s18, 1
      %s305 = scalar_select %p304, %s18, 1
      %p306 = scmp.lt.s32.totalorder %s303, 15
      %s307 = scalar_select %p306, %s303, 15
      %s308 = smul.addr %s307, 2
      %s309 = smul.addr %s305, 32
      %s310 = sadd.s32 %s308, %s309
      %s311 = smul.addr %s310, 8
      %s312 = scalar_lea.vmem %s3, %s311
      // Predicated region
      $region33: #{_double_conv_impl.5} parent=31 // pred_check
        %p313 = pneg %p116
      $region34: #{_double_conv_impl.5} parent=31 // pred_check_branch
        %315 = sbr.rel (%p313) target = $region36
      $region35: #{_double_conv_impl.5} parent=31 // pred_region
        %s316 = smul.u32 8, %s19
      $region36: #{_double_conv_impl.5} parent=31 // pred_fallthru
        _
    $region32: #{_double_conv_impl.5} parent=5 // pred_fallthru
      _
    %p317 = scmp.le.s32.totalorder 2, %s9
    // Predicated region
    $region37: #{_double_conv_impl.5} parent=5 // pred_check
      %p318 = pneg %p317
    $region38: #{_double_conv_impl.5} parent=5 // pred_check_branch
      %320 = sbr.rel (%p318) target = $region40
    $region39: #{_double_conv_impl.5} parent=5 // pred_region
      %s321 = ssub.s32 %s9, 2
      // Predicated region
      $region41: #{_double_conv_impl.5} parent=39 // pred_check
        %p322 = pneg %p122
      $region42: #{_double_conv_impl.5} parent=39 // pred_check_branch
        %324 = sbr.rel (%p322) target = $region44
      $region43: #{_double_conv_impl.5} parent=39 // pred_region
        %s325 = smul.u32 8, %s21
        %p326 = scmp.lt.s32.totalorder %s20, 1
        %s327 = scalar_select %p326, %s20, 1
        %p328 = scmp.lt.s32.totalorder %s325, 15
        %s329 = scalar_select %p328, %s325, 15
        %s330 = smul.addr %s329, 2
        %s331 = smul.addr %s327, 32
        %s332 = sadd.s32 %s330, %s331
        %s333 = smul.addr %s332, 8
        %s334 = scalar_lea.vmem %s3, %s333
      $region44: #{_double_conv_impl.5} parent=39 // pred_fallthru
        _
    $region40: #{_double_conv_impl.5} parent=5 // pred_fallthru
      _
  $region6: #{_double_conv_impl.5} parent=0 // loop_footer
    %s13 = sadd.s32 1, %s9
  $region7: #{_double_conv_impl.5} parent=0 // loop_footer_branch
    %8 = sbr.rel target = $region3
  $region8: #{_double_conv_impl.5} parent=0 // loop_exit
    _

// kernel: _double_conv_impl.3
$region0: #{_double_conv_impl.3}
  #allocation0 [shape = 'u32[]', space=smem, size = 0x4, offset = 0x4, fixed_abs, tag = 'smem constant byte address 0x4 - core index']
  #allocation1 [shape = 'u32[72,128]{1,0:T(1,128)}', space=vmem, size = 0x9000, scoped, tag = 'internal scratch']
  #allocation2 [shape = 'f32[8,16,1152]{2,1,0:T(8,128)}', space=vmem, size = 0x90000, scoped, tag = 'scratch operand']
  %s0 = inlined_call_operand.vmem [shape: f32[2,24,18,128], index: 0, kind: input, shape index: {}, may-alias: {0,1}]
  %s1 = inlined_call_operand.vmem [shape: f32[2,24,18,128], index: 1, kind: input, shape index: {}, may-alias: {0,1}]
  %s2 = inlined_call_operand.vmem [shape: f32[1152,128], index: 2, kind: input, shape index: {}]
  %s3 = inlined_call_operand.vmem [shape: f32[1,18,128], index: 3, kind: input, shape index: {}]
  %s4 = inlined_call_operand.vmem [shape: f32[1,18,128], index: 4, kind: input, shape index: {}]
  %s5 = inlined_call_operand.vmem [shape: f32[2,16,16,128], index: 5, kind: output, shape index: {0}]
  %s6 = inlined_call_operand.vmem [shape: f32[2,2,2,128], index: 6, kind: output, shape index: {1}]
  %7 = xla_tuple %s5, %s6
  %s8 = sld [smem:[#allocation0]]
  $region61: #{_double_conv_impl.3} parent=0
    _
  %s10 = ssub.s32 1, %s8
  %s11 = scalar_select 0, %s10, %s8
  loop: start=0, step=1, limit=6
  $region2: #{_double_conv_impl.3} parent=0 // loop_pre_header
    _
  $region3: #{_double_conv_impl.3} parent=0 // loop_header
    %s13 = sphi 0, %s17
    %p14 = scmp.ge.s32.totalorder %s13, 6
    %s20 = sphi 0, %s32
    %s21 = sphi 0, %s28
    %s22 = sphi 0, %s20
    %s23 = sphi 0, %s21
    %s24 = sphi 0, %s22
    %s25 = sphi 0, %s23
    %s37 = sphi 0, %s39
    %s40 = sphi 0, %s37
    %s41 = sphi 0, %s40
    %s57 = sphi 0, %s41
    %s67 = sphi 0, %s69
    %s70 = sphi 0, %s67
    %s71 = sphi 0, %s70
    %s87 = sphi 0, %s71
    %s91 = sphi 0, %s91
    %s93 = sphi 0, %s91
    %s94 = sphi 0, %s93
    %s108 = sphi 0, %s94
    %s112 = sphi 0, %s112
    %s114 = sphi 0, %s112
    %s115 = sphi 0, %s114
    %s129 = sphi 0, %s115
    %s133 = sphi 0, %s133
    %s135 = sphi 0, %s133
    %s136 = sphi 0, %s135
    %s150 = sphi 0, %s136
    %s158 = sphi 0, %s160
    %s161 = sphi 0, %s158
    %s162 = sphi 0, %s161
    %s178 = sphi 0, %s162
    %s186 = sphi 0, %s188
    %s189 = sphi 0, %s186
    %s190 = sphi 0, %s189
    %s206 = sphi 0, %s190
  $region4: #{_double_conv_impl.3} parent=0 // loop_header_branch
    %16 = sbr.rel (%p14) target = $region8
  $region5: #{_double_conv_impl.3} parent=0 // loop_body
    %s18 = ssub.s32 %s13, 1
    %s19 = ssub.s32 %s13, 2
    %s26 = sadd.s32 1, %s21
    %p27 = scmp.ge.s32.totalorder %s26, 2
    %s28 = scalar_select %p27, 0, %s26
    %s29 = sadd.s32 1, %s20
    %s30 = scalar_select %p27, %s29, %s20
    %p31 = scmp.ge.s32.totalorder %s30, 2
    %s32 = scalar_select %p31, 0, %s30
    %s33 = ssub.s32 %s20, %s32
    %s34 = ssub.s32 %s21, %s28
    %s35 = sor.u32 %s33, %s34
    %p36 = scmp.eq.s32.totalorder %s35, 0
    %s38 = sadd.s32 %s37, 1
    %s39 = scalar_select %p36, %s37, %s38
    %p42 = pneg %p36
    %p43 = scmp.eq.s32.totalorder %s13, 3
    %p44 = por %p42, %p43
    %p45 = scmp.ne.s32.totalorder %s37, %s40
    %p46 = scmp.eq.s32.totalorder %s13, 0
    %p47 = por %p45, %p46
    %p48 = scmp.ne.s32.totalorder %s37, %s40
    %p49 = scmp.eq.s32.totalorder %s18, 3
    %p50 = por %p48, %p49
    %p51 = scmp.ne.s32.totalorder %s40, %s41
    %p52 = scmp.eq.s32.totalorder %s18, 0
    %p53 = por %p51, %p52
    %p54 = scmp.ne.s32.totalorder %s40, %s41
    %p55 = scmp.eq.s32.totalorder %s19, 3
    %p56 = por %p54, %p55
    %p58 = scmp.ne.s32.totalorder %s41, %s57
    %p59 = scmp.eq.s32.totalorder %s19, 0
    %p60 = por %p58, %p59
    %s61 = sadd.s32 %s21, 1
    %s62 = sadd.s32 %s28, 1
    %s63 = ssub.s32 %s20, %s32
    %s64 = ssub.s32 %s61, %s62
    %s65 = sor.u32 %s63, %s64
    %p66 = scmp.eq.s32.totalorder %s65, 0
    %s68 = sadd.s32 %s67, 1
    %s69 = scalar_select %p66, %s67, %s68
    %p72 = pneg %p66
    %p73 = scmp.eq.s32.totalorder %s13, 3
    %p74 = por %p72, %p73
    %p75 = scmp.ne.s32.totalorder %s67, %s70
    %p76 = scmp.eq.s32.totalorder %s13, 0
    %p77 = por %p75, %p76
    %p78 = scmp.ne.s32.totalorder %s67, %s70
    %p79 = scmp.eq.s32.totalorder %s18, 3
    %p80 = por %p78, %p79
    %p81 = scmp.ne.s32.totalorder %s70, %s71
    %p82 = scmp.eq.s32.totalorder %s18, 0
    %p83 = por %p81, %p82
    %p84 = scmp.ne.s32.totalorder %s70, %s71
    %p85 = scmp.eq.s32.totalorder %s19, 3
    %p86 = por %p84, %p85
    %p88 = scmp.ne.s32.totalorder %s71, %s87
    %p89 = scmp.eq.s32.totalorder %s19, 0
    %p90 = por %p88, %p89
    %s92 = sadd.s32 %s91, 1
    %p95 = scmp.eq.s32.totalorder %s13, 3
    %p96 = scmp.ne.s32.totalorder %s91, %s93
    %p97 = scmp.eq.s32.totalorder %s13, 0
    %p98 = por %p96, %p97
    %p99 = scmp.ne.s32.totalorder %s91, %s93
    %p100 = scmp.eq.s32.totalorder %s18, 3
    %p101 = por %p99, %p100
    %p102 = scmp.ne.s32.totalorder %s93, %s94
    %p103 = scmp.eq.s32.totalorder %s18, 0
    %p104 = por %p102, %p103
    %p105 = scmp.ne.s32.totalorder %s93, %s94
    %p106 = scmp.eq.s32.totalorder %s19, 3
    %p107 = por %p105, %p106
    %p109 = scmp.ne.s32.totalorder %s94, %s108
    %p110 = scmp.eq.s32.totalorder %s19, 0
    %p111 = por %p109, %p110
    %s113 = sadd.s32 %s112, 1
    %p116 = scmp.eq.s32.totalorder %s13, 3
    %p117 = scmp.ne.s32.totalorder %s112, %s114
    %p118 = scmp.eq.s32.totalorder %s13, 0
    %p119 = por %p117, %p118
    %p120 = scmp.ne.s32.totalorder %s112, %s114
    %p121 = scmp.eq.s32.totalorder %s18, 3
    %p122 = por %p120, %p121
    %p123 = scmp.ne.s32.totalorder %s114, %s115
    %p124 = scmp.eq.s32.totalorder %s18, 0
    %p125 = por %p123, %p124
    %p126 = scmp.ne.s32.totalorder %s114, %s115
    %p127 = scmp.eq.s32.totalorder %s19, 3
    %p128 = por %p126, %p127
    %p130 = scmp.ne.s32.totalorder %s115, %s129
    %p131 = scmp.eq.s32.totalorder %s19, 0
    %p132 = por %p130, %p131
    %s134 = sadd.s32 %s133, 1
    %p137 = scmp.eq.s32.totalorder %s13, 3
    %p138 = scmp.ne.s32.totalorder %s133, %s135
    %p139 = scmp.eq.s32.totalorder %s13, 0
    %p140 = por %p138, %p139
    %p141 = scmp.ne.s32.totalorder %s133, %s135
    %p142 = scmp.eq.s32.totalorder %s18, 3
    %p143 = por %p141, %p142
    %p144 = scmp.ne.s32.totalorder %s135, %s136
    %p145 = scmp.eq.s32.totalorder %s18, 0
    %p146 = por %p144, %p145
    %p147 = scmp.ne.s32.totalorder %s135, %s136
    %p148 = scmp.eq.s32.totalorder %s19, 3
    %p149 = por %p147, %p148
    %p151 = scmp.ne.s32.totalorder %s136, %s150
    %p152 = scmp.eq.s32.totalorder %s19, 0
    %p153 = por %p151, %p152
    %s154 = ssub.s32 %s20, %s32
    %s155 = ssub.s32 %s21, %s28
    %s156 = sor.u32 %s154, %s155
    %p157 = scmp.eq.s32.totalorder %s156, 0
    %s159 = sadd.s32 %s158, 1
    %s160 = scalar_select %p157, %s158, %s159
    %p163 = pneg %p157
    %p164 = scmp.eq.s32.totalorder %s13, 3
    %p165 = por %p163, %p164
    %p166 = scmp.ne.s32.totalorder %s158, %s161
    %p167 = scmp.eq.s32.totalorder %s13, 0
    %p168 = por %p166, %p167
    %p169 = scmp.ne.s32.totalorder %s158, %s161
    %p170 = scmp.eq.s32.totalorder %s18, 3
    %p171 = por %p169, %p170
    %p172 = scmp.ne.s32.totalorder %s161, %s162
    %p173 = scmp.eq.s32.totalorder %s18, 0
    %p174 = por %p172, %p173
    %p175 = scmp.ne.s32.totalorder %s161, %s162
    %p176 = scmp.eq.s32.totalorder %s19, 3
    %p177 = por %p175, %p176
    %p179 = scmp.ne.s32.totalorder %s162, %s178
    %p180 = scmp.eq.s32.totalorder %s19, 0
    %p181 = por %p179, %p180
    %s182 = ssub.s32 %s20, %s32
    %s183 = ssub.s32 %s21, %s28
    %s184 = sor.u32 %s182, %s183
    %p185 = scmp.eq.s32.totalorder %s184, 0
    %s187 = sadd.s32 %s186, 1
    %s188 = scalar_select %p185, %s186, %s187
    %p191 = pneg %p185
    %p192 = scmp.eq.s32.totalorder %s13, 3
    %p193 = por %p191, %p192
    %p194 = scmp.ne.s32.totalorder %s186, %s189
    %p195 = scmp.eq.s32.totalorder %s13, 0
    %p196 = por %p194, %p195
    %p197 = scmp.ne.s32.totalorder %s186, %s189
    %p198 = scmp.eq.s32.totalorder %s18, 3
    %p199 = por %p197, %p198
    %p200 = scmp.ne.s32.totalorder %s189, %s190
    %p201 = scmp.eq.s32.totalorder %s18, 0
    %p202 = por %p200, %p201
    %p203 = scmp.ne.s32.totalorder %s189, %s190
    %p204 = scmp.eq.s32.totalorder %s19, 3
    %p205 = por %p203, %p204
    %p207 = scmp.ne.s32.totalorder %s190, %s206
    %p208 = scmp.eq.s32.totalorder %s19, 0
    %p209 = por %p207, %p208
    %p210 = scmp.le.s32.totalorder 1, %s13
    %p211 = scmp.lt.s32.totalorder %s13, 5
    %p212 = pnand %p210, %p211
    %p213 = pneg %p212
    // Predicated region
    $region9: #{_double_conv_impl.3} parent=5 // pred_check
      _
    $region10: #{_double_conv_impl.3} parent=5 // pred_check_branch
      %215 = sbr.rel (%p212) target = $region12
    $region11: #{_double_conv_impl.3} parent=5 // pred_region
      %s216 = ssub.s32 %s13, 1
      // Predicated region
      $region13: #{_double_conv_impl.3} parent=11 // pred_check
        %p217 = pneg %p104
      $region14: #{_double_conv_impl.3} parent=11 // pred_check_branch
        %219 = sbr.rel (%p217) target = $region16
      $region15: #{_double_conv_impl.3} parent=11 // pred_region
        _
      $region16: #{_double_conv_impl.3} parent=11 // pred_fallthru
        _
      // Predicated region
      $region17: #{_double_conv_impl.3} parent=11 // pred_check
        %p220 = pneg %p125
      $region18: #{_double_conv_impl.3} parent=11 // pred_check_branch
        %222 = sbr.rel (%p220) target = $region20
      $region19: #{_double_conv_impl.3} parent=11 // pred_region
        _
      $region20: #{_double_conv_impl.3} parent=11 // pred_fallthru
        _
      // Predicated region
      $region21: #{_double_conv_impl.3} parent=11 // pred_check
        %p223 = pneg %p146
      $region22: #{_double_conv_impl.3} parent=11 // pred_check_branch
        %225 = sbr.rel (%p223) target = $region24
      $region23: #{_double_conv_impl.3} parent=11 // pred_region
        _
      $region24: #{_double_conv_impl.3} parent=11 // pred_fallthru
        _
    $region12: #{_double_conv_impl.3} parent=5 // pred_fallthru
      _
    %p226 = scmp.lt.s32.totalorder %s13, 4
    // Predicated region
    $region25: #{_double_conv_impl.3} parent=5 // pred_check
      %p227 = pneg %p226
    $region26: #{_double_conv_impl.3} parent=5 // pred_check_branch
      %229 = sbr.rel (%p227) target = $region28
    $region27: #{_double_conv_impl.3} parent=5 // pred_region
      // Predicated region
      $region29: #{_double_conv_impl.3} parent=27 // pred_check
        %p230 = pneg %p47
      $region30: #{_double_conv_impl.3} parent=27 // pred_check_branch
        %232 = sbr.rel (%p230) target = $region32
      $region31: #{_double_conv_impl.3} parent=27 // pred_region
        %s233 = smul.u32 8, %s21
        %p234 = scmp.lt.s32.totalorder %s20, 1
        %s235 = scalar_select %p234, %s20, 1
        %p236 = scmp.lt.s32.totalorder %s233, 23
        %s237 = scalar_select %p236, %s233, 23
        %s238 = smul.addr %s237, 3
        %s239 = smul.addr %s235, 72
        %s240 = sadd.s32 %s238, %s239
        %s241 = smul.addr %s240, 8
        %s242 = scalar_lea.vmem %s0, %s241
        %s243 = smul.u32 8, %s21
      $region32: #{_double_conv_impl.3} parent=27 // pred_fallthru
        _
      // Predicated region
      $region33: #{_double_conv_impl.3} parent=27 // pred_check
        %p244 = pneg %p77
      $region34: #{_double_conv_impl.3} parent=27 // pred_check_branch
        %246 = sbr.rel (%p244) target = $region36
      $region35: #{_double_conv_impl.3} parent=27 // pred_region
        %s247 = sadd.s32 %s21, 1
        %s248 = smul.u32 8, %s247
        %p249 = scmp.lt.s32.totalorder %s20, 1
        %s250 = scalar_select %p249, %s20, 1
        %p251 = scmp.lt.s32.totalorder %s248, 23
        %s252 = scalar_select %p251, %s248, 23
        %s253 = smul.addr %s252, 3
        %s254 = smul.addr %s250, 72
        %s255 = sadd.s32 %s253, %s254
        %s256 = smul.addr %s255, 8
        %s257 = scalar_lea.vmem %s1, %s256
        %s258 = sadd.s32 %s21, 1
        %s259 = smul.u32 8, %s258
      $region36: #{_double_conv_impl.3} parent=27 // pred_fallthru
        _
    $region28: #{_double_conv_impl.3} parent=5 // pred_fallthru
      _
    %p260 = scmp.le.s32.totalorder 1, %s13
    %p261 = scmp.lt.s32.totalorder %s13, 5
    %p262 = pnand %p260, %p261
    %p263 = pneg %p262
    // Predicated region
    $region37: #{_double_conv_impl.3} parent=5 // pred_check
      _
    $region38: #{_double_conv_impl.3} parent=5 // pred_check_branch
      %265 = sbr.rel (%p262) target = $region40
    $region39: #{_double_conv_impl.3} parent=5 // pred_region
      %s266 = ssub.s32 %s13, 1
      %s267 = smul.u32 8, %s23
      %p268 = scmp.lt.s32.totalorder %s22, 1
      %s269 = scalar_select %p268, %s22, 1
      %p270 = scmp.lt.s32.totalorder %s267, 23
      %s271 = scalar_select %p270, %s267, 23
      %s272 = smul.addr %s271, 3
      %s273 = smul.addr %s269, 72
      %s274 = sadd.s32 %s272, %s273
      %s275 = smul.addr %s274, 8
      %s276 = scalar_lea.vmem %s0, %s275
      %p277 = pneg %p53
      %p278 = pneg %p50
      %s279 = sadd.s32 %s23, 1
      %s280 = smul.u32 8, %s279
      %p281 = scmp.lt.s32.totalorder %s22, 1
      %s282 = scalar_select %p281, %s22, 1
      %p283 = scmp.lt.s32.totalorder %s280, 23
      %s284 = scalar_select %p283, %s280, 23
      %s285 = smul.addr %s284, 3
      %s286 = smul.addr %s282, 72
      %s287 = sadd.s32 %s285, %s286
      %s288 = smul.addr %s287, 8
      %s289 = scalar_lea.vmem %s1, %s288
      %p290 = pneg %p83
      %p291 = pneg %p80
      %p292 = pneg %p104
      %p293 = pneg %p101
      %p294 = pneg %p125
      %p295 = pneg %p122
      %p296 = pneg %p146
      %p297 = pneg %p143
      %p298 = pneg %p174
      %p299 = pneg %p171
      %s300 = smul.u32 8, %s23
      %p301 = scmp.lt.s32.totalorder %s22, 1
      %s302 = scalar_select %p301, %s22, 1
      %p303 = scmp.lt.s32.totalorder %s300, 15
      %s304 = scalar_select %p303, %s300, 15
      %s305 = smul.addr %s304, 2
      %s306 = smul.addr %s302, 32
      %s307 = sadd.s32 %s305, %s306
      %s308 = smul.addr %s307, 8
      %s309 = scalar_lea.vmem %s5, %s308
      %p310 = pneg %p202
      %p311 = pneg %p199
      %p312 = scmp.lt.s32.totalorder %s22, 1
      %s313 = scalar_select %p312, %s22, 1
      %p314 = scmp.lt.s32.totalorder %s23, 1
      %s315 = scalar_select %p314, %s23, 1
      %s316 = smul.addr %s313, 2
      %s317 = sadd.s32 %s315, %s316
      %s318 = smul.addr %s317, 2
      %s319 = scalar_lea.vmem %s6, %s318
      %s320 = smul.u32 8, %s23
      %p321 = scmp.lt.s32.totalorder %s22, 1
      %s322 = scalar_select %p321, %s22, 1
      %p323 = scmp.lt.s32.totalorder %s320, 23
      %s324 = scalar_select %p323, %s320, 23
      %s325 = smul.addr %s324, 3
      %s326 = smul.addr %s322, 72
      %s327 = sadd.s32 %s325, %s326
      %s328 = smul.addr %s327, 8
      %s329 = scalar_lea.vmem %s0, %s328
      %s330 = smul.u32 8, %s23
      %s331 = sadd.s32 %s23, 1
      %s332 = smul.u32 8, %s331
      %p333 = scmp.lt.s32.totalorder %s22, 1
      %s334 = scalar_select %p333, %s22, 1
      %p335 = scmp.lt.s32.totalorder %s332, 23
      %s336 = scalar_select %p335, %s332, 23
      %s337 = smul.addr %s336, 3
      %s338 = smul.addr %s334, 72
      %s339 = sadd.s32 %s337, %s338
      %s340 = smul.addr %s339, 8
      %s341 = scalar_lea.vmem %s1, %s340
      %s342 = sadd.s32 %s23, 1
      %s343 = smul.u32 8, %s342
      %s344 = smul.u32 8, %s23
      %p345 = scmp.lt.s32.totalorder %s22, 1
      %s346 = scalar_select %p345, %s22, 1
      %p347 = scmp.lt.s32.totalorder %s344, 15
      %s348 = scalar_select %p347, %s344, 15
      %s349 = smul.addr %s348, 2
      %s350 = smul.addr %s346, 32
      %s351 = sadd.s32 %s349, %s350
      %s352 = smul.addr %s351, 8
      %s353 = scalar_lea.vmem %s5, %s352
      %s354 = smul.u32 8, %s23
      %p355 = scmp.lt.s32.totalorder %s22, 1
      %s356 = scalar_select %p355, %s22, 1
      %p357 = scmp.lt.s32.totalorder %s23, 1
      %s358 = scalar_select %p357, %s23, 1
      %s359 = smul.addr %s356, 2
      %s360 = sadd.s32 %s358, %s359
      %s361 = smul.addr %s360, 2
      %s362 = scalar_lea.vmem %s6, %s361
      %v363 = vld [vmem:[%s329] sm:$0xff]
      %v364 = vld [vmem:[%s329 + $0x8] sm:$0xff]
      %v365 = vld [vmem:[%s329 + $0x10] sm:$0x3]
      %v366 = vld [vmem:[%s329 + $0x18] sm:$0xff]
      %v367 = vld [vmem:[%s329 + $0x20] sm:$0xff]
      %v368 = vld [vmem:[%s329 + $0x28] sm:$0x3]
      %v369 = vld [vmem:[%s329 + $0x30] sm:$0xff]
      %v370 = vld [vmem:[%s329 + $0x38] sm:$0xff]
      %v371 = vld [vmem:[%s329 + $0x40] sm:$0x3]
      %v372 = vld [vmem:[%s329 + $0x48] sm:$0xff]
      %v373 = vld [vmem:[%s329 + $0x50] sm:$0xff]
      %v374 = vld [vmem:[%s329 + $0x58] sm:$0x3]
      %v375 = vld [vmem:[%s329 + $0x60] sm:$0xff]
      %v376 = vld [vmem:[%s329 + $0x68] sm:$0xff]
      %v377 = vld [vmem:[%s329 + $0x70] sm:$0x3]
      %v378 = vld [vmem:[%s329 + $0x78] sm:$0xff]
      %v379 = vld [vmem:[%s329 + $0x80] sm:$0xff]
      %v380 = vld [vmem:[%s329 + $0x88] sm:$0x3]
      %v381 = vld [vmem:[%s329 + $0x90] sm:$0xff]
      %v382 = vld [vmem:[%s329 + $0x98] sm:$0xff]
      %v383 = vld [vmem:[%s329 + $0xa0] sm:$0x3]
      %v384 = vld [vmem:[%s329 + $0xa8] sm:$0xff]
      %v385 = vld [vmem:[%s329 + $0xb0] sm:$0xff]
      %v386 = vld [vmem:[%s329 + $0xb8] sm:$0x3]
      %v387 = vld [vmem:[%s341] sm:$0xff]
      %v388 = vld [vmem:[%s341 + $0x8] sm:$0xff]
      %v389 = vld [vmem:[%s341 + $0x10] sm:$0x3]
      %v390 = vld [vmem:[%s341 + $0x18] sm:$0xff]
      %v391 = vld [vmem:[%s341 + $0x20] sm:$0xff]
      %v392 = vld [vmem:[%s341 + $0x28] sm:$0x3]
      %393 = vst [vmem:[#allocation2] sm:$0xff] %v363
      %394 = vst [vmem:[#allocation2 + $0x48] sm:$0xff] %v364
      %395 = vst [vmem:[#allocation2 + $0x90] sm:$0xff] %v366
      %396 = vst [vmem:[#allocation2 + $0xd8] sm:$0xff] %v367
      %397 = vst [vmem:[#allocation2 + $0x120] sm:$0xff] %v369
      %398 = vst [vmem:[#allocation2 + $0x168] sm:$0xff] %v370
      %399 = vst [vmem:[#allocation2 + $0x1b0] sm:$0xff] %v372
      %400 = vst [vmem:[#allocation2 + $0x1f8] sm:$0xff] %v373
      %401 = vst [vmem:[#allocation2 + $0x240] sm:$0xff] %v375
      %402 = vst [vmem:[#allocation2 + $0x288] sm:$0xff] %v376
      %403 = vst [vmem:[#allocation2 + $0x2d0] sm:$0xff] %v378
      %404 = vst [vmem:[#allocation2 + $0x318] sm:$0xff] %v379
      %405 = vst [vmem:[#allocation2 + $0x360] sm:$0xff] %v381
      %406 = vst [vmem:[#allocation2 + $0x3a8] sm:$0xff] %v382
      %407 = vst [vmem:[#allocation2 + $0x3f0] sm:$0xff] %v384
      %408 = vst [vmem:[#allocation2 + $0x438] sm:$0xff] %v385
      %vm433 = vcmask 1046528
      %v434 = vrot.slane %v363, 1
      %v435 = vrot.slane %v364, 1
      %v436 = vsel %vm433, %v434, %v435
      %v437 = vrot.slane %v365, 1
      %v438 = vsel %vm433, %v435, %v437
      %v439 = vrot.slane %v366, 1
      %v440 = vrot.slane %v367, 1
      %v441 = vsel %vm433, %v439, %v440
      %v442 = vrot.slane %v368, 1
      %v443 = vsel %vm433, %v440, %v442
      %v444 = vrot.slane %v369, 1
      %v445 = vrot.slane %v370, 1
      %v446 = vsel %vm433, %v444, %v445
      %v447 = vrot.slane %v371, 1
      %v448 = vsel %vm433, %v445, %v447
      %v449 = vrot.slane %v372, 1
      %v450 = vrot.slane %v373, 1
      %v451 = vsel %vm433, %v449, %v450
      %v452 = vrot.slane %v374, 1
      %v453 = vsel %vm433, %v450, %v452
      %v454 = vrot.slane %v375, 1
      %v455 = vrot.slane %v376, 1
      %v456 = vsel %vm433, %v454, %v455
      %v457 = vrot.slane %v377, 1
      %v458 = vsel %vm433, %v455, %v457
      %v459 = vrot.slane %v378, 1
      %v460 = vrot.slane %v379, 1
      %v461 = vsel %vm433, %v459, %v460
      %v462 = vrot.slane %v380, 1
      %v463 = vsel %vm433, %v460, %v462
      %v464 = vrot.slane %v381, 1
      %v465 = vrot.slane %v382, 1
      %v466 = vsel %vm433, %v464, %v465
      %v467 = vrot.slane %v383, 1
      %v468 = vsel %vm433, %v465, %v467
      %v469 = vrot.slane %v384, 1
      %v470 = vrot.slane %v385, 1
      %v471 = vsel %vm433, %v469, %v470
      %v472 = vrot.slane %v386, 1
      %v473 = vsel %vm433, %v470, %v472
      %490 = vst [vmem:[#allocation2 + $0x8] sm:$0xff] %v436
      %491 = vst [vmem:[#allocation2 + $0x50] sm:$0xff] %v438
      %492 = vst [vmem:[#allocation2 + $0x98] sm:$0xff] %v441
      %493 = vst [vmem:[#allocation2 + $0xe0] sm:$0xff] %v443
      %494 = vst [vmem:[#allocation2 + $0x128] sm:$0xff] %v446
      %495 = vst [vmem:[#allocation2 + $0x170] sm:$0xff] %v448
      %496 = vst [vmem:[#allocation2 + $0x1b8] sm:$0xff] %v451
      %497 = vst [vmem:[#allocation2 + $0x200] sm:$0xff] %v453
      %498 = vst [vmem:[#allocation2 + $0x248] sm:$0xff] %v456
      %499 = vst [vmem:[#allocation2 + $0x290] sm:$0xff] %v458
      %500 = vst [vmem:[#allocation2 + $0x2d8] sm:$0xff] %v461
      %501 = vst [vmem:[#allocation2 + $0x320] sm:$0xff] %v463
      %502 = vst [vmem:[#allocation2 + $0x368] sm:$0xff] %v466
      %503 = vst [vmem:[#allocation2 + $0x3b0] sm:$0xff] %v468
      %504 = vst [vmem:[#allocation2 + $0x3f8] sm:$0xff] %v471
      %505 = vst [vmem:[#allocation2 + $0x440] sm:$0xff] %v473
      %vm506 = vcmask 1045504
      %v507 = vrot.slane %v363, 2
      %v508 = vrot.slane %v364, 2
      %v509 = vsel %vm506, %v507, %v508
      %v510 = vrot.slane %v365, 2
      %v511 = vsel %vm506, %v508, %v510
      %v512 = vrot.slane %v366, 2
      %v513 = vrot.slane %v367, 2
      %v514 = vsel %vm506, %v512, %v513
      %v515 = vrot.slane %v368, 2
      %v516 = vsel %vm506, %v513, %v515
      %v517 = vrot.slane %v369, 2
      %v518 = vrot.slane %v370, 2
      %v519 = vsel %vm506, %v517, %v518
      %v520 = vrot.slane %v371, 2
      %v521 = vsel %vm506, %v518, %v520
      %v522 = vrot.slane %v372, 2
      %v523 = vrot.slane %v373, 2
      %v524 = vsel %vm506, %v522, %v523
      %v525 = vrot.slane %v374, 2
      %v526 = vsel %vm506, %v523, %v525
      %v527 = vrot.slane %v375, 2
      %v528 = vrot.slane %v376, 2
      %v529 = vsel %vm506, %v527, %v528
      %v530 = vrot.slane %v377, 2
      %v531 = vsel %vm506, %v528, %v530
      %v532 = vrot.slane %v378, 2
      %v533 = vrot.slane %v379, 2
      %v534 = vsel %vm506, %v532, %v533
      %v535 = vrot.slane %v380, 2
      %v536 = vsel %vm506, %v533, %v535
      %v537 = vrot.slane %v381, 2
      %v538 = vrot.slane %v382, 2
      %v539 = vsel %vm506, %v537, %v538
      %v540 = vrot.slane %v383, 2
      %v541 = vsel %vm506, %v538, %v540
      %v542 = vrot.slane %v384, 2
      %v543 = vrot.slane %v385, 2
      %v544 = vsel %vm506, %v542, %v543
      %v545 = vrot.slane %v386, 2
      %v546 = vsel %vm506, %v543, %v545
      %563 = vst [vmem:[#allocation2 + $0x10] sm:$0xff] %v509
      %564 = vst [vmem:[#allocation2 + $0x58] sm:$0xff] %v511
      %565 = vst [vmem:[#allocation2 + $0xa0] sm:$0xff] %v514
      %566 = vst [vmem:[#allocation2 + $0xe8] sm:$0xff] %v516
      %567 = vst [vmem:[#allocation2 + $0x130] sm:$0xff] %v519
      %568 = vst [vmem:[#allocation2 + $0x178] sm:$0xff] %v521
      %569 = vst [vmem:[#allocation2 + $0x1c0] sm:$0xff] %v524
      %570 = vst [vmem:[#allocation2 + $0x208] sm:$0xff] %v526
      %571 = vst [vmem:[#allocation2 + $0x250] sm:$0xff] %v529
      %572 = vst [vmem:[#allocation2 + $0x298] sm:$0xff] %v531
      %573 = vst [vmem:[#allocation2 + $0x2e0] sm:$0xff] %v534
      %574 = vst [vmem:[#allocation2 + $0x328] sm:$0xff] %v536
      %575 = vst [vmem:[#allocation2 + $0x370] sm:$0xff] %v539
      %576 = vst [vmem:[#allocation2 + $0x3b8] sm:$0xff] %v541
      %577 = vst [vmem:[#allocation2 + $0x400] sm:$0xff] %v544
      %578 = vst [vmem:[#allocation2 + $0x448] sm:$0xff] %v546
      %579 = vst [vmem:[#allocation2 + $0x18] sm:$0xff] %v366
      %580 = vst [vmem:[#allocation2 + $0x60] sm:$0xff] %v367
      %581 = vst [vmem:[#allocation2 + $0xa8] sm:$0xff] %v369
      %582 = vst [vmem:[#allocation2 + $0xf0] sm:$0xff] %v370
      %583 = vst [vmem:[#allocation2 + $0x138] sm:$0xff] %v372
      %584 = vst [vmem:[#allocation2 + $0x180] sm:$0xff] %v373
      %585 = vst [vmem:[#allocation2 + $0x1c8] sm:$0xff] %v375
      %586 = vst [vmem:[#allocation2 + $0x210] sm:$0xff] %v376
      %587 = vst [vmem:[#allocation2 + $0x258] sm:$0xff] %v378
      %588 = vst [vmem:[#allocation2 + $0x2a0] sm:$0xff] %v379
      %589 = vst [vmem:[#allocation2 + $0x2e8] sm:$0xff] %v381
      %590 = vst [vmem:[#allocation2 + $0x330] sm:$0xff] %v382
      %591 = vst [vmem:[#allocation2 + $0x378] sm:$0xff] %v384
      %592 = vst [vmem:[#allocation2 + $0x3c0] sm:$0xff] %v385
      %593 = vst [vmem:[#allocation2 + $0x408] sm:$0xff] %v387
      %594 = vst [vmem:[#allocation2 + $0x450] sm:$0xff] %v388
      %v598 = vrot.slane %v387, 1
      %v599 = vrot.slane %v388, 1
      %v600 = vsel %vm433, %v598, %v599
      %v601 = vrot.slane %v389, 1
      %v602 = vsel %vm433, %v599, %v601
      %605 = vst [vmem:[#allocation2 + $0x20] sm:$0xff] %v441
      %606 = vst [vmem:[#allocation2 + $0x68] sm:$0xff] %v443
      %607 = vst [vmem:[#allocation2 + $0xb0] sm:$0xff] %v446
      %608 = vst [vmem:[#allocation2 + $0xf8] sm:$0xff] %v448
      %609 = vst [vmem:[#allocation2 + $0x140] sm:$0xff] %v451
      %610 = vst [vmem:[#allocation2 + $0x188] sm:$0xff] %v453
      %611 = vst [vmem:[#allocation2 + $0x1d0] sm:$0xff] %v456
      %612 = vst [vmem:[#allocation2 + $0x218] sm:$0xff] %v458
      %613 = vst [vmem:[#allocation2 + $0x260] sm:$0xff] %v461
      %614 = vst [vmem:[#allocation2 + $0x2a8] sm:$0xff] %v463
      %615 = vst [vmem:[#allocation2 + $0x2f0] sm:$0xff] %v466
      %616 = vst [vmem:[#allocation2 + $0x338] sm:$0xff] %v468
      %617 = vst [vmem:[#allocation2 + $0x380] sm:$0xff] %v471
      %618 = vst [vmem:[#allocation2 + $0x3c8] sm:$0xff] %v473
      %619 = vst [vmem:[#allocation2 + $0x410] sm:$0xff] %v600
      %620 = vst [vmem:[#allocation2 + $0x458] sm:$0xff] %v602
      %v621 = vrot.slane %v387, 2
      %v622 = vrot.slane %v388, 2
      %v623 = vsel %vm506, %v621, %v622
      %v624 = vrot.slane %v389, 2
      %v625 = vsel %vm506, %v622, %v624
      %628 = vst [vmem:[#allocation2 + $0x28] sm:$0xff] %v514
      %629 = vst [vmem:[#allocation2 + $0x70] sm:$0xff] %v516
      %630 = vst [vmem:[#allocation2 + $0xb8] sm:$0xff] %v519
      %631 = vst [vmem:[#allocation2 + $0x100] sm:$0xff] %v521
      %632 = vst [vmem:[#allocation2 + $0x148] sm:$0xff] %v524
      %633 = vst [vmem:[#allocation2 + $0x190] sm:$0xff] %v526
      %634 = vst [vmem:[#allocation2 + $0x1d8] sm:$0xff] %v529
      %635 = vst [vmem:[#allocation2 + $0x220] sm:$0xff] %v531
      %636 = vst [vmem:[#allocation2 + $0x268] sm:$0xff] %v534
      %637 = vst [vmem:[#allocation2 + $0x2b0] sm:$0xff] %v536
      %638 = vst [vmem:[#allocation2 + $0x2f8] sm:$0xff] %v539
      %639 = vst [vmem:[#allocation2 + $0x340] sm:$0xff] %v541
      %640 = vst [vmem:[#allocation2 + $0x388] sm:$0xff] %v544
      %641 = vst [vmem:[#allocation2 + $0x3d0] sm:$0xff] %v546
      %642 = vst [vmem:[#allocation2 + $0x418] sm:$0xff] %v623
      %643 = vst [vmem:[#allocation2 + $0x460] sm:$0xff] %v625
      %644 = vst [vmem:[#allocation2 + $0x30] sm:$0xff] %v369
      %645 = vst [vmem:[#allocation2 + $0x78] sm:$0xff] %v370
      %646 = vst [vmem:[#allocation2 + $0xc0] sm:$0xff] %v372
      %647 = vst [vmem:[#allocation2 + $0x108] sm:$0xff] %v373
      %648 = vst [vmem:[#allocation2 + $0x150] sm:$0xff] %v375
      %649 = vst [vmem:[#allocation2 + $0x198] sm:$0xff] %v376
      %650 = vst [vmem:[#allocation2 + $0x1e0] sm:$0xff] %v378
      %651 = vst [vmem:[#allocation2 + $0x228] sm:$0xff] %v379
      %652 = vst [vmem:[#allocation2 + $0x270] sm:$0xff] %v381
      %653 = vst [vmem:[#allocation2 + $0x2b8] sm:$0xff] %v382
      %654 = vst [vmem:[#allocation2 + $0x300] sm:$0xff] %v384
      %655 = vst [vmem:[#allocation2 + $0x348] sm:$0xff] %v385
      %656 = vst [vmem:[#allocation2 + $0x390] sm:$0xff] %v387
      %657 = vst [vmem:[#allocation2 + $0x3d8] sm:$0xff] %v388
      %658 = vst [vmem:[#allocation2 + $0x420] sm:$0xff] %v390
      %659 = vst [vmem:[#allocation2 + $0x468] sm:$0xff] %v391
      %v663 = vrot.slane %v390, 1
      %v664 = vrot.slane %v391, 1
      %v665 = vsel %vm433, %v663, %v664
      %v666 = vrot.slane %v392, 1
      %v667 = vsel %vm433, %v664, %v666
      %670 = vst [vmem:[#allocation2 + $0x38] sm:$0xff] %v446
      %671 = vst [vmem:[#allocation2 + $0x80] sm:$0xff] %v448
      %672 = vst [vmem:[#allocation2 + $0xc8] sm:$0xff] %v451
      %673 = vst [vmem:[#allocation2 + $0x110] sm:$0xff] %v453
      %674 = vst [vmem:[#allocation2 + $0x158] sm:$0xff] %v456
      %675 = vst [vmem:[#allocation2 + $0x1a0] sm:$0xff] %v458
      %676 = vst [vmem:[#allocation2 + $0x1e8] sm:$0xff] %v461
      %677 = vst [vmem:[#allocation2 + $0x230] sm:$0xff] %v463
      %678 = vst [vmem:[#allocation2 + $0x278] sm:$0xff] %v466
      %679 = vst [vmem:[#allocation2 + $0x2c0] sm:$0xff] %v468
      %680 = vst [vmem:[#allocation2 + $0x308] sm:$0xff] %v471
      %681 = vst [vmem:[#allocation2 + $0x350] sm:$0xff] %v473
      %682 = vst [vmem:[#allocation2 + $0x398] sm:$0xff] %v600
      %683 = vst [vmem:[#allocation2 + $0x3e0] sm:$0xff] %v602
      %684 = vst [vmem:[#allocation2 + $0x428] sm:$0xff] %v665
      %685 = vst [vmem:[#allocation2 + $0x470] sm:$0xff] %v667
      %v686 = vrot.slane %v390, 2
      %v687 = vrot.slane %v391, 2
      %v688 = vsel %vm506, %v686, %v687
      %v689 = vrot.slane %v392, 2
      %v690 = vsel %vm506, %v687, %v689
      %693 = vst [vmem:[#allocation2 + $0x40] sm:$0xff] %v519
      %694 = vst [vmem:[#allocation2 + $0x88] sm:$0xff] %v521
      %695 = vst [vmem:[#allocation2 + $0xd0] sm:$0xff] %v524
      %696 = vst [vmem:[#allocation2 + $0x118] sm:$0xff] %v526
      %697 = vst [vmem:[#allocation2 + $0x160] sm:$0xff] %v529
      %698 = vst [vmem:[#allocation2 + $0x1a8] sm:$0xff] %v531
      %699 = vst [vmem:[#allocation2 + $0x1f0] sm:$0xff] %v534
      %700 = vst [vmem:[#allocation2 + $0x238] sm:$0xff] %v536
      %701 = vst [vmem:[#allocation2 + $0x280] sm:$0xff] %v539
      %702 = vst [vmem:[#allocation2 + $0x2c8] sm:$0xff] %v541
      %703 = vst [vmem:[#allocation2 + $0x310] sm:$0xff] %v544
      %704 = vst [vmem:[#allocation2 + $0x358] sm:$0xff] %v546
      %705 = vst [vmem:[#allocation2 + $0x3a0] sm:$0xff] %v623
      %706 = vst [vmem:[#allocation2 + $0x3e8] sm:$0xff] %v625
      %707 = vst [vmem:[#allocation2 + $0x430] sm:$0xff] %v688
      %708 = vst [vmem:[#allocation2 + $0x478] sm:$0xff] %v690
      %v709 = vld [vmem:[#allocation2] sm:$0xff]
      %v710 = vld [vmem:[#allocation2 + $0x8] sm:$0xff]
      %v711 = vld [vmem:[#allocation2 + $0x10] sm:$0xff]
      %v712 = vld [vmem:[#allocation2 + $0x18] sm:$0xff]
      %v713 = vld [vmem:[#allocation2 + $0x20] sm:$0xff]
      %v714 = vld [vmem:[#allocation2 + $0x28] sm:$0xff]
      %v715 = vld [vmem:[#allocation2 + $0x30] sm:$0xff]
      %v716 = vld [vmem:[#allocation2 + $0x38] sm:$0xff]
      %v717 = vld [vmem:[#allocation2 + $0x40] sm:$0xff]
      %v718 = vld [vmem:[#allocation2 + $0x48] sm:$0xff]
      %v719 = vld [vmem:[#allocation2 + $0x50] sm:$0xff]
      %v720 = vld [vmem:[#allocation2 + $0x58] sm:$0xff]
      %v721 = vld [vmem:[#allocation2 + $0x60] sm:$0xff]
      %v722 = vld [vmem:[#allocation2 + $0x68] sm:$0xff]
      %v723 = vld [vmem:[#allocation2 + $0x70] sm:$0xff]
      %v724 = vld [vmem:[#allocation2 + $0x78] sm:$0xff]
      %v725 = vld [vmem:[#allocation2 + $0x80] sm:$0xff]
      %v726 = vld [vmem:[#allocation2 + $0x88] sm:$0xff]
      %v727 = vld [vmem:[#allocation2 + $0x90] sm:$0xff]
      %v728 = vld [vmem:[#allocation2 + $0x98] sm:$0xff]
      %v729 = vld [vmem:[#allocation2 + $0xa0] sm:$0xff]
      %v730 = vld [vmem:[#allocation2 + $0xa8] sm:$0xff]
      %v731 = vld [vmem:[#allocation2 + $0xb0] sm:$0xff]
      %v732 = vld [vmem:[#allocation2 + $0xb8] sm:$0xff]
      %v733 = vld [vmem:[#allocation2 + $0xc0] sm:$0xff]
      %v734 = vld [vmem:[#allocation2 + $0xc8] sm:$0xff]
      %v735 = vld [vmem:[#allocation2 + $0xd0] sm:$0xff]
      %v736 = vld [vmem:[#allocation2 + $0xd8] sm:$0xff]
      %v737 = vld [vmem:[#allocation2 + $0xe0] sm:$0xff]
      %v738 = vld [vmem:[#allocation2 + $0xe8] sm:$0xff]
      %v739 = vld [vmem:[#allocation2 + $0xf0] sm:$0xff]
      %v740 = vld [vmem:[#allocation2 + $0xf8] sm:$0xff]
      %v741 = vld [vmem:[#allocation2 + $0x100] sm:$0xff]
      %v742 = vld [vmem:[#allocation2 + $0x108] sm:$0xff]
      %v743 = vld [vmem:[#allocation2 + $0x110] sm:$0xff]
      %v744 = vld [vmem:[#allocation2 + $0x118] sm:$0xff]
      %v745 = vld [vmem:[#allocation2 + $0x120] sm:$0xff]
      %v746 = vld [vmem:[#allocation2 + $0x128] sm:$0xff]
      %v747 = vld [vmem:[#allocation2 + $0x130] sm:$0xff]
      %v748 = vld [vmem:[#allocation2 + $0x138] sm:$0xff]
      %v749 = vld [vmem:[#allocation2 + $0x140] sm:$0xff]
      %v750 = vld [vmem:[#allocation2 + $0x148] sm:$0xff]
      %v751 = vld [vmem:[#allocation2 + $0x150] sm:$0xff]
      %v752 = vld [vmem:[#allocation2 + $0x158] sm:$0xff]
      %v753 = vld [vmem:[#allocation2 + $0x160] sm:$0xff]
      %v754 = vld [vmem:[#allocation2 + $0x168] sm:$0xff]
      %v755 = vld [vmem:[#allocation2 + $0x170] sm:$0xff]
      %v756 = vld [vmem:[#allocation2 + $0x178] sm:$0xff]
      %v757 = vld [vmem:[#allocation2 + $0x180] sm:$0xff]
      %v758 = vld [vmem:[#allocation2 + $0x188] sm:$0xff]
      %v759 = vld [vmem:[#allocation2 + $0x190] sm:$0xff]
      %v760 = vld [vmem:[#allocation2 + $0x198] sm:$0xff]
      %v761 = vld [vmem:[#allocation2 + $0x1a0] sm:$0xff]
      %v762 = vld [vmem:[#allocation2 + $0x1a8] sm:$0xff]
      %v763 = vld [vmem:[#allocation2 + $0x1b0] sm:$0xff]
      %v764 = vld [vmem:[#allocation2 + $0x1b8] sm:$0xff]
      %v765 = vld [vmem:[#allocation2 + $0x1c0] sm:$0xff]
      %v766 = vld [vmem:[#allocation2 + $0x1c8] sm:$0xff]
      %v767 = vld [vmem:[#allocation2 + $0x1d0] sm:$0xff]
      %v768 = vld [vmem:[#allocation2 + $0x1d8] sm:$0xff]
      %v769 = vld [vmem:[#allocation2 + $0x1e0] sm:$0xff]
      %v770 = vld [vmem:[#allocation2 + $0x1e8] sm:$0xff]
      %v771 = vld [vmem:[#allocation2 + $0x1f0] sm:$0xff]
      %v772 = vld [vmem:[#allocation2 + $0x1f8] sm:$0xff]
      %v773 = vld [vmem:[#allocation2 + $0x200] sm:$0xff]
      %v774 = vld [vmem:[#allocation2 + $0x208] sm:$0xff]
      %v775 = vld [vmem:[#allocation2 + $0x210] sm:$0xff]
      %v776 = vld [vmem:[#allocation2 + $0x218] sm:$0xff]
      %v777 = vld [vmem:[#allocation2 + $0x220] sm:$0xff]
      %v778 = vld [vmem:[#allocation2 + $0x228] sm:$0xff]
      %v779 = vld [vmem:[#allocation2 + $0x230] sm:$0xff]
      %v780 = vld [vmem:[#allocation2 + $0x238] sm:$0xff]
      %v781 = vld [vmem:[#allocation2 + $0x240] sm:$0xff]
      %v782 = vld [vmem:[#allocation2 + $0x248] sm:$0xff]
      %v783 = vld [vmem:[#allocation2 + $0x250] sm:$0xff]
      %v784 = vld [vmem:[#allocation2 + $0x258] sm:$0xff]
      %v785 = vld [vmem:[#allocation2 + $0x260] sm:$0xff]
      %v786 = vld [vmem:[#allocation2 + $0x268] sm:$0xff]
      %v787 = vld [vmem:[#allocation2 + $0x270] sm:$0xff]
      %v788 = vld [vmem:[#allocation2 + $0x278] sm:$0xff]
      %v789 = vld [vmem:[#allocation2 + $0x280] sm:$0xff]
      %v790 = vld [vmem:[#allocation2 + $0x288] sm:$0xff]
      %v791 = vld [vmem:[#allocation2 + $0x290] sm:$0xff]
      %v792 = vld [vmem:[#allocation2 + $0x298] sm:$0xff]
      %v793 = vld [vmem:[#allocation2 + $0x2a0] sm:$0xff]
      %v794 = vld [vmem:[#allocation2 + $0x2a8] sm:$0xff]
      %v795 = vld [vmem:[#allocation2 + $0x2b0] sm:$0xff]
      %v796 = vld [vmem:[#allocation2 + $0x2b8] sm:$0xff]
      %v797 = vld [vmem:[#allocation2 + $0x2c0] sm:$0xff]
      %v798 = vld [vmem:[#allocation2 + $0x2c8] sm:$0xff]
      %v799 = vld [vmem:[#allocation2 + $0x2d0] sm:$0xff]
      %v800 = vld [vmem:[#allocation2 + $0x2d8] sm:$0xff]
      %v801 = vld [vmem:[#allocation2 + $0x2e0] sm:$0xff]
      %v802 = vld [vmem:[#allocation2 + $0x2e8] sm:$0xff]
      %v803 = vld [vmem:[#allocation2 + $0x2f0] sm:$0xff]
      %v804 = vld [vmem:[#allocation2 + $0x2f8] sm:$0xff]
      %v805 = vld [vmem:[#allocation2 + $0x300] sm:$0xff]
      %v806 = vld [vmem:[#allocation2 + $0x308] sm:$0xff]
      %v807 = vld [vmem:[#allocation2 + $0x310] sm:$0xff]
      %v808 = vld [vmem:[#allocation2 + $0x318] sm:$0xff]
      %v809 = vld [vmem:[#allocation2 + $0x320] sm:$0xff]
      %v810 = vld [vmem:[#allocation2 + $0x328] sm:$0xff]
      %v811 = vld [vmem:[#allocation2 + $0x330] sm:$0xff]
      %v812 = vld [vmem:[#allocation2 + $0x338] sm:$0xff]
      %v813 = vld [vmem:[#allocation2 + $0x340] sm:$0xff]
      %v814 = vld [vmem:[#allocation2 + $0x348] sm:$0xff]
      %v815 = vld [vmem:[#allocation2 + $0x350] sm:$0xff]
      %v816 = vld [vmem:[#allocation2 + $0x358] sm:$0xff]
      %v817 = vld [vmem:[#allocation2 + $0x360] sm:$0xff]
      %v818 = vld [vmem:[#allocation2 + $0x368] sm:$0xff]
      %v819 = vld [vmem:[#allocation2 + $0x370] sm:$0xff]
      %v820 = vld [vmem:[#allocation2 + $0x378] sm:$0xff]
      %v821 = vld [vmem:[#allocation2 + $0x380] sm:$0xff]
      %v822 = vld [vmem:[#allocation2 + $0x388] sm:$0xff]
      %v823 = vld [vmem:[#allocation2 + $0x390] sm:$0xff]
      %v824 = vld [vmem:[#allocation2 + $0x398] sm:$0xff]
      %v825 = vld [vmem:[#allocation2 + $0x3a0] sm:$0xff]
      %v826 = vld [vmem:[#allocation2 + $0x3a8] sm:$0xff]
      %v827 = vld [vmem:[#allocation2 + $0x3b0] sm:$0xff]
      %v828 = vld [vmem:[#allocation2 + $0x3b8] sm:$0xff]
      %v829 = vld [vmem:[#allocation2 + $0x3c0] sm:$0xff]
      %v830 = vld [vmem:[#allocation2 + $0x3c8] sm:$0xff]
      %v831 = vld [vmem:[#allocation2 + $0x3d0] sm:$0xff]
      %v832 = vld [vmem:[#allocation2 + $0x3d8] sm:$0xff]
      %v833 = vld [vmem:[#allocation2 + $0x3e0] sm:$0xff]
      %v834 = vld [vmem:[#allocation2 + $0x3e8] sm:$0xff]
      %v835 = vld [vmem:[#allocation2 + $0x3f0] sm:$0xff]
      %v836 = vld [vmem:[#allocation2 + $0x3f8] sm:$0xff]
      %v837 = vld [vmem:[#allocation2 + $0x400] sm:$0xff]
      %v838 = vld [vmem:[#allocation2 + $0x408] sm:$0xff]
      %v839 = vld [vmem:[#allocation2 + $0x410] sm:$0xff]
      %v840 = vld [vmem:[#allocation2 + $0x418] sm:$0xff]
      %v841 = vld [vmem:[#allocation2 + $0x420] sm:$0xff]
      %v842 = vld [vmem:[#allocation2 + $0x428] sm:$0xff]
      %v843 = vld [vmem:[#allocation2 + $0x430] sm:$0xff]
      %v844 = vld [vmem:[#allocation2 + $0x438] sm:$0xff]
      %v845 = vld [vmem:[#allocation2 + $0x440] sm:$0xff]
      %v846 = vld [vmem:[#allocation2 + $0x448] sm:$0xff]
      %v847 = vld [vmem:[#allocation2 + $0x450] sm:$0xff]
      %v848 = vld [vmem:[#allocation2 + $0x458] sm:$0xff]
      %v849 = vld [vmem:[#allocation2 + $0x460] sm:$0xff]
      %v850 = vld [vmem:[#allocation2 + $0x468] sm:$0xff]
      %v851 = vld [vmem:[#allocation2 + $0x470] sm:$0xff]
      %v852 = vld [vmem:[#allocation2 + $0x478] sm:$0xff]
      %v853 = vld [vmem:[%s2] sm:$0xff]
      %v854 = vld [vmem:[%s2 + $0x8] sm:$0xff]
      %v855 = vld [vmem:[%s2 + $0x10] sm:$0xff]
      %v856 = vld [vmem:[%s2 + $0x18] sm:$0xff]
      %v857 = vld [vmem:[%s2 + $0x20] sm:$0xff]
      %v858 = vld [vmem:[%s2 + $0x28] sm:$0xff]
      %v859 = vld [vmem:[%s2 + $0x30] sm:$0xff]
      %v860 = vld [vmem:[%s2 + $0x38] sm:$0xff]
      %v861 = vld [vmem:[%s2 + $0x40] sm:$0xff]
      %v862 = vld [vmem:[%s2 + $0x48] sm:$0xff]
      %v863 = vld [vmem:[%s2 + $0x50] sm:$0xff]
      %v864 = vld [vmem:[%s2 + $0x58] sm:$0xff]
      %v865 = vld [vmem:[%s2 + $0x60] sm:$0xff]
      %v866 = vld [vmem:[%s2 + $0x68] sm:$0xff]
      %v867 = vld [vmem:[%s2 + $0x70] sm:$0xff]
      %v868 = vld [vmem:[%s2 + $0x78] sm:$0xff]
      %v869 = vld [vmem:[%s2 + $0x80] sm:$0xff]
      %v870 = vld [vmem:[%s2 + $0x88] sm:$0xff]
      %v871 = vld [vmem:[%s2 + $0x90] sm:$0xff]
      %v872 = vld [vmem:[%s2 + $0x98] sm:$0xff]
      %v873 = vld [vmem:[%s2 + $0xa0] sm:$0xff]
      %v874 = vld [vmem:[%s2 + $0xa8] sm:$0xff]
      %v875 = vld [vmem:[%s2 + $0xb0] sm:$0xff]
      %v876 = vld [vmem:[%s2 + $0xb8] sm:$0xff]
      %v877 = vld [vmem:[%s2 + $0xc0] sm:$0xff]
      %v878 = vld [vmem:[%s2 + $0xc8] sm:$0xff]
      %v879 = vld [vmem:[%s2 + $0xd0] sm:$0xff]
      %v880 = vld [vmem:[%s2 + $0xd8] sm:$0xff]
      %v881 = vld [vmem:[%s2 + $0xe0] sm:$0xff]
      %v882 = vld [vmem:[%s2 + $0xe8] sm:$0xff]
      %v883 = vld [vmem:[%s2 + $0xf0] sm:$0xff]
      %v884 = vld [vmem:[%s2 + $0xf8] sm:$0xff]
      %v885 = vld [vmem:[%s2 + $0x100] sm:$0xff]
      %v886 = vld [vmem:[%s2 + $0x108] sm:$0xff]
      %v887 = vld [vmem:[%s2 + $0x110] sm:$0xff]
      %v888 = vld [vmem:[%s2 + $0x118] sm:$0xff]
      %v889 = vld [vmem:[%s2 + $0x120] sm:$0xff]
      %v890 = vld [vmem:[%s2 + $0x128] sm:$0xff]
      %v891 = vld [vmem:[%s2 + $0x130] sm:$0xff]
      %v892 = vld [vmem:[%s2 + $0x138] sm:$0xff]
      %v893 = vld [vmem:[%s2 + $0x140] sm:$0xff]
      %v894 = vld [vmem:[%s2 + $0x148] sm:$0xff]
      %v895 = vld [vmem:[%s2 + $0x150] sm:$0xff]
      %v896 = vld [vmem:[%s2 + $0x158] sm:$0xff]
      %v897 = vld [vmem:[%s2 + $0x160] sm:$0xff]
      %v898 = vld [vmem:[%s2 + $0x168] sm:$0xff]
      %v899 = vld [vmem:[%s2 + $0x170] sm:$0xff]
      %v900 = vld [vmem:[%s2 + $0x178] sm:$0xff]
      %v901 = vld [vmem:[%s2 + $0x180] sm:$0xff]
      %v902 = vld [vmem:[%s2 + $0x188] sm:$0xff]
      %v903 = vld [vmem:[%s2 + $0x190] sm:$0xff]
      %v904 = vld [vmem:[%s2 + $0x198] sm:$0xff]
      %v905 = vld [vmem:[%s2 + $0x1a0] sm:$0xff]
      %v906 = vld [vmem:[%s2 + $0x1a8] sm:$0xff]
      %v907 = vld [vmem:[%s2 + $0x1b0] sm:$0xff]
      %v908 = vld [vmem:[%s2 + $0x1b8] sm:$0xff]
      %v909 = vld [vmem:[%s2 + $0x1c0] sm:$0xff]
      %v910 = vld [vmem:[%s2 + $0x1c8] sm:$0xff]
      %v911 = vld [vmem:[%s2 + $0x1d0] sm:$0xff]
      %v912 = vld [vmem:[%s2 + $0x1d8] sm:$0xff]
      %v913 = vld [vmem:[%s2 + $0x1e0] sm:$0xff]
      %v914 = vld [vmem:[%s2 + $0x1e8] sm:$0xff]
      %v915 = vld [vmem:[%s2 + $0x1f0] sm:$0xff]
      %v916 = vld [vmem:[%s2 + $0x1f8] sm:$0xff]
      %v917 = vld [vmem:[%s2 + $0x200] sm:$0xff]
      %v918 = vld [vmem:[%s2 + $0x208] sm:$0xff]
      %v919 = vld [vmem:[%s2 + $0x210] sm:$0xff]
      %v920 = vld [vmem:[%s2 + $0x218] sm:$0xff]
      %v921 = vld [vmem:[%s2 + $0x220] sm:$0xff]
      %v922 = vld [vmem:[%s2 + $0x228] sm:$0xff]
      %v923 = vld [vmem:[%s2 + $0x230] sm:$0xff]
      %v924 = vld [vmem:[%s2 + $0x238] sm:$0xff]
      %v925 = vld [vmem:[%s2 + $0x240] sm:$0xff]
      %v926 = vld [vmem:[%s2 + $0x248] sm:$0xff]
      %v927 = vld [vmem:[%s2 + $0x250] sm:$0xff]
      %v928 = vld [vmem:[%s2 + $0x258] sm:$0xff]
      %v929 = vld [vmem:[%s2 + $0x260] sm:$0xff]
      %v930 = vld [vmem:[%s2 + $0x268] sm:$0xff]
      %v931 = vld [vmem:[%s2 + $0x270] sm:$0xff]
      %v932 = vld [vmem:[%s2 + $0x278] sm:$0xff]
      %v933 = vld [vmem:[%s2 + $0x280] sm:$0xff]
      %v934 = vld [vmem:[%s2 + $0x288] sm:$0xff]
      %v935 = vld [vmem:[%s2 + $0x290] sm:$0xff]
      %v936 = vld [vmem:[%s2 + $0x298] sm:$0xff]
      %v937 = vld [vmem:[%s2 + $0x2a0] sm:$0xff]
      %v938 = vld [vmem:[%s2 + $0x2a8] sm:$0xff]
      %v939 = vld [vmem:[%s2 + $0x2b0] sm:$0xff]
      %v940 = vld [vmem:[%s2 + $0x2b8] sm:$0xff]
      %v941 = vld [vmem:[%s2 + $0x2c0] sm:$0xff]
      %v942 = vld [vmem:[%s2 + $0x2c8] sm:$0xff]
      %v943 = vld [vmem:[%s2 + $0x2d0] sm:$0xff]
      %v944 = vld [vmem:[%s2 + $0x2d8] sm:$0xff]
      %v945 = vld [vmem:[%s2 + $0x2e0] sm:$0xff]
      %v946 = vld [vmem:[%s2 + $0x2e8] sm:$0xff]
      %v947 = vld [vmem:[%s2 + $0x2f0] sm:$0xff]
      %v948 = vld [vmem:[%s2 + $0x2f8] sm:$0xff]
      %v949 = vld [vmem:[%s2 + $0x300] sm:$0xff]
      %v950 = vld [vmem:[%s2 + $0x308] sm:$0xff]
      %v951 = vld [vmem:[%s2 + $0x310] sm:$0xff]
      %v952 = vld [vmem:[%s2 + $0x318] sm:$0xff]
      %v953 = vld [vmem:[%s2 + $0x320] sm:$0xff]
      %v954 = vld [vmem:[%s2 + $0x328] sm:$0xff]
      %v955 = vld [vmem:[%s2 + $0x330] sm:$0xff]
      %v956 = vld [vmem:[%s2 + $0x338] sm:$0xff]
      %v957 = vld [vmem:[%s2 + $0x340] sm:$0xff]
      %v958 = vld [vmem:[%s2 + $0x348] sm:$0xff]
      %v959 = vld [vmem:[%s2 + $0x350] sm:$0xff]
      %v960 = vld [vmem:[%s2 + $0x358] sm:$0xff]
      %v961 = vld [vmem:[%s2 + $0x360] sm:$0xff]
      %v962 = vld [vmem:[%s2 + $0x368] sm:$0xff]
      %v963 = vld [vmem:[%s2 + $0x370] sm:$0xff]
      %v964 = vld [vmem:[%s2 + $0x378] sm:$0xff]
      %v965 = vld [vmem:[%s2 + $0x380] sm:$0xff]
      %v966 = vld [vmem:[%s2 + $0x388] sm:$0xff]
      %v967 = vld [vmem:[%s2 + $0x390] sm:$0xff]
      %v968 = vld [vmem:[%s2 + $0x398] sm:$0xff]
      %v969 = vld [vmem:[%s2 + $0x3a0] sm:$0xff]
      %v970 = vld [vmem:[%s2 + $0x3a8] sm:$0xff]
      %v971 = vld [vmem:[%s2 + $0x3b0] sm:$0xff]
      %v972 = vld [vmem:[%s2 + $0x3b8] sm:$0xff]
      %v973 = vld [vmem:[%s2 + $0x3c0] sm:$0xff]
      %v974 = vld [vmem:[%s2 + $0x3c8] sm:$0xff]
      %v975 = vld [vmem:[%s2 + $0x3d0] sm:$0xff]
      %v976 = vld [vmem:[%s2 + $0x3d8] sm:$0xff]
      %v977 = vld [vmem:[%s2 + $0x3e0] sm:$0xff]
      %v978 = vld [vmem:[%s2 + $0x3e8] sm:$0xff]
      %v979 = vld [vmem:[%s2 + $0x3f0] sm:$0xff]
      %v980 = vld [vmem:[%s2 + $0x3f8] sm:$0xff]
      %v981 = vld [vmem:[%s2 + $0x400] sm:$0xff]
      %v982 = vld [vmem:[%s2 + $0x408] sm:$0xff]
      %v983 = vld [vmem:[%s2 + $0x410] sm:$0xff]
      %v984 = vld [vmem:[%s2 + $0x418] sm:$0xff]
      %v985 = vld [vmem:[%s2 + $0x420] sm:$0xff]
      %v986 = vld [vmem:[%s2 + $0x428] sm:$0xff]
      %v987 = vld [vmem:[%s2 + $0x430] sm:$0xff]
      %v988 = vld [vmem:[%s2 + $0x438] sm:$0xff]
      %v989 = vld [vmem:[%s2 + $0x440] sm:$0xff]
      %v990 = vld [vmem:[%s2 + $0x448] sm:$0xff]
      %v991 = vld [vmem:[%s2 + $0x450] sm:$0xff]
      %v992 = vld [vmem:[%s2 + $0x458] sm:$0xff]
      %v993 = vld [vmem:[%s2 + $0x460] sm:$0xff]
      %v994 = vld [vmem:[%s2 + $0x468] sm:$0xff]
      %v995 = vld [vmem:[%s2 + $0x470] sm:$0xff]
      %v996 = vld [vmem:[%s2 + $0x478] sm:$0xff]
      %997 = vmatpush.msra.mxu0 %v868
      %998 = vmatpush.msra.mxu0 %v867
      %999 = vmatpush.msra.mxu0 %v866
      %1000 = vmatpush.msra.mxu0 %v865
      %1001 = vmatpush.msra.mxu0 %v864
      %1002 = vmatpush.msra.mxu0 %v863
      %1003 = vmatpush.msra.mxu0 %v862
      %1004 = vmatpush.msra.mxu0 %v861
      %1005 = vmatpush.msra.mxu0 %v860
      %1006 = vmatpush.msra.mxu0 %v859
      %1007 = vmatpush.msra.mxu0 %v858
      %1008 = vmatpush.msra.mxu0 %v857
      %1009 = vmatpush.msra.mxu0 %v856
      %1010 = vmatpush.msra.mxu0 %v855
      %1011 = vmatpush.msra.mxu0 %v854
      %1012 = vmatpush.msra.mxu0 %v853
      %1013 = vmatmul.f32.gmra.mxu0 %v709
      %v1014 = vpop.f32.mrf.mxu0
      %v1015 = vadd.f32 0.0, %v1014
      %1016 = vmatmul.f32.gmra.mxu0 %v718
      %v1017 = vpop.f32.mrf.mxu0
      %v1018 = vadd.f32 0.0, %v1017
      %1019 = vmatmul.f32.gmra.mxu0 %v727
      %v1020 = vpop.f32.mrf.mxu0
      %v1021 = vadd.f32 0.0, %v1020
      %1022 = vmatmul.f32.gmra.mxu0 %v736
      %v1023 = vpop.f32.mrf.mxu0
      %v1024 = vadd.f32 0.0, %v1023
      %1025 = vmatmul.f32.gmra.mxu0 %v745
      %v1026 = vpop.f32.mrf.mxu0
      %v1027 = vadd.f32 0.0, %v1026
      %1028 = vmatmul.f32.gmra.mxu0 %v754
      %v1029 = vpop.f32.mrf.mxu0
      %v1030 = vadd.f32 0.0, %v1029
      %1031 = vmatmul.f32.gmra.mxu0 %v763
      %v1032 = vpop.f32.mrf.mxu0
      %v1033 = vadd.f32 0.0, %v1032
      %1034 = vmatmul.f32.gmra.mxu0 %v772
      %v1035 = vpop.f32.mrf.mxu0
      %v1036 = vadd.f32 0.0, %v1035
      %1037 = vmatmul.f32.gmra.mxu0 %v781
      %v1038 = vpop.f32.mrf.mxu0
      %v1039 = vadd.f32 0.0, %v1038
      %1040 = vmatmul.f32.gmra.mxu0 %v790
      %v1041 = vpop.f32.mrf.mxu0
      %v1042 = vadd.f32 0.0, %v1041
      %1043 = vmatmul.f32.gmra.mxu0 %v799
      %v1044 = vpop.f32.mrf.mxu0
      %v1045 = vadd.f32 0.0, %v1044
      %1046 = vmatmul.f32.gmra.mxu0 %v808
      %v1047 = vpop.f32.mrf.mxu0
      %v1048 = vadd.f32 0.0, %v1047
      %1049 = vmatmul.f32.gmra.mxu0 %v817
      %v1050 = vpop.f32.mrf.mxu0
      %v1051 = vadd.f32 0.0, %v1050
      %1052 = vmatmul.f32.gmra.mxu0 %v826
      %v1053 = vpop.f32.mrf.mxu0
      %v1054 = vadd.f32 0.0, %v1053
      %1055 = vmatmul.f32.gmra.mxu0 %v835
      %v1056 = vpop.f32.mrf.mxu0
      %v1057 = vadd.f32 0.0, %v1056
      %1058 = vmatmul.f32.gmra.mxu0 %v844
      %v1059 = vpop.f32.mrf.mxu0
      %v1060 = vadd.f32 0.0, %v1059
      %1061 = vdwg.mxu0
      %1062 = vmatpush.msra.mxu0 %v884
      %1063 = vmatpush.msra.mxu0 %v883
      %1064 = vmatpush.msra.mxu0 %v882
      %1065 = vmatpush.msra.mxu0 %v881
      %1066 = vmatpush.msra.mxu0 %v880
      %1067 = vmatpush.msra.mxu0 %v879
      %1068 = vmatpush.msra.mxu0 %v878
      %1069 = vmatpush.msra.mxu0 %v877
      %1070 = vmatpush.msra.mxu0 %v876
      %1071 = vmatpush.msra.mxu0 %v875
      %1072 = vmatpush.msra.mxu0 %v874
      %1073 = vmatpush.msra.mxu0 %v873
      %1074 = vmatpush.msra.mxu0 %v872
      %1075 = vmatpush.msra.mxu0 %v871
      %1076 = vmatpush.msra.mxu0 %v870
      %1077 = vmatpush.msra.mxu0 %v869
      %1078 = vmatmul.f32.gmra.mxu0 %v710
      %v1079 = vpop.f32.mrf.mxu0
      %v1080 = vadd.f32 %v1015, %v1079
      %1081 = vmatmul.f32.gmra.mxu0 %v719
      %v1082 = vpop.f32.mrf.mxu0
      %v1083 = vadd.f32 %v1018, %v1082
      %1084 = vmatmul.f32.gmra.mxu0 %v728
      %v1085 = vpop.f32.mrf.mxu0
      %v1086 = vadd.f32 %v1021, %v1085
      %1087 = vmatmul.f32.gmra.mxu0 %v737
      %v1088 = vpop.f32.mrf.mxu0
      %v1089 = vadd.f32 %v1024, %v1088
      %1090 = vmatmul.f32.gmra.mxu0 %v746
      %v1091 = vpop.f32.mrf.mxu0
      %v1092 = vadd.f32 %v1027, %v1091
      %1093 = vmatmul.f32.gmra.mxu0 %v755
      %v1094 = vpop.f32.mrf.mxu0
      %v1095 = vadd.f32 %v1030, %v1094
      %1096 = vmatmul.f32.gmra.mxu0 %v764
      %v1097 = vpop.f32.mrf.mxu0
      %v1098 = vadd.f32 %v1033, %v1097
      %1099 = vmatmul.f32.gmra.mxu0 %v773
      %v1100 = vpop.f32.mrf.mxu0
      %v1101 = vadd.f32 %v1036, %v1100
      %1102 = vmatmul.f32.gmra.mxu0 %v782
      %v1103 = vpop.f32.mrf.mxu0
      %v1104 = vadd.f32 %v1039, %v1103
      %1105 = vmatmul.f32.gmra.mxu0 %v791
      %v1106 = vpop.f32.mrf.mxu0
      %v1107 = vadd.f32 %v1042, %v1106
      %1108 = vmatmul.f32.gmra.mxu0 %v800
      %v1109 = vpop.f32.mrf.mxu0
      %v1110 = vadd.f32 %v1045, %v1109
      %1111 = vmatmul.f32.gmra.mxu0 %v809
      %v1112 = vpop.f32.mrf.mxu0
      %v1113 = vadd.f32 %v1048, %v1112
      %1114 = vmatmul.f32.gmra.mxu0 %v818
      %v1115 = vpop.f32.mrf.mxu0
      %v1116 = vadd.f32 %v1051, %v1115
      %1117 = vmatmul.f32.gmra.mxu0 %v827
      %v1118 = vpop.f32.mrf.mxu0
      %v1119 = vadd.f32 %v1054, %v1118
      %1120 = vmatmul.f32.gmra.mxu0 %v836
      %v1121 = vpop.f32.mrf.mxu0
      %v1122 = vadd.f32 %v1057, %v1121
      %1123 = vmatmul.f32.gmra.mxu0 %v845
      %v1124 = vpop.f32.mrf.mxu0
      %v1125 = vadd.f32 %v1060, %v1124
      %1126 = vdwg.mxu0
      %1127 = vmatpush.msra.mxu0 %v900
      %1128 = vmatpush.msra.mxu0 %v899
      %1129 = vmatpush.msra.mxu0 %v898
      %1130 = vmatpush.msra.mxu0 %v897
      %1131 = vmatpush.msra.mxu0 %v896
      %1132 = vmatpush.msra.mxu0 %v895
      %1133 = vmatpush.msra.mxu0 %v894
      %1134 = vmatpush.msra.mxu0 %v893
      %1135 = vmatpush.msra.mxu0 %v892
      %1136 = vmatpush.msra.mxu0 %v891
      %1137 = vmatpush.msra.mxu0 %v890
      %1138 = vmatpush.msra.mxu0 %v889
      %1139 = vmatpush.msra.mxu0 %v888
      %1140 = vmatpush.msra.mxu0 %v887
      %1141 = vmatpush.msra.mxu0 %v886
      %1142 = vmatpush.msra.mxu0 %v885
      %1143 = vmatmul.f32.gmra.mxu0 %v711
      %v1144 = vpop.f32.mrf.mxu0
      %v1145 = vadd.f32 %v1080, %v1144
      %1146 = vmatmul.f32.gmra.mxu0 %v720
      %v1147 = vpop.f32.mrf.mxu0
      %v1148 = vadd.f32 %v1083, %v1147
      %1149 = vmatmul.f32.gmra.mxu0 %v729
      %v1150 = vpop.f32.mrf.mxu0
      %v1151 = vadd.f32 %v1086, %v1150
      %1152 = vmatmul.f32.gmra.mxu0 %v738
      %v1153 = vpop.f32.mrf.mxu0
      %v1154 = vadd.f32 %v1089, %v1153
      %1155 = vmatmul.f32.gmra.mxu0 %v747
      %v1156 = vpop.f32.mrf.mxu0
      %v1157 = vadd.f32 %v1092, %v1156
      %1158 = vmatmul.f32.gmra.mxu0 %v756
      %v1159 = vpop.f32.mrf.mxu0
      %v1160 = vadd.f32 %v1095, %v1159
      %1161 = vmatmul.f32.gmra.mxu0 %v765
      %v1162 = vpop.f32.mrf.mxu0
      %v1163 = vadd.f32 %v1098, %v1162
      %1164 = vmatmul.f32.gmra.mxu0 %v774
      %v1165 = vpop.f32.mrf.mxu0
      %v1166 = vadd.f32 %v1101, %v1165
      %1167 = vmatmul.f32.gmra.mxu0 %v783
      %v1168 = vpop.f32.mrf.mxu0
      %v1169 = vadd.f32 %v1104, %v1168
      %1170 = vmatmul.f32.gmra.mxu0 %v792
      %v1171 = vpop.f32.mrf.mxu0
      %v1172 = vadd.f32 %v1107, %v1171
      %1173 = vmatmul.f32.gmra.mxu0 %v801
      %v1174 = vpop.f32.mrf.mxu0
      %v1175 = vadd.f32 %v1110, %v1174
      %1176 = vmatmul.f32.gmra.mxu0 %v810
      %v1177 = vpop.f32.mrf.mxu0
      %v1178 = vadd.f32 %v1113, %v1177
      %1179 = vmatmul.f32.gmra.mxu0 %v819
      %v1180 = vpop.f32.mrf.mxu0
      %v1181 = vadd.f32 %v1116, %v1180
      %1182 = vmatmul.f32.gmra.mxu0 %v828
      %v1183 = vpop.f32.mrf.mxu0
      %v1184 = vadd.f32 %v1119, %v1183
      %1185 = vmatmul.f32.gmra.mxu0 %v837
      %v1186 = vpop.f32.mrf.mxu0
      %v1187 = vadd.f32 %v1122, %v1186
      %1188 = vmatmul.f32.gmra.mxu0 %v846
      %v1189 = vpop.f32.mrf.mxu0
      %v1190 = vadd.f32 %v1125, %v1189
      %1191 = vdwg.mxu0
      %1192 = vmatpush.msra.mxu0 %v916
      %1193 = vmatpush.msra.mxu0 %v915
      %1194 = vmatpush.msra.mxu0 %v914
      %1195 = vmatpush.msra.mxu0 %v913
      %1196 = vmatpush.msra.mxu0 %v912
      %1197 = vmatpush.msra.mxu0 %v911
      %1198 = vmatpush.msra.mxu0 %v910
      %1199 = vmatpush.msra.mxu0 %v909
      %1200 = vmatpush.msra.mxu0 %v908
      %1201 = vmatpush.msra.mxu0 %v907
      %1202 = vmatpush.msra.mxu0 %v906
      %1203 = vmatpush.msra.mxu0 %v905
      %1204 = vmatpush.msra.mxu0 %v904
      %1205 = vmatpush.msra.mxu0 %v903
      %1206 = vmatpush.msra.mxu0 %v902
      %1207 = vmatpush.msra.mxu0 %v901
      %1208 = vmatmul.f32.gmra.mxu0 %v712
      %v1209 = vpop.f32.mrf.mxu0
      %v1210 = vadd.f32 %v1145, %v1209
      %1211 = vmatmul.f32.gmra.mxu0 %v721
      %v1212 = vpop.f32.mrf.mxu0
      %v1213 = vadd.f32 %v1148, %v1212
      %1214 = vmatmul.f32.gmra.mxu0 %v730
      %v1215 = vpop.f32.mrf.mxu0
      %v1216 = vadd.f32 %v1151, %v1215
      %1217 = vmatmul.f32.gmra.mxu0 %v739
      %v1218 = vpop.f32.mrf.mxu0
      %v1219 = vadd.f32 %v1154, %v1218
      %1220 = vmatmul.f32.gmra.mxu0 %v748
      %v1221 = vpop.f32.mrf.mxu0
      %v1222 = vadd.f32 %v1157, %v1221
      %1223 = vmatmul.f32.gmra.mxu0 %v757
      %v1224 = vpop.f32.mrf.mxu0
      %v1225 = vadd.f32 %v1160, %v1224
      %1226 = vmatmul.f32.gmra.mxu0 %v766
      %v1227 = vpop.f32.mrf.mxu0
      %v1228 = vadd.f32 %v1163, %v1227
      %1229 = vmatmul.f32.gmra.mxu0 %v775
      %v1230 = vpop.f32.mrf.mxu0
      %v1231 = vadd.f32 %v1166, %v1230
      %1232 = vmatmul.f32.gmra.mxu0 %v784
      %v1233 = vpop.f32.mrf.mxu0
      %v1234 = vadd.f32 %v1169, %v1233
      %1235 = vmatmul.f32.gmra.mxu0 %v793
      %v1236 = vpop.f32.mrf.mxu0
      %v1237 = vadd.f32 %v1172, %v1236
      %1238 = vmatmul.f32.gmra.mxu0 %v802
      %v1239 = vpop.f32.mrf.mxu0
      %v1240 = vadd.f32 %v1175, %v1239
      %1241 = vmatmul.f32.gmra.mxu0 %v811
      %v1242 = vpop.f32.mrf.mxu0
      %v1243 = vadd.f32 %v1178, %v1242
      %1244 = vmatmul.f32.gmra.mxu0 %v820
      %v1245 = vpop.f32.mrf.mxu0
      %v1246 = vadd.f32 %v1181, %v1245
      %1247 = vmatmul.f32.gmra.mxu0 %v829
      %v1248 = vpop.f32.mrf.mxu0
      %v1249 = vadd.f32 %v1184, %v1248
      %1250 = vmatmul.f32.gmra.mxu0 %v838
      %v1251 = vpop.f32.mrf.mxu0
      %v1252 = vadd.f32 %v1187, %v1251
      %1253 = vmatmul.f32.gmra.mxu0 %v847
      %v1254 = vpop.f32.mrf.mxu0
      %v1255 = vadd.f32 %v1190, %v1254
      %1256 = vdwg.mxu0
      %1257 = vmatpush.msra.mxu0 %v932
      %1258 = vmatpush.msra.mxu0 %v931
      %1259 = vmatpush.msra.mxu0 %v930
      %1260 = vmatpush.msra.mxu0 %v929
      %1261 = vmatpush.msra.mxu0 %v928
      %1262 = vmatpush.msra.mxu0 %v927
      %1263 = vmatpush.msra.mxu0 %v926
      %1264 = vmatpush.msra.mxu0 %v925
      %1265 = vmatpush.msra.mxu0 %v924
      %1266 = vmatpush.msra.mxu0 %v923
      %1267 = vmatpush.msra.mxu0 %v922
      %1268 = vmatpush.msra.mxu0 %v921
      %1269 = vmatpush.msra.mxu0 %v920
      %1270 = vmatpush.msra.mxu0 %v919
      %1271 = vmatpush.msra.mxu0 %v918
      %1272 = vmatpush.msra.mxu0 %v917
      %1273 = vmatmul.f32.gmra.mxu0 %v713
      %v1274 = vpop.f32.mrf.mxu0
      %v1275 = vadd.f32 %v1210, %v1274
      %1276 = vmatmul.f32.gmra.mxu0 %v722
      %v1277 = vpop.f32.mrf.mxu0
      %v1278 = vadd.f32 %v1213, %v1277
      %1279 = vmatmul.f32.gmra.mxu0 %v731
      %v1280 = vpop.f32.mrf.mxu0
      %v1281 = vadd.f32 %v1216, %v1280
      %1282 = vmatmul.f32.gmra.mxu0 %v740
      %v1283 = vpop.f32.mrf.mxu0
      %v1284 = vadd.f32 %v1219, %v1283
      %1285 = vmatmul.f32.gmra.mxu0 %v749
      %v1286 = vpop.f32.mrf.mxu0
      %v1287 = vadd.f32 %v1222, %v1286
      %1288 = vmatmul.f32.gmra.mxu0 %v758
      %v1289 = vpop.f32.mrf.mxu0
      %v1290 = vadd.f32 %v1225, %v1289
      %1291 = vmatmul.f32.gmra.mxu0 %v767
      %v1292 = vpop.f32.mrf.mxu0
      %v1293 = vadd.f32 %v1228, %v1292
      %1294 = vmatmul.f32.gmra.mxu0 %v776
      %v1295 = vpop.f32.mrf.mxu0
      %v1296 = vadd.f32 %v1231, %v1295
      %1297 = vmatmul.f32.gmra.mxu0 %v785
      %v1298 = vpop.f32.mrf.mxu0
      %v1299 = vadd.f32 %v1234, %v1298
      %1300 = vmatmul.f32.gmra.mxu0 %v794
      %v1301 = vpop.f32.mrf.mxu0
      %v1302 = vadd.f32 %v1237, %v1301
      %1303 = vmatmul.f32.gmra.mxu0 %v803
      %v1304 = vpop.f32.mrf.mxu0
      %v1305 = vadd.f32 %v1240, %v1304
      %1306 = vmatmul.f32.gmra.mxu0 %v812
      %v1307 = vpop.f32.mrf.mxu0
      %v1308 = vadd.f32 %v1243, %v1307
      %1309 = vmatmul.f32.gmra.mxu0 %v821
      %v1310 = vpop.f32.mrf.mxu0
      %v1311 = vadd.f32 %v1246, %v1310
      %1312 = vmatmul.f32.gmra.mxu0 %v830
      %v1313 = vpop.f32.mrf.mxu0
      %v1314 = vadd.f32 %v1249, %v1313
      %1315 = vmatmul.f32.gmra.mxu0 %v839
      %v1316 = vpop.f32.mrf.mxu0
      %v1317 = vadd.f32 %v1252, %v1316
      %1318 = vmatmul.f32.gmra.mxu0 %v848
      %v1319 = vpop.f32.mrf.mxu0
      %v1320 = vadd.f32 %v1255, %v1319
      %1321 = vdwg.mxu0
      %1322 = vmatpush.msra.mxu0 %v948
      %1323 = vmatpush.msra.mxu0 %v947
      %1324 = vmatpush.msra.mxu0 %v946
      %1325 = vmatpush.msra.mxu0 %v945
      %1326 = vmatpush.msra.mxu0 %v944
      %1327 = vmatpush.msra.mxu0 %v943
      %1328 = vmatpush.msra.mxu0 %v942
      %1329 = vmatpush.msra.mxu0 %v941
      %1330 = vmatpush.msra.mxu0 %v940
      %1331 = vmatpush.msra.mxu0 %v939
      %1332 = vmatpush.msra.mxu0 %v938
      %1333 = vmatpush.msra.mxu0 %v937
      %1334 = vmatpush.msra.mxu0 %v936
      %1335 = vmatpush.msra.mxu0 %v935
      %1336 = vmatpush.msra.mxu0 %v934
      %1337 = vmatpush.msra.mxu0 %v933
      %1338 = vmatmul.f32.gmra.mxu0 %v714
      %v1339 = vpop.f32.mrf.mxu0
      %v1340 = vadd.f32 %v1275, %v1339
      %1341 = vmatmul.f32.gmra.mxu0 %v723
      %v1342 = vpop.f32.mrf.mxu0
      %v1343 = vadd.f32 %v1278, %v1342
      %1344 = vmatmul.f32.gmra.mxu0 %v732
      %v1345 = vpop.f32.mrf.mxu0
      %v1346 = vadd.f32 %v1281, %v1345
      %1347 = vmatmul.f32.gmra.mxu0 %v741
      %v1348 = vpop.f32.mrf.mxu0
      %v1349 = vadd.f32 %v1284, %v1348
      %1350 = vmatmul.f32.gmra.mxu0 %v750
      %v1351 = vpop.f32.mrf.mxu0
      %v1352 = vadd.f32 %v1287, %v1351
      %1353 = vmatmul.f32.gmra.mxu0 %v759
      %v1354 = vpop.f32.mrf.mxu0
      %v1355 = vadd.f32 %v1290, %v1354
      %1356 = vmatmul.f32.gmra.mxu0 %v768
      %v1357 = vpop.f32.mrf.mxu0
      %v1358 = vadd.f32 %v1293, %v1357
      %1359 = vmatmul.f32.gmra.mxu0 %v777
      %v1360 = vpop.f32.mrf.mxu0
      %v1361 = vadd.f32 %v1296, %v1360
      %1362 = vmatmul.f32.gmra.mxu0 %v786
      %v1363 = vpop.f32.mrf.mxu0
      %v1364 = vadd.f32 %v1299, %v1363
      %1365 = vmatmul.f32.gmra.mxu0 %v795
      %v1366 = vpop.f32.mrf.mxu0
      %v1367 = vadd.f32 %v1302, %v1366
      %1368 = vmatmul.f32.gmra.mxu0 %v804
      %v1369 = vpop.f32.mrf.mxu0
      %v1370 = vadd.f32 %v1305, %v1369
      %1371 = vmatmul.f32.gmra.mxu0 %v813
      %v1372 = vpop.f32.mrf.mxu0
      %v1373 = vadd.f32 %v1308, %v1372
      %1374 = vmatmul.f32.gmra.mxu0 %v822
      %v1375 = vpop.f32.mrf.mxu0
      %v1376 = vadd.f32 %v1311, %v1375
      %1377 = vmatmul.f32.gmra.mxu0 %v831
      %v1378 = vpop.f32.mrf.mxu0
      %v1379 = vadd.f32 %v1314, %v1378
      %1380 = vmatmul.f32.gmra.mxu0 %v840
      %v1381 = vpop.f32.mrf.mxu0
      %v1382 = vadd.f32 %v1317, %v1381
      %1383 = vmatmul.f32.gmra.mxu0 %v849
      %v1384 = vpop.f32.mrf.mxu0
      %v1385 = vadd.f32 %v1320, %v1384
      %1386 = vdwg.mxu0
      %1387 = vmatpush.msra.mxu0 %v964
      %1388 = vmatpush.msra.mxu0 %v963
      %1389 = vmatpush.msra.mxu0 %v962
      %1390 = vmatpush.msra.mxu0 %v961
      %1391 = vmatpush.msra.mxu0 %v960
      %1392 = vmatpush.msra.mxu0 %v959
      %1393 = vmatpush.msra.mxu0 %v958
      %1394 = vmatpush.msra.mxu0 %v957
      %1395 = vmatpush.msra.mxu0 %v956
      %1396 = vmatpush.msra.mxu0 %v955
      %1397 = vmatpush.msra.mxu0 %v954
      %1398 = vmatpush.msra.mxu0 %v953
      %1399 = vmatpush.msra.mxu0 %v952
      %1400 = vmatpush.msra.mxu0 %v951
      %1401 = vmatpush.msra.mxu0 %v950
      %1402 = vmatpush.msra.mxu0 %v949
      %1403 = vmatmul.f32.gmra.mxu0 %v715
      %v1404 = vpop.f32.mrf.mxu0
      %v1405 = vadd.f32 %v1340, %v1404
      %1406 = vmatmul.f32.gmra.mxu0 %v724
      %v1407 = vpop.f32.mrf.mxu0
      %v1408 = vadd.f32 %v1343, %v1407
      %1409 = vmatmul.f32.gmra.mxu0 %v733
      %v1410 = vpop.f32.mrf.mxu0
      %v1411 = vadd.f32 %v1346, %v1410
      %1412 = vmatmul.f32.gmra.mxu0 %v742
      %v1413 = vpop.f32.mrf.mxu0
      %v1414 = vadd.f32 %v1349, %v1413
      %1415 = vmatmul.f32.gmra.mxu0 %v751
      %v1416 = vpop.f32.mrf.mxu0
      %v1417 = vadd.f32 %v1352, %v1416
      %1418 = vmatmul.f32.gmra.mxu0 %v760
      %v1419 = vpop.f32.mrf.mxu0
      %v1420 = vadd.f32 %v1355, %v1419
      %1421 = vmatmul.f32.gmra.mxu0 %v769
      %v1422 = vpop.f32.mrf.mxu0
      %v1423 = vadd.f32 %v1358, %v1422
      %1424 = vmatmul.f32.gmra.mxu0 %v778
      %v1425 = vpop.f32.mrf.mxu0
      %v1426 = vadd.f32 %v1361, %v1425
      %1427 = vmatmul.f32.gmra.mxu0 %v787
      %v1428 = vpop.f32.mrf.mxu0
      %v1429 = vadd.f32 %v1364, %v1428
      %1430 = vmatmul.f32.gmra.mxu0 %v796
      %v1431 = vpop.f32.mrf.mxu0
      %v1432 = vadd.f32 %v1367, %v1431
      %1433 = vmatmul.f32.gmra.mxu0 %v805
      %v1434 = vpop.f32.mrf.mxu0
      %v1435 = vadd.f32 %v1370, %v1434
      %1436 = vmatmul.f32.gmra.mxu0 %v814
      %v1437 = vpop.f32.mrf.mxu0
      %v1438 = vadd.f32 %v1373, %v1437
      %1439 = vmatmul.f32.gmra.mxu0 %v823
      %v1440 = vpop.f32.mrf.mxu0
      %v1441 = vadd.f32 %v1376, %v1440
      %1442 = vmatmul.f32.gmra.mxu0 %v832
      %v1443 = vpop.f32.mrf.mxu0
      %v1444 = vadd.f32 %v1379, %v1443
      %1445 = vmatmul.f32.gmra.mxu0 %v841
      %v1446 = vpop.f32.mrf.mxu0
      %v1447 = vadd.f32 %v1382, %v1446
      %1448 = vmatmul.f32.gmra.mxu0 %v850
      %v1449 = vpop.f32.mrf.mxu0
      %v1450 = vadd.f32 %v1385, %v1449
      %1451 = vdwg.mxu0
      %1452 = vmatpush.msra.mxu0 %v980
      %1453 = vmatpush.msra.mxu0 %v979
      %1454 = vmatpush.msra.mxu0 %v978
      %1455 = vmatpush.msra.mxu0 %v977
      %1456 = vmatpush.msra.mxu0 %v976
      %1457 = vmatpush.msra.mxu0 %v975
      %1458 = vmatpush.msra.mxu0 %v974
      %1459 = vmatpush.msra.mxu0 %v973
      %1460 = vmatpush.msra.mxu0 %v972
      %1461 = vmatpush.msra.mxu0 %v971
      %1462 = vmatpush.msra.mxu0 %v970
      %1463 = vmatpush.msra.mxu0 %v969
      %1464 = vmatpush.msra.mxu0 %v968
      %1465 = vmatpush.msra.mxu0 %v967
      %1466 = vmatpush.msra.mxu0 %v966
      %1467 = vmatpush.msra.mxu0 %v965
      %1468 = vmatmul.f32.gmra.mxu0 %v716
      %v1469 = vpop.f32.mrf.mxu0
      %v1470 = vadd.f32 %v1405, %v1469
      %1471 = vmatmul.f32.gmra.mxu0 %v725
      %v1472 = vpop.f32.mrf.mxu0
      %v1473 = vadd.f32 %v1408, %v1472
      %1474 = vmatmul.f32.gmra.mxu0 %v734
      %v1475 = vpop.f32.mrf.mxu0
      %v1476 = vadd.f32 %v1411, %v1475
      %1477 = vmatmul.f32.gmra.mxu0 %v743
      %v1478 = vpop.f32.mrf.mxu0
      %v1479 = vadd.f32 %v1414, %v1478
      %1480 = vmatmul.f32.gmra.mxu0 %v752
      %v1481 = vpop.f32.mrf.mxu0
      %v1482 = vadd.f32 %v1417, %v1481
      %1483 = vmatmul.f32.gmra.mxu0 %v761
      %v1484 = vpop.f32.mrf.mxu0
      %v1485 = vadd.f32 %v1420, %v1484
      %1486 = vmatmul.f32.gmra.mxu0 %v770
      %v1487 = vpop.f32.mrf.mxu0
      %v1488 = vadd.f32 %v1423, %v1487
      %1489 = vmatmul.f32.gmra.mxu0 %v779
      %v1490 = vpop.f32.mrf.mxu0
      %v1491 = vadd.f32 %v1426, %v1490
      %1492 = vmatmul.f32.gmra.mxu0 %v788
      %v1493 = vpop.f32.mrf.mxu0
      %v1494 = vadd.f32 %v1429, %v1493
      %1495 = vmatmul.f32.gmra.mxu0 %v797
      %v1496 = vpop.f32.mrf.mxu0
      %v1497 = vadd.f32 %v1432, %v1496
      %1498 = vmatmul.f32.gmra.mxu0 %v806
      %v1499 = vpop.f32.mrf.mxu0
      %v1500 = vadd.f32 %v1435, %v1499
      %1501 = vmatmul.f32.gmra.mxu0 %v815
      %v1502 = vpop.f32.mrf.mxu0
      %v1503 = vadd.f32 %v1438, %v1502
      %1504 = vmatmul.f32.gmra.mxu0 %v824
      %v1505 = vpop.f32.mrf.mxu0
      %v1506 = vadd.f32 %v1441, %v1505
      %1507 = vmatmul.f32.gmra.mxu0 %v833
      %v1508 = vpop.f32.mrf.mxu0
      %v1509 = vadd.f32 %v1444, %v1508
      %1510 = vmatmul.f32.gmra.mxu0 %v842
      %v1511 = vpop.f32.mrf.mxu0
      %v1512 = vadd.f32 %v1447, %v1511
      %1513 = vmatmul.f32.gmra.mxu0 %v851
      %v1514 = vpop.f32.mrf.mxu0
      %v1515 = vadd.f32 %v1450, %v1514
      %1516 = vdwg.mxu0
      %1517 = vmatpush.msra.mxu0 %v996
      %1518 = vmatpush.msra.mxu0 %v995
      %1519 = vmatpush.msra.mxu0 %v994
      %1520 = vmatpush.msra.mxu0 %v993
      %1521 = vmatpush.msra.mxu0 %v992
      %1522 = vmatpush.msra.mxu0 %v991
      %1523 = vmatpush.msra.mxu0 %v990
      %1524 = vmatpush.msra.mxu0 %v989
      %1525 = vmatpush.msra.mxu0 %v988
      %1526 = vmatpush.msra.mxu0 %v987
      %1527 = vmatpush.msra.mxu0 %v986
      %1528 = vmatpush.msra.mxu0 %v985
      %1529 = vmatpush.msra.mxu0 %v984
      %1530 = vmatpush.msra.mxu0 %v983
      %1531 = vmatpush.msra.mxu0 %v982
      %1532 = vmatpush.msra.mxu0 %v981
      %1533 = vmatmul.f32.gmra.mxu0 %v717
      %v1534 = vpop.f32.mrf.mxu0
      %v1535 = vadd.f32 %v1470, %v1534
      %1536 = vmatmul.f32.gmra.mxu0 %v726
      %v1537 = vpop.f32.mrf.mxu0
      %v1538 = vadd.f32 %v1473, %v1537
      %1539 = vmatmul.f32.gmra.mxu0 %v735
      %v1540 = vpop.f32.mrf.mxu0
      %v1541 = vadd.f32 %v1476, %v1540
      %1542 = vmatmul.f32.gmra.mxu0 %v744
      %v1543 = vpop.f32.mrf.mxu0
      %v1544 = vadd.f32 %v1479, %v1543
      %1545 = vmatmul.f32.gmra.mxu0 %v753
      %v1546 = vpop.f32.mrf.mxu0
      %v1547 = vadd.f32 %v1482, %v1546
      %1548 = vmatmul.f32.gmra.mxu0 %v762
      %v1549 = vpop.f32.mrf.mxu0
      %v1550 = vadd.f32 %v1485, %v1549
      %1551 = vmatmul.f32.gmra.mxu0 %v771
      %v1552 = vpop.f32.mrf.mxu0
      %v1553 = vadd.f32 %v1488, %v1552
      %1554 = vmatmul.f32.gmra.mxu0 %v780
      %v1555 = vpop.f32.mrf.mxu0
      %v1556 = vadd.f32 %v1491, %v1555
      %1557 = vmatmul.f32.gmra.mxu0 %v789
      %v1558 = vpop.f32.mrf.mxu0
      %v1559 = vadd.f32 %v1494, %v1558
      %1560 = vmatmul.f32.gmra.mxu0 %v798
      %v1561 = vpop.f32.mrf.mxu0
      %v1562 = vadd.f32 %v1497, %v1561
      %1563 = vmatmul.f32.gmra.mxu0 %v807
      %v1564 = vpop.f32.mrf.mxu0
      %v1565 = vadd.f32 %v1500, %v1564
      %1566 = vmatmul.f32.gmra.mxu0 %v816
      %v1567 = vpop.f32.mrf.mxu0
      %v1568 = vadd.f32 %v1503, %v1567
      %1569 = vmatmul.f32.gmra.mxu0 %v825
      %v1570 = vpop.f32.mrf.mxu0
      %v1571 = vadd.f32 %v1506, %v1570
      %1572 = vmatmul.f32.gmra.mxu0 %v834
      %v1573 = vpop.f32.mrf.mxu0
      %v1574 = vadd.f32 %v1509, %v1573
      %1575 = vmatmul.f32.gmra.mxu0 %v843
      %v1576 = vpop.f32.mrf.mxu0
      %v1577 = vadd.f32 %v1512, %v1576
      %1578 = vmatmul.f32.gmra.mxu0 %v852
      %v1579 = vpop.f32.mrf.mxu0
      %v1580 = vadd.f32 %v1515, %v1579
      %1581 = vdwg.mxu0
      %v1582 = vadd.f32 %v1535, %v1538
      %v1583 = vadd.f32 %v1582, %v1541
      %v1584 = vadd.f32 %v1583, %v1544
      %v1585 = vadd.f32 %v1584, %v1547
      %v1586 = vadd.f32 %v1585, %v1550
      %v1587 = vadd.f32 %v1586, %v1553
      %v1588 = vadd.f32 %v1587, %v1556
      %v1589 = vadd.f32 %v1588, %v1559
      %v1590 = vadd.f32 %v1589, %v1562
      %v1591 = vadd.f32 %v1590, %v1565
      %v1592 = vadd.f32 %v1591, %v1568
      %v1593 = vadd.f32 %v1592, %v1571
      %v1594 = vadd.f32 %v1593, %v1574
      %v1595 = vadd.f32 %v1594, %v1577
      %v1596 = vadd.f32 %v1595, %v1580
      %v1597 = vrot.slane %v1596, 4
      %v1598 = vadd.f32 %v1596, %v1597
      %v1599 = vrot.slane %v1598, 2
      %v1600 = vadd.f32 %v1598, %v1599
      %v1601 = vrot.slane %v1600, 1
      %v1602 = vadd.f32 %v1600, %v1601
      %v1603 = vmul.f32 %v1535, %v1535
      %v1604 = vmul.f32 %v1538, %v1538
      %v1605 = vmul.f32 %v1541, %v1541
      %v1606 = vmul.f32 %v1544, %v1544
      %v1607 = vmul.f32 %v1547, %v1547
      %v1608 = vmul.f32 %v1550, %v1550
      %v1609 = vmul.f32 %v1553, %v1553
      %v1610 = vmul.f32 %v1556, %v1556
      %v1611 = vmul.f32 %v1559, %v1559
      %v1612 = vmul.f32 %v1562, %v1562
      %v1613 = vmul.f32 %v1565, %v1565
      %v1614 = vmul.f32 %v1568, %v1568
      %v1615 = vmul.f32 %v1571, %v1571
      %v1616 = vmul.f32 %v1574, %v1574
      %v1617 = vmul.f32 %v1577, %v1577
      %v1618 = vmul.f32 %v1580, %v1580
      %v1619 = vadd.f32 %v1603, %v1604
      %v1620 = vadd.f32 %v1619, %v1605
      %v1621 = vadd.f32 %v1620, %v1606
      %v1622 = vadd.f32 %v1621, %v1607
      %v1623 = vadd.f32 %v1622, %v1608
      %v1624 = vadd.f32 %v1623, %v1609
      %v1625 = vadd.f32 %v1624, %v1610
      %v1626 = vadd.f32 %v1625, %v1611
      %v1627 = vadd.f32 %v1626, %v1612
      %v1628 = vadd.f32 %v1627, %v1613
      %v1629 = vadd.f32 %v1628, %v1614
      %v1630 = vadd.f32 %v1629, %v1615
      %v1631 = vadd.f32 %v1630, %v1616
      %v1632 = vadd.f32 %v1631, %v1617
      %v1633 = vadd.f32 %v1632, %v1618
      %v1634 = vrot.slane %v1633, 4
      %v1635 = vadd.f32 %v1633, %v1634
      %v1636 = vrot.slane %v1635, 2
      %v1637 = vadd.f32 %v1635, %v1636
      %v1638 = vrot.slane %v1637, 1
      %v1639 = vadd.f32 %v1637, %v1638
      %vm1640 = vcmask 1040384
      %v1641 = vsel %vm1640, %v1602, %v1639
      %1642 = vst [vmem:[%s362] sm:$0x3] %v1641
      %1643 = vst [vmem:[%s353] sm:$0xff] %v1535
      %1644 = vst [vmem:[%s353 + $0x8] sm:$0xff] %v1538
      %1645 = vst [vmem:[%s353 + $0x10] sm:$0xff] %v1541
      %1646 = vst [vmem:[%s353 + $0x18] sm:$0xff] %v1544
      %1647 = vst [vmem:[%s353 + $0x20] sm:$0xff] %v1547
      %1648 = vst [vmem:[%s353 + $0x28] sm:$0xff] %v1550
      %1649 = vst [vmem:[%s353 + $0x30] sm:$0xff] %v1553
      %1650 = vst [vmem:[%s353 + $0x38] sm:$0xff] %v1556
      %1651 = vst [vmem:[%s353 + $0x40] sm:$0xff] %v1559
      %1652 = vst [vmem:[%s353 + $0x48] sm:$0xff] %v1562
      %1653 = vst [vmem:[%s353 + $0x50] sm:$0xff] %v1565
      %1654 = vst [vmem:[%s353 + $0x58] sm:$0xff] %v1568
      %1655 = vst [vmem:[%s353 + $0x60] sm:$0xff] %v1571
      %1656 = vst [vmem:[%s353 + $0x68] sm:$0xff] %v1574
      %1657 = vst [vmem:[%s353 + $0x70] sm:$0xff] %v1577
      %1658 = vst [vmem:[%s353 + $0x78] sm:$0xff] %v1580
      %s1659 = smul.u32 8, %s23
      %p1660 = scmp.lt.s32.totalorder %s22, 1
      %s1661 = scalar_select %p1660, %s22, 1
      %p1662 = scmp.lt.s32.totalorder %s1659, 15
      %s1663 = scalar_select %p1662, %s1659, 15
      %s1664 = smul.addr %s1663, 2
      %s1665 = smul.addr %s1661, 32
      %s1666 = sadd.s32 %s1664, %s1665
      %s1667 = smul.addr %s1666, 8
      %s1668 = scalar_lea.vmem %s5, %s1667
      %p1669 = scmp.lt.s32.totalorder %s22, 1
      %s1670 = scalar_select %p1669, %s22, 1
      %p1671 = scmp.lt.s32.totalorder %s23, 1
      %s1672 = scalar_select %p1671, %s23, 1
      %s1673 = smul.addr %s1670, 2
      %s1674 = sadd.s32 %s1672, %s1673
      %s1675 = smul.addr %s1674, 2
      %s1676 = scalar_lea.vmem %s6, %s1675
      // Predicated region
      $region41: #{_double_conv_impl.3} parent=39 // pred_check
        %p1677 = pneg %p171
      $region42: #{_double_conv_impl.3} parent=39 // pred_check_branch
        %1679 = sbr.rel (%p1677) target = $region44
      $region43: #{_double_conv_impl.3} parent=39 // pred_region
        %s1680 = smul.u32 8, %s23
      $region44: #{_double_conv_impl.3} parent=39 // pred_fallthru
        _
      // Predicated region
      $region45: #{_double_conv_impl.3} parent=39 // pred_check
        %p1681 = pneg %p199
      $region46: #{_double_conv_impl.3} parent=39 // pred_check_branch
        %1683 = sbr.rel (%p1681) target = $region48
      $region47: #{_double_conv_impl.3} parent=39 // pred_region
        _
      $region48: #{_double_conv_impl.3} parent=39 // pred_fallthru
        _
    $region40: #{_double_conv_impl.3} parent=5 // pred_fallthru
      _
    %p1684 = scmp.le.s32.totalorder 2, %s13
    // Predicated region
    $region49: #{_double_conv_impl.3} parent=5 // pred_check
      %p1685 = pneg %p1684
    $region50: #{_double_conv_impl.3} parent=5 // pred_check_branch
      %1687 = sbr.rel (%p1685) target = $region52
    $region51: #{_double_conv_impl.3} parent=5 // pred_region
      %s1688 = ssub.s32 %s13, 2
      // Predicated region
      $region53: #{_double_conv_impl.3} parent=51 // pred_check
        %p1689 = pneg %p177
      $region54: #{_double_conv_impl.3} parent=51 // pred_check_branch
        %1691 = sbr.rel (%p1689) target = $region56
      $region55: #{_double_conv_impl.3} parent=51 // pred_region
        %s1692 = smul.u32 8, %s25
        %p1693 = scmp.lt.s32.totalorder %s24, 1
        %s1694 = scalar_select %p1693, %s24, 1
        %p1695 = scmp.lt.s32.totalorder %s1692, 15
        %s1696 = scalar_select %p1695, %s1692, 15
        %s1697 = smul.addr %s1696, 2
        %s1698 = smul.addr %s1694, 32
        %s1699 = sadd.s32 %s1697, %s1698
        %s1700 = smul.addr %s1699, 8
        %s1701 = scalar_lea.vmem %s5, %s1700
      $region56: #{_double_conv_impl.3} parent=51 // pred_fallthru
        _
      // Predicated region
      $region57: #{_double_conv_impl.3} parent=51 // pred_check
        %p1702 = pneg %p205
      $region58: #{_double_conv_impl.3} parent=51 // pred_check_branch
        %1704 = sbr.rel (%p1702) target = $region60
      $region59: #{_double_conv_impl.3} parent=51 // pred_region
        %p1705 = scmp.lt.s32.totalorder %s24, 1
        %s1706 = scalar_select %p1705, %s24, 1
        %p1707 = scmp.lt.s32.totalorder %s25, 1
        %s1708 = scalar_select %p1707, %s25, 1
        %s1709 = smul.addr %s1706, 2
        %s1710 = sadd.s32 %s1708, %s1709
        %s1711 = smul.addr %s1710, 2
        %s1712 = scalar_lea.vmem %s6, %s1711
      $region60: #{_double_conv_impl.3} parent=51 // pred_fallthru
        _
    $region52: #{_double_conv_impl.3} parent=5 // pred_fallthru
      _
  $region6: #{_double_conv_impl.3} parent=0 // loop_footer
    %s17 = sadd.s32 1, %s13
  $region7: #{_double_conv_impl.3} parent=0 // loop_footer_branch
    %12 = sbr.rel target = $region3
  $region8: #{_double_conv_impl.3} parent=0 // loop_exit
    _

// kernel: _double_conv_impl.4
$region0: #{_double_conv_impl.4}
  #allocation0 [shape = 'u32[]', space=smem, size = 0x4, offset = 0x4, fixed_abs, tag = 'smem constant byte address 0x4 - core index']
  #allocation1 [shape = 'u32[72,128]{1,0:T(1,128)}', space=vmem, size = 0x9000, scoped, tag = 'internal scratch']
  #allocation2 [shape = 'f32[8,16,1152]{2,1,0:T(8,128)}', space=vmem, size = 0x90000, scoped, tag = 'scratch operand']
  %s0 = inlined_call_operand.vmem [shape: f32[2,24,18,128], index: 0, kind: input, shape index: {}, may-alias: {0,1}]
  %s1 = inlined_call_operand.vmem [shape: f32[2,24,18,128], index: 1, kind: input, shape index: {}, may-alias: {0,1}]
  %s2 = inlined_call_operand.vmem [shape: f32[1152,128], index: 2, kind: input, shape index: {}]
  %s3 = inlined_call_operand.vmem [shape: f32[1,18,128], index: 3, kind: input, shape index: {}]
  %s4 = inlined_call_operand.vmem [shape: f32[1,18,128], index: 4, kind: input, shape index: {}]
  %s5 = inlined_call_operand.vmem [shape: f32[2,16,16,128], index: 5, kind: output, shape index: {0}]
  %s6 = inlined_call_operand.vmem [shape: f32[2,2,2,128], index: 6, kind: output, shape index: {1}]
  %7 = xla_tuple %s5, %s6
  %s8 = sld [smem:[#allocation0]]
  $region61: #{_double_conv_impl.4} parent=0
    _
  %s10 = ssub.s32 1, %s8
  %s11 = scalar_select 0, %s10, %s8
  loop: start=0, step=1, limit=6
  $region2: #{_double_conv_impl.4} parent=0 // loop_pre_header
    _
  $region3: #{_double_conv_impl.4} parent=0 // loop_header
    %s13 = sphi 0, %s17
    %p14 = scmp.ge.s32.totalorder %s13, 6
    %s20 = sphi 0, %s32
    %s21 = sphi 0, %s28
    %s22 = sphi 0, %s20
    %s23 = sphi 0, %s21
    %s24 = sphi 0, %s22
    %s25 = sphi 0, %s23
    %s37 = sphi 0, %s39
    %s40 = sphi 0, %s37
    %s41 = sphi 0, %s40
    %s57 = sphi 0, %s41
    %s67 = sphi 0, %s69
    %s70 = sphi 0, %s67
    %s71 = sphi 0, %s70
    %s87 = sphi 0, %s71
    %s91 = sphi 0, %s91
    %s93 = sphi 0, %s91
    %s94 = sphi 0, %s93
    %s108 = sphi 0, %s94
    %s112 = sphi 0, %s112
    %s114 = sphi 0, %s112
    %s115 = sphi 0, %s114
    %s129 = sphi 0, %s115
    %s133 = sphi 0, %s133
    %s135 = sphi 0, %s133
    %s136 = sphi 0, %s135
    %s150 = sphi 0, %s136
    %s158 = sphi 0, %s160
    %s161 = sphi 0, %s158
    %s162 = sphi 0, %s161
    %s178 = sphi 0, %s162
    %s186 = sphi 0, %s188
    %s189 = sphi 0, %s186
    %s190 = sphi 0, %s189
    %s206 = sphi 0, %s190
  $region4: #{_double_conv_impl.4} parent=0 // loop_header_branch
    %16 = sbr.rel (%p14) target = $region8
  $region5: #{_double_conv_impl.4} parent=0 // loop_body
    %s18 = ssub.s32 %s13, 1
    %s19 = ssub.s32 %s13, 2
    %s26 = sadd.s32 1, %s21
    %p27 = scmp.ge.s32.totalorder %s26, 2
    %s28 = scalar_select %p27, 0, %s26
    %s29 = sadd.s32 1, %s20
    %s30 = scalar_select %p27, %s29, %s20
    %p31 = scmp.ge.s32.totalorder %s30, 2
    %s32 = scalar_select %p31, 0, %s30
    %s33 = ssub.s32 %s20, %s32
    %s34 = ssub.s32 %s21, %s28
    %s35 = sor.u32 %s33, %s34
    %p36 = scmp.eq.s32.totalorder %s35, 0
    %s38 = sadd.s32 %s37, 1
    %s39 = scalar_select %p36, %s37, %s38
    %p42 = pneg %p36
    %p43 = scmp.eq.s32.totalorder %s13, 3
    %p44 = por %p42, %p43
    %p45 = scmp.ne.s32.totalorder %s37, %s40
    %p46 = scmp.eq.s32.totalorder %s13, 0
    %p47 = por %p45, %p46
    %p48 = scmp.ne.s32.totalorder %s37, %s40
    %p49 = scmp.eq.s32.totalorder %s18, 3
    %p50 = por %p48, %p49
    %p51 = scmp.ne.s32.totalorder %s40, %s41
    %p52 = scmp.eq.s32.totalorder %s18, 0
    %p53 = por %p51, %p52
    %p54 = scmp.ne.s32.totalorder %s40, %s41
    %p55 = scmp.eq.s32.totalorder %s19, 3
    %p56 = por %p54, %p55
    %p58 = scmp.ne.s32.totalorder %s41, %s57
    %p59 = scmp.eq.s32.totalorder %s19, 0
    %p60 = por %p58, %p59
    %s61 = sadd.s32 %s21, 1
    %s62 = sadd.s32 %s28, 1
    %s63 = ssub.s32 %s20, %s32
    %s64 = ssub.s32 %s61, %s62
    %s65 = sor.u32 %s63, %s64
    %p66 = scmp.eq.s32.totalorder %s65, 0
    %s68 = sadd.s32 %s67, 1
    %s69 = scalar_select %p66, %s67, %s68
    %p72 = pneg %p66
    %p73 = scmp.eq.s32.totalorder %s13, 3
    %p74 = por %p72, %p73
    %p75 = scmp.ne.s32.totalorder %s67, %s70
    %p76 = scmp.eq.s32.totalorder %s13, 0
    %p77 = por %p75, %p76
    %p78 = scmp.ne.s32.totalorder %s67, %s70
    %p79 = scmp.eq.s32.totalorder %s18, 3
    %p80 = por %p78, %p79
    %p81 = scmp.ne.s32.totalorder %s70, %s71
    %p82 = scmp.eq.s32.totalorder %s18, 0
    %p83 = por %p81, %p82
    %p84 = scmp.ne.s32.totalorder %s70, %s71
    %p85 = scmp.eq.s32.totalorder %s19, 3
    %p86 = por %p84, %p85
    %p88 = scmp.ne.s32.totalorder %s71, %s87
    %p89 = scmp.eq.s32.totalorder %s19, 0
    %p90 = por %p88, %p89
    %s92 = sadd.s32 %s91, 1
    %p95 = scmp.eq.s32.totalorder %s13, 3
    %p96 = scmp.ne.s32.totalorder %s91, %s93
    %p97 = scmp.eq.s32.totalorder %s13, 0
    %p98 = por %p96, %p97
    %p99 = scmp.ne.s32.totalorder %s91, %s93
    %p100 = scmp.eq.s32.totalorder %s18, 3
    %p101 = por %p99, %p100
    %p102 = scmp.ne.s32.totalorder %s93, %s94
    %p103 = scmp.eq.s32.totalorder %s18, 0
    %p104 = por %p102, %p103
    %p105 = scmp.ne.s32.totalorder %s93, %s94
    %p106 = scmp.eq.s32.totalorder %s19, 3
    %p107 = por %p105, %p106
    %p109 = scmp.ne.s32.totalorder %s94, %s108
    %p110 = scmp.eq.s32.totalorder %s19, 0
    %p111 = por %p109, %p110
    %s113 = sadd.s32 %s112, 1
    %p116 = scmp.eq.s32.totalorder %s13, 3
    %p117 = scmp.ne.s32.totalorder %s112, %s114
    %p118 = scmp.eq.s32.totalorder %s13, 0
    %p119 = por %p117, %p118
    %p120 = scmp.ne.s32.totalorder %s112, %s114
    %p121 = scmp.eq.s32.totalorder %s18, 3
    %p122 = por %p120, %p121
    %p123 = scmp.ne.s32.totalorder %s114, %s115
    %p124 = scmp.eq.s32.totalorder %s18, 0
    %p125 = por %p123, %p124
    %p126 = scmp.ne.s32.totalorder %s114, %s115
    %p127 = scmp.eq.s32.totalorder %s19, 3
    %p128 = por %p126, %p127
    %p130 = scmp.ne.s32.totalorder %s115, %s129
    %p131 = scmp.eq.s32.totalorder %s19, 0
    %p132 = por %p130, %p131
    %s134 = sadd.s32 %s133, 1
    %p137 = scmp.eq.s32.totalorder %s13, 3
    %p138 = scmp.ne.s32.totalorder %s133, %s135
    %p139 = scmp.eq.s32.totalorder %s13, 0
    %p140 = por %p138, %p139
    %p141 = scmp.ne.s32.totalorder %s133, %s135
    %p142 = scmp.eq.s32.totalorder %s18, 3
    %p143 = por %p141, %p142
    %p144 = scmp.ne.s32.totalorder %s135, %s136
    %p145 = scmp.eq.s32.totalorder %s18, 0
    %p146 = por %p144, %p145
    %p147 = scmp.ne.s32.totalorder %s135, %s136
    %p148 = scmp.eq.s32.totalorder %s19, 3
    %p149 = por %p147, %p148
    %p151 = scmp.ne.s32.totalorder %s136, %s150
    %p152 = scmp.eq.s32.totalorder %s19, 0
    %p153 = por %p151, %p152
    %s154 = ssub.s32 %s20, %s32
    %s155 = ssub.s32 %s21, %s28
    %s156 = sor.u32 %s154, %s155
    %p157 = scmp.eq.s32.totalorder %s156, 0
    %s159 = sadd.s32 %s158, 1
    %s160 = scalar_select %p157, %s158, %s159
    %p163 = pneg %p157
    %p164 = scmp.eq.s32.totalorder %s13, 3
    %p165 = por %p163, %p164
    %p166 = scmp.ne.s32.totalorder %s158, %s161
    %p167 = scmp.eq.s32.totalorder %s13, 0
    %p168 = por %p166, %p167
    %p169 = scmp.ne.s32.totalorder %s158, %s161
    %p170 = scmp.eq.s32.totalorder %s18, 3
    %p171 = por %p169, %p170
    %p172 = scmp.ne.s32.totalorder %s161, %s162
    %p173 = scmp.eq.s32.totalorder %s18, 0
    %p174 = por %p172, %p173
    %p175 = scmp.ne.s32.totalorder %s161, %s162
    %p176 = scmp.eq.s32.totalorder %s19, 3
    %p177 = por %p175, %p176
    %p179 = scmp.ne.s32.totalorder %s162, %s178
    %p180 = scmp.eq.s32.totalorder %s19, 0
    %p181 = por %p179, %p180
    %s182 = ssub.s32 %s20, %s32
    %s183 = ssub.s32 %s21, %s28
    %s184 = sor.u32 %s182, %s183
    %p185 = scmp.eq.s32.totalorder %s184, 0
    %s187 = sadd.s32 %s186, 1
    %s188 = scalar_select %p185, %s186, %s187
    %p191 = pneg %p185
    %p192 = scmp.eq.s32.totalorder %s13, 3
    %p193 = por %p191, %p192
    %p194 = scmp.ne.s32.totalorder %s186, %s189
    %p195 = scmp.eq.s32.totalorder %s13, 0
    %p196 = por %p194, %p195
    %p197 = scmp.ne.s32.totalorder %s186, %s189
    %p198 = scmp.eq.s32.totalorder %s18, 3
    %p199 = por %p197, %p198
    %p200 = scmp.ne.s32.totalorder %s189, %s190
    %p201 = scmp.eq.s32.totalorder %s18, 0
    %p202 = por %p200, %p201
    %p203 = scmp.ne.s32.totalorder %s189, %s190
    %p204 = scmp.eq.s32.totalorder %s19, 3
    %p205 = por %p203, %p204
    %p207 = scmp.ne.s32.totalorder %s190, %s206
    %p208 = scmp.eq.s32.totalorder %s19, 0
    %p209 = por %p207, %p208
    %p210 = scmp.le.s32.totalorder 1, %s13
    %p211 = scmp.lt.s32.totalorder %s13, 5
    %p212 = pnand %p210, %p211
    %p213 = pneg %p212
    // Predicated region
    $region9: #{_double_conv_impl.4} parent=5 // pred_check
      _
    $region10: #{_double_conv_impl.4} parent=5 // pred_check_branch
      %215 = sbr.rel (%p212) target = $region12
    $region11: #{_double_conv_impl.4} parent=5 // pred_region
      %s216 = ssub.s32 %s13, 1
      // Predicated region
      $region13: #{_double_conv_impl.4} parent=11 // pred_check
        %p217 = pneg %p104
      $region14: #{_double_conv_impl.4} parent=11 // pred_check_branch
        %219 = sbr.rel (%p217) target = $region16
      $region15: #{_double_conv_impl.4} parent=11 // pred_region
        _
      $region16: #{_double_conv_impl.4} parent=11 // pred_fallthru
        _
      // Predicated region
      $region17: #{_double_conv_impl.4} parent=11 // pred_check
        %p220 = pneg %p125
      $region18: #{_double_conv_impl.4} parent=11 // pred_check_branch
        %222 = sbr.rel (%p220) target = $region20
      $region19: #{_double_conv_impl.4} parent=11 // pred_region
        _
      $region20: #{_double_conv_impl.4} parent=11 // pred_fallthru
        _
      // Predicated region
      $region21: #{_double_conv_impl.4} parent=11 // pred_check
        %p223 = pneg %p146
      $region22: #{_double_conv_impl.4} parent=11 // pred_check_branch
        %225 = sbr.rel (%p223) target = $region24
      $region23: #{_double_conv_impl.4} parent=11 // pred_region
        _
      $region24: #{_double_conv_impl.4} parent=11 // pred_fallthru
        _
    $region12: #{_double_conv_impl.4} parent=5 // pred_fallthru
      _
    %p226 = scmp.lt.s32.totalorder %s13, 4
    // Predicated region
    $region25: #{_double_conv_impl.4} parent=5 // pred_check
      %p227 = pneg %p226
    $region26: #{_double_conv_impl.4} parent=5 // pred_check_branch
      %229 = sbr.rel (%p227) target = $region28
    $region27: #{_double_conv_impl.4} parent=5 // pred_region
      // Predicated region
      $region29: #{_double_conv_impl.4} parent=27 // pred_check
        %p230 = pneg %p47
      $region30: #{_double_conv_impl.4} parent=27 // pred_check_branch
        %232 = sbr.rel (%p230) target = $region32
      $region31: #{_double_conv_impl.4} parent=27 // pred_region
        %s233 = smul.u32 8, %s21
        %p234 = scmp.lt.s32.totalorder %s20, 1
        %s235 = scalar_select %p234, %s20, 1
        %p236 = scmp.lt.s32.totalorder %s233, 23
        %s237 = scalar_select %p236, %s233, 23
        %s238 = smul.addr %s237, 3
        %s239 = smul.addr %s235, 72
        %s240 = sadd.s32 %s238, %s239
        %s241 = smul.addr %s240, 8
        %s242 = scalar_lea.vmem %s0, %s241
        %s243 = smul.u32 8, %s21
      $region32: #{_double_conv_impl.4} parent=27 // pred_fallthru
        _
      // Predicated region
      $region33: #{_double_conv_impl.4} parent=27 // pred_check
        %p244 = pneg %p77
      $region34: #{_double_conv_impl.4} parent=27 // pred_check_branch
        %246 = sbr.rel (%p244) target = $region36
      $region35: #{_double_conv_impl.4} parent=27 // pred_region
        %s247 = sadd.s32 %s21, 1
        %s248 = smul.u32 8, %s247
        %p249 = scmp.lt.s32.totalorder %s20, 1
        %s250 = scalar_select %p249, %s20, 1
        %p251 = scmp.lt.s32.totalorder %s248, 23
        %s252 = scalar_select %p251, %s248, 23
        %s253 = smul.addr %s252, 3
        %s254 = smul.addr %s250, 72
        %s255 = sadd.s32 %s253, %s254
        %s256 = smul.addr %s255, 8
        %s257 = scalar_lea.vmem %s1, %s256
        %s258 = sadd.s32 %s21, 1
        %s259 = smul.u32 8, %s258
      $region36: #{_double_conv_impl.4} parent=27 // pred_fallthru
        _
    $region28: #{_double_conv_impl.4} parent=5 // pred_fallthru
      _
    %p260 = scmp.le.s32.totalorder 1, %s13
    %p261 = scmp.lt.s32.totalorder %s13, 5
    %p262 = pnand %p260, %p261
    %p263 = pneg %p262
    // Predicated region
    $region37: #{_double_conv_impl.4} parent=5 // pred_check
      _
    $region38: #{_double_conv_impl.4} parent=5 // pred_check_branch
      %265 = sbr.rel (%p262) target = $region40
    $region39: #{_double_conv_impl.4} parent=5 // pred_region
      %s266 = ssub.s32 %s13, 1
      %s267 = smul.u32 8, %s23
      %p268 = scmp.lt.s32.totalorder %s22, 1
      %s269 = scalar_select %p268, %s22, 1
      %p270 = scmp.lt.s32.totalorder %s267, 23
      %s271 = scalar_select %p270, %s267, 23
      %s272 = smul.addr %s271, 3
      %s273 = smul.addr %s269, 72
      %s274 = sadd.s32 %s272, %s273
      %s275 = smul.addr %s274, 8
      %s276 = scalar_lea.vmem %s0, %s275
      %p277 = pneg %p53
      %p278 = pneg %p50
      %s279 = sadd.s32 %s23, 1
      %s280 = smul.u32 8, %s279
      %p281 = scmp.lt.s32.totalorder %s22, 1
      %s282 = scalar_select %p281, %s22, 1
      %p283 = scmp.lt.s32.totalorder %s280, 23
      %s284 = scalar_select %p283, %s280, 23
      %s285 = smul.addr %s284, 3
      %s286 = smul.addr %s282, 72
      %s287 = sadd.s32 %s285, %s286
      %s288 = smul.addr %s287, 8
      %s289 = scalar_lea.vmem %s1, %s288
      %p290 = pneg %p83
      %p291 = pneg %p80
      %p292 = pneg %p104
      %p293 = pneg %p101
      %p294 = pneg %p125
      %p295 = pneg %p122
      %p296 = pneg %p146
      %p297 = pneg %p143
      %p298 = pneg %p174
      %p299 = pneg %p171
      %s300 = smul.u32 8, %s23
      %p301 = scmp.lt.s32.totalorder %s22, 1
      %s302 = scalar_select %p301, %s22, 1
      %p303 = scmp.lt.s32.totalorder %s300, 15
      %s304 = scalar_select %p303, %s300, 15
      %s305 = smul.addr %s304, 2
      %s306 = smul.addr %s302, 32
      %s307 = sadd.s32 %s305, %s306
      %s308 = smul.addr %s307, 8
      %s309 = scalar_lea.vmem %s5, %s308
      %p310 = pneg %p202
      %p311 = pneg %p199
      %p312 = scmp.lt.s32.totalorder %s22, 1
      %s313 = scalar_select %p312, %s22, 1
      %p314 = scmp.lt.s32.totalorder %s23, 1
      %s315 = scalar_select %p314, %s23, 1
      %s316 = smul.addr %s313, 2
      %s317 = sadd.s32 %s315, %s316
      %s318 = smul.addr %s317, 2
      %s319 = scalar_lea.vmem %s6, %s318
      %s320 = smul.u32 8, %s23
      %p321 = scmp.lt.s32.totalorder %s22, 1
      %s322 = scalar_select %p321, %s22, 1
      %p323 = scmp.lt.s32.totalorder %s320, 23
      %s324 = scalar_select %p323, %s320, 23
      %s325 = smul.addr %s324, 3
      %s326 = smul.addr %s322, 72
      %s327 = sadd.s32 %s325, %s326
      %s328 = smul.addr %s327, 8
      %s329 = scalar_lea.vmem %s0, %s328
      %s330 = smul.u32 8, %s23
      %s331 = sadd.s32 %s23, 1
      %s332 = smul.u32 8, %s331
      %p333 = scmp.lt.s32.totalorder %s22, 1
      %s334 = scalar_select %p333, %s22, 1
      %p335 = scmp.lt.s32.totalorder %s332, 23
      %s336 = scalar_select %p335, %s332, 23
      %s337 = smul.addr %s336, 3
      %s338 = smul.addr %s334, 72
      %s339 = sadd.s32 %s337, %s338
      %s340 = smul.addr %s339, 8
      %s341 = scalar_lea.vmem %s1, %s340
      %s342 = sadd.s32 %s23, 1
      %s343 = smul.u32 8, %s342
      %s344 = smul.u32 8, %s23
      %p345 = scmp.lt.s32.totalorder %s22, 1
      %s346 = scalar_select %p345, %s22, 1
      %p347 = scmp.lt.s32.totalorder %s344, 15
      %s348 = scalar_select %p347, %s344, 15
      %s349 = smul.addr %s348, 2
      %s350 = smul.addr %s346, 32
      %s351 = sadd.s32 %s349, %s350
      %s352 = smul.addr %s351, 8
      %s353 = scalar_lea.vmem %s5, %s352
      %s354 = smul.u32 8, %s23
      %p355 = scmp.lt.s32.totalorder %s22, 1
      %s356 = scalar_select %p355, %s22, 1
      %p357 = scmp.lt.s32.totalorder %s23, 1
      %s358 = scalar_select %p357, %s23, 1
      %s359 = smul.addr %s356, 2
      %s360 = sadd.s32 %s358, %s359
      %s361 = smul.addr %s360, 2
      %s362 = scalar_lea.vmem %s6, %s361
      %v363 = vld [vmem:[%s329] sm:$0xff]
      %v364 = vld [vmem:[%s329 + $0x8] sm:$0xff]
      %v365 = vld [vmem:[%s329 + $0x10] sm:$0x3]
      %v366 = vld [vmem:[%s329 + $0x18] sm:$0xff]
      %v367 = vld [vmem:[%s329 + $0x20] sm:$0xff]
      %v368 = vld [vmem:[%s329 + $0x28] sm:$0x3]
      %v369 = vld [vmem:[%s329 + $0x30] sm:$0xff]
      %v370 = vld [vmem:[%s329 + $0x38] sm:$0xff]
      %v371 = vld [vmem:[%s329 + $0x40] sm:$0x3]
      %v372 = vld [vmem:[%s329 + $0x48] sm:$0xff]
      %v373 = vld [vmem:[%s329 + $0x50] sm:$0xff]
      %v374 = vld [vmem:[%s329 + $0x58] sm:$0x3]
      %v375 = vld [vmem:[%s329 + $0x60] sm:$0xff]
      %v376 = vld [vmem:[%s329 + $0x68] sm:$0xff]
      %v377 = vld [vmem:[%s329 + $0x70] sm:$0x3]
      %v378 = vld [vmem:[%s329 + $0x78] sm:$0xff]
      %v379 = vld [vmem:[%s329 + $0x80] sm:$0xff]
      %v380 = vld [vmem:[%s329 + $0x88] sm:$0x3]
      %v381 = vld [vmem:[%s329 + $0x90] sm:$0xff]
      %v382 = vld [vmem:[%s329 + $0x98] sm:$0xff]
      %v383 = vld [vmem:[%s329 + $0xa0] sm:$0x3]
      %v384 = vld [vmem:[%s329 + $0xa8] sm:$0xff]
      %v385 = vld [vmem:[%s329 + $0xb0] sm:$0xff]
      %v386 = vld [vmem:[%s329 + $0xb8] sm:$0x3]
      %v387 = vld [vmem:[%s341] sm:$0xff]
      %v388 = vld [vmem:[%s341 + $0x8] sm:$0xff]
      %v389 = vld [vmem:[%s341 + $0x10] sm:$0x3]
      %v390 = vld [vmem:[%s341 + $0x18] sm:$0xff]
      %v391 = vld [vmem:[%s341 + $0x20] sm:$0xff]
      %v392 = vld [vmem:[%s341 + $0x28] sm:$0x3]
      %v393 = vld [vmem:[%s3] sm:$0xff]
      %v394 = vld [vmem:[%s3 + $0x8] sm:$0xff]
      %v395 = vld [vmem:[%s3 + $0x10] sm:$0x3]
      %v396 = vmul.f32 %v363, %v393
      %v397 = vmul.f32 %v364, %v394
      %v398 = vmul.f32 %v365, %v395
      %v399 = vmul.f32 %v366, %v393
      %v400 = vmul.f32 %v367, %v394
      %v401 = vmul.f32 %v368, %v395
      %v402 = vmul.f32 %v369, %v393
      %v403 = vmul.f32 %v370, %v394
      %v404 = vmul.f32 %v371, %v395
      %v405 = vmul.f32 %v372, %v393
      %v406 = vmul.f32 %v373, %v394
      %v407 = vmul.f32 %v374, %v395
      %v408 = vmul.f32 %v375, %v393
      %v409 = vmul.f32 %v376, %v394
      %v410 = vmul.f32 %v377, %v395
      %v411 = vmul.f32 %v378, %v393
      %v412 = vmul.f32 %v379, %v394
      %v413 = vmul.f32 %v380, %v395
      %v414 = vmul.f32 %v381, %v393
      %v415 = vmul.f32 %v382, %v394
      %v416 = vmul.f32 %v383, %v395
      %v417 = vmul.f32 %v384, %v393
      %v418 = vmul.f32 %v385, %v394
      %v419 = vmul.f32 %v386, %v395
      %v420 = vmul.f32 %v387, %v393
      %v421 = vmul.f32 %v388, %v394
      %v422 = vmul.f32 %v389, %v395
      %v423 = vmul.f32 %v390, %v393
      %v424 = vmul.f32 %v391, %v394
      %v425 = vmul.f32 %v392, %v395
      %v426 = vld [vmem:[%s4] sm:$0xff]
      %v427 = vld [vmem:[%s4 + $0x8] sm:$0xff]
      %v428 = vld [vmem:[%s4 + $0x10] sm:$0x3]
      %v429 = vadd.f32 %v396, %v426
      %v430 = vadd.f32 %v397, %v427
      %v431 = vadd.f32 %v398, %v428
      %v432 = vadd.f32 %v399, %v426
      %v433 = vadd.f32 %v400, %v427
      %v434 = vadd.f32 %v401, %v428
      %v435 = vadd.f32 %v402, %v426
      %v436 = vadd.f32 %v403, %v427
      %v437 = vadd.f32 %v404, %v428
      %v438 = vadd.f32 %v405, %v426
      %v439 = vadd.f32 %v406, %v427
      %v440 = vadd.f32 %v407, %v428
      %v441 = vadd.f32 %v408, %v426
      %v442 = vadd.f32 %v409, %v427
      %v443 = vadd.f32 %v410, %v428
      %v444 = vadd.f32 %v411, %v426
      %v445 = vadd.f32 %v412, %v427
      %v446 = vadd.f32 %v413, %v428
      %v447 = vadd.f32 %v414, %v426
      %v448 = vadd.f32 %v415, %v427
      %v449 = vadd.f32 %v416, %v428
      %v450 = vadd.f32 %v417, %v426
      %v451 = vadd.f32 %v418, %v427
      %v452 = vadd.f32 %v419, %v428
      %v453 = vadd.f32 %v420, %v426
      %v454 = vadd.f32 %v421, %v427
      %v455 = vadd.f32 %v422, %v428
      %v456 = vadd.f32 %v423, %v426
      %v457 = vadd.f32 %v424, %v427
      %v458 = vadd.f32 %v425, %v428
      %v459 = vmax.f32 %v429, 0.0
      %v460 = vmax.f32 %v430, 0.0
      %v461 = vmax.f32 %v431, 0.0
      %v462 = vmax.f32 %v432, 0.0
      %v463 = vmax.f32 %v433, 0.0
      %v464 = vmax.f32 %v434, 0.0
      %v465 = vmax.f32 %v435, 0.0
      %v466 = vmax.f32 %v436, 0.0
      %v467 = vmax.f32 %v437, 0.0
      %v468 = vmax.f32 %v438, 0.0
      %v469 = vmax.f32 %v439, 0.0
      %v470 = vmax.f32 %v440, 0.0
      %v471 = vmax.f32 %v441, 0.0
      %v472 = vmax.f32 %v442, 0.0
      %v473 = vmax.f32 %v443, 0.0
      %v474 = vmax.f32 %v444, 0.0
      %v475 = vmax.f32 %v445, 0.0
      %v476 = vmax.f32 %v446, 0.0
      %v477 = vmax.f32 %v447, 0.0
      %v478 = vmax.f32 %v448, 0.0
      %v479 = vmax.f32 %v449, 0.0
      %v480 = vmax.f32 %v450, 0.0
      %v481 = vmax.f32 %v451, 0.0
      %v482 = vmax.f32 %v452, 0.0
      %v483 = vmax.f32 %v453, 0.0
      %v484 = vmax.f32 %v454, 0.0
      %v485 = vmax.f32 %v455, 0.0
      %v486 = vmax.f32 %v456, 0.0
      %v487 = vmax.f32 %v457, 0.0
      %v488 = vmax.f32 %v458, 0.0
      %p489 = scmp.eq.s32.totalorder %s23, 0
      %s490 = scalar_select %p489, 0.0, 1.0
      %p491 = scmp.eq.s32.totalorder %s23, 1
      %s492 = scalar_select %p491, 0.0, 1.0
      %v493 = vstv %s490
      %v494 = vmul.f32 %v459, %v493
      %v495 = vmul.f32 %v460, %v493
      %v496 = vmul.f32 %v461, %v493
      %v497 = vstv %s492
      %v498 = vmul.f32 %v486, %v497
      %v499 = vmul.f32 %v487, %v497
      %v500 = vmul.f32 %v488, %v497
      %501 = vst [vmem:[#allocation2] sm:$0xff] %v494
      %502 = vst [vmem:[#allocation2 + $0x48] sm:$0xff] %v495
      %503 = vst [vmem:[#allocation2 + $0x90] sm:$0xff] %v462
      %504 = vst [vmem:[#allocation2 + $0xd8] sm:$0xff] %v463
      %505 = vst [vmem:[#allocation2 + $0x120] sm:$0xff] %v465
      %506 = vst [vmem:[#allocation2 + $0x168] sm:$0xff] %v466
      %507 = vst [vmem:[#allocation2 + $0x1b0] sm:$0xff] %v468
      %508 = vst [vmem:[#allocation2 + $0x1f8] sm:$0xff] %v469
      %509 = vst [vmem:[#allocation2 + $0x240] sm:$0xff] %v471
      %510 = vst [vmem:[#allocation2 + $0x288] sm:$0xff] %v472
      %511 = vst [vmem:[#allocation2 + $0x2d0] sm:$0xff] %v474
      %512 = vst [vmem:[#allocation2 + $0x318] sm:$0xff] %v475
      %513 = vst [vmem:[#allocation2 + $0x360] sm:$0xff] %v477
      %514 = vst [vmem:[#allocation2 + $0x3a8] sm:$0xff] %v478
      %515 = vst [vmem:[#allocation2 + $0x3f0] sm:$0xff] %v480
      %516 = vst [vmem:[#allocation2 + $0x438] sm:$0xff] %v481
      %vm541 = vcmask 1046528
      %v542 = vrot.slane %v494, 1
      %v543 = vrot.slane %v495, 1
      %v544 = vsel %vm541, %v542, %v543
      %v545 = vrot.slane %v496, 1
      %v546 = vsel %vm541, %v543, %v545
      %v547 = vrot.slane %v462, 1
      %v548 = vrot.slane %v463, 1
      %v549 = vsel %vm541, %v547, %v548
      %v550 = vrot.slane %v464, 1
      %v551 = vsel %vm541, %v548, %v550
      %v552 = vrot.slane %v465, 1
      %v553 = vrot.slane %v466, 1
      %v554 = vsel %vm541, %v552, %v553
      %v555 = vrot.slane %v467, 1
      %v556 = vsel %vm541, %v553, %v555
      %v557 = vrot.slane %v468, 1
      %v558 = vrot.slane %v469, 1
      %v559 = vsel %vm541, %v557, %v558
      %v560 = vrot.slane %v470, 1
      %v561 = vsel %vm541, %v558, %v560
      %v562 = vrot.slane %v471, 1
      %v563 = vrot.slane %v472, 1
      %v564 = vsel %vm541, %v562, %v563
      %v565 = vrot.slane %v473, 1
      %v566 = vsel %vm541, %v563, %v565
      %v567 = vrot.slane %v474, 1
      %v568 = vrot.slane %v475, 1
      %v569 = vsel %vm541, %v567, %v568
      %v570 = vrot.slane %v476, 1
      %v571 = vsel %vm541, %v568, %v570
      %v572 = vrot.slane %v477, 1
      %v573 = vrot.slane %v478, 1
      %v574 = vsel %vm541, %v572, %v573
      %v575 = vrot.slane %v479, 1
      %v576 = vsel %vm541, %v573, %v575
      %v577 = vrot.slane %v480, 1
      %v578 = vrot.slane %v481, 1
      %v579 = vsel %vm541, %v577, %v578
      %v580 = vrot.slane %v482, 1
      %v581 = vsel %vm541, %v578, %v580
      %598 = vst [vmem:[#allocation2 + $0x8] sm:$0xff] %v544
      %599 = vst [vmem:[#allocation2 + $0x50] sm:$0xff] %v546
      %600 = vst [vmem:[#allocation2 + $0x98] sm:$0xff] %v549
      %601 = vst [vmem:[#allocation2 + $0xe0] sm:$0xff] %v551
      %602 = vst [vmem:[#allocation2 + $0x128] sm:$0xff] %v554
      %603 = vst [vmem:[#allocation2 + $0x170] sm:$0xff] %v556
      %604 = vst [vmem:[#allocation2 + $0x1b8] sm:$0xff] %v559
      %605 = vst [vmem:[#allocation2 + $0x200] sm:$0xff] %v561
      %606 = vst [vmem:[#allocation2 + $0x248] sm:$0xff] %v564
      %607 = vst [vmem:[#allocation2 + $0x290] sm:$0xff] %v566
      %608 = vst [vmem:[#allocation2 + $0x2d8] sm:$0xff] %v569
      %609 = vst [vmem:[#allocation2 + $0x320] sm:$0xff] %v571
      %610 = vst [vmem:[#allocation2 + $0x368] sm:$0xff] %v574
      %611 = vst [vmem:[#allocation2 + $0x3b0] sm:$0xff] %v576
      %612 = vst [vmem:[#allocation2 + $0x3f8] sm:$0xff] %v579
      %613 = vst [vmem:[#allocation2 + $0x440] sm:$0xff] %v581
      %vm614 = vcmask 1045504
      %v615 = vrot.slane %v494, 2
      %v616 = vrot.slane %v495, 2
      %v617 = vsel %vm614, %v615, %v616
      %v618 = vrot.slane %v496, 2
      %v619 = vsel %vm614, %v616, %v618
      %v620 = vrot.slane %v462, 2
      %v621 = vrot.slane %v463, 2
      %v622 = vsel %vm614, %v620, %v621
      %v623 = vrot.slane %v464, 2
      %v624 = vsel %vm614, %v621, %v623
      %v625 = vrot.slane %v465, 2
      %v626 = vrot.slane %v466, 2
      %v627 = vsel %vm614, %v625, %v626
      %v628 = vrot.slane %v467, 2
      %v629 = vsel %vm614, %v626, %v628
      %v630 = vrot.slane %v468, 2
      %v631 = vrot.slane %v469, 2
      %v632 = vsel %vm614, %v630, %v631
      %v633 = vrot.slane %v470, 2
      %v634 = vsel %vm614, %v631, %v633
      %v635 = vrot.slane %v471, 2
      %v636 = vrot.slane %v472, 2
      %v637 = vsel %vm614, %v635, %v636
      %v638 = vrot.slane %v473, 2
      %v639 = vsel %vm614, %v636, %v638
      %v640 = vrot.slane %v474, 2
      %v641 = vrot.slane %v475, 2
      %v642 = vsel %vm614, %v640, %v641
      %v643 = vrot.slane %v476, 2
      %v644 = vsel %vm614, %v641, %v643
      %v645 = vrot.slane %v477, 2
      %v646 = vrot.slane %v478, 2
      %v647 = vsel %vm614, %v645, %v646
      %v648 = vrot.slane %v479, 2
      %v649 = vsel %vm614, %v646, %v648
      %v650 = vrot.slane %v480, 2
      %v651 = vrot.slane %v481, 2
      %v652 = vsel %vm614, %v650, %v651
      %v653 = vrot.slane %v482, 2
      %v654 = vsel %vm614, %v651, %v653
      %671 = vst [vmem:[#allocation2 + $0x10] sm:$0xff] %v617
      %672 = vst [vmem:[#allocation2 + $0x58] sm:$0xff] %v619
      %673 = vst [vmem:[#allocation2 + $0xa0] sm:$0xff] %v622
      %674 = vst [vmem:[#allocation2 + $0xe8] sm:$0xff] %v624
      %675 = vst [vmem:[#allocation2 + $0x130] sm:$0xff] %v627
      %676 = vst [vmem:[#allocation2 + $0x178] sm:$0xff] %v629
      %677 = vst [vmem:[#allocation2 + $0x1c0] sm:$0xff] %v632
      %678 = vst [vmem:[#allocation2 + $0x208] sm:$0xff] %v634
      %679 = vst [vmem:[#allocation2 + $0x250] sm:$0xff] %v637
      %680 = vst [vmem:[#allocation2 + $0x298] sm:$0xff] %v639
      %681 = vst [vmem:[#allocation2 + $0x2e0] sm:$0xff] %v642
      %682 = vst [vmem:[#allocation2 + $0x328] sm:$0xff] %v644
      %683 = vst [vmem:[#allocation2 + $0x370] sm:$0xff] %v647
      %684 = vst [vmem:[#allocation2 + $0x3b8] sm:$0xff] %v649
      %685 = vst [vmem:[#allocation2 + $0x400] sm:$0xff] %v652
      %686 = vst [vmem:[#allocation2 + $0x448] sm:$0xff] %v654
      %687 = vst [vmem:[#allocation2 + $0x18] sm:$0xff] %v462
      %688 = vst [vmem:[#allocation2 + $0x60] sm:$0xff] %v463
      %689 = vst [vmem:[#allocation2 + $0xa8] sm:$0xff] %v465
      %690 = vst [vmem:[#allocation2 + $0xf0] sm:$0xff] %v466
      %691 = vst [vmem:[#allocation2 + $0x138] sm:$0xff] %v468
      %692 = vst [vmem:[#allocation2 + $0x180] sm:$0xff] %v469
      %693 = vst [vmem:[#allocation2 + $0x1c8] sm:$0xff] %v471
      %694 = vst [vmem:[#allocation2 + $0x210] sm:$0xff] %v472
      %695 = vst [vmem:[#allocation2 + $0x258] sm:$0xff] %v474
      %696 = vst [vmem:[#allocation2 + $0x2a0] sm:$0xff] %v475
      %697 = vst [vmem:[#allocation2 + $0x2e8] sm:$0xff] %v477
      %698 = vst [vmem:[#allocation2 + $0x330] sm:$0xff] %v478
      %699 = vst [vmem:[#allocation2 + $0x378] sm:$0xff] %v480
      %700 = vst [vmem:[#allocation2 + $0x3c0] sm:$0xff] %v481
      %701 = vst [vmem:[#allocation2 + $0x408] sm:$0xff] %v483
      %702 = vst [vmem:[#allocation2 + $0x450] sm:$0xff] %v484
      %v706 = vrot.slane %v483, 1
      %v707 = vrot.slane %v484, 1
      %v708 = vsel %vm541, %v706, %v707
      %v709 = vrot.slane %v485, 1
      %v710 = vsel %vm541, %v707, %v709
      %713 = vst [vmem:[#allocation2 + $0x20] sm:$0xff] %v549
      %714 = vst [vmem:[#allocation2 + $0x68] sm:$0xff] %v551
      %715 = vst [vmem:[#allocation2 + $0xb0] sm:$0xff] %v554
      %716 = vst [vmem:[#allocation2 + $0xf8] sm:$0xff] %v556
      %717 = vst [vmem:[#allocation2 + $0x140] sm:$0xff] %v559
      %718 = vst [vmem:[#allocation2 + $0x188] sm:$0xff] %v561
      %719 = vst [vmem:[#allocation2 + $0x1d0] sm:$0xff] %v564
      %720 = vst [vmem:[#allocation2 + $0x218] sm:$0xff] %v566
      %721 = vst [vmem:[#allocation2 + $0x260] sm:$0xff] %v569
      %722 = vst [vmem:[#allocation2 + $0x2a8] sm:$0xff] %v571
      %723 = vst [vmem:[#allocation2 + $0x2f0] sm:$0xff] %v574
      %724 = vst [vmem:[#allocation2 + $0x338] sm:$0xff] %v576
      %725 = vst [vmem:[#allocation2 + $0x380] sm:$0xff] %v579
      %726 = vst [vmem:[#allocation2 + $0x3c8] sm:$0xff] %v581
      %727 = vst [vmem:[#allocation2 + $0x410] sm:$0xff] %v708
      %728 = vst [vmem:[#allocation2 + $0x458] sm:$0xff] %v710
      %v729 = vrot.slane %v483, 2
      %v730 = vrot.slane %v484, 2
      %v731 = vsel %vm614, %v729, %v730
      %v732 = vrot.slane %v485, 2
      %v733 = vsel %vm614, %v730, %v732
      %736 = vst [vmem:[#allocation2 + $0x28] sm:$0xff] %v622
      %737 = vst [vmem:[#allocation2 + $0x70] sm:$0xff] %v624
      %738 = vst [vmem:[#allocation2 + $0xb8] sm:$0xff] %v627
      %739 = vst [vmem:[#allocation2 + $0x100] sm:$0xff] %v629
      %740 = vst [vmem:[#allocation2 + $0x148] sm:$0xff] %v632
      %741 = vst [vmem:[#allocation2 + $0x190] sm:$0xff] %v634
      %742 = vst [vmem:[#allocation2 + $0x1d8] sm:$0xff] %v637
      %743 = vst [vmem:[#allocation2 + $0x220] sm:$0xff] %v639
      %744 = vst [vmem:[#allocation2 + $0x268] sm:$0xff] %v642
      %745 = vst [vmem:[#allocation2 + $0x2b0] sm:$0xff] %v644
      %746 = vst [vmem:[#allocation2 + $0x2f8] sm:$0xff] %v647
      %747 = vst [vmem:[#allocation2 + $0x340] sm:$0xff] %v649
      %748 = vst [vmem:[#allocation2 + $0x388] sm:$0xff] %v652
      %749 = vst [vmem:[#allocation2 + $0x3d0] sm:$0xff] %v654
      %750 = vst [vmem:[#allocation2 + $0x418] sm:$0xff] %v731
      %751 = vst [vmem:[#allocation2 + $0x460] sm:$0xff] %v733
      %752 = vst [vmem:[#allocation2 + $0x30] sm:$0xff] %v465
      %753 = vst [vmem:[#allocation2 + $0x78] sm:$0xff] %v466
      %754 = vst [vmem:[#allocation2 + $0xc0] sm:$0xff] %v468
      %755 = vst [vmem:[#allocation2 + $0x108] sm:$0xff] %v469
      %756 = vst [vmem:[#allocation2 + $0x150] sm:$0xff] %v471
      %757 = vst [vmem:[#allocation2 + $0x198] sm:$0xff] %v472
      %758 = vst [vmem:[#allocation2 + $0x1e0] sm:$0xff] %v474
      %759 = vst [vmem:[#allocation2 + $0x228] sm:$0xff] %v475
      %760 = vst [vmem:[#allocation2 + $0x270] sm:$0xff] %v477
      %761 = vst [vmem:[#allocation2 + $0x2b8] sm:$0xff] %v478
      %762 = vst [vmem:[#allocation2 + $0x300] sm:$0xff] %v480
      %763 = vst [vmem:[#allocation2 + $0x348] sm:$0xff] %v481
      %764 = vst [vmem:[#allocation2 + $0x390] sm:$0xff] %v483
      %765 = vst [vmem:[#allocation2 + $0x3d8] sm:$0xff] %v484
      %766 = vst [vmem:[#allocation2 + $0x420] sm:$0xff] %v498
      %767 = vst [vmem:[#allocation2 + $0x468] sm:$0xff] %v499
      %v771 = vrot.slane %v498, 1
      %v772 = vrot.slane %v499, 1
      %v773 = vsel %vm541, %v771, %v772
      %v774 = vrot.slane %v500, 1
      %v775 = vsel %vm541, %v772, %v774
      %778 = vst [vmem:[#allocation2 + $0x38] sm:$0xff] %v554
      %779 = vst [vmem:[#allocation2 + $0x80] sm:$0xff] %v556
      %780 = vst [vmem:[#allocation2 + $0xc8] sm:$0xff] %v559
      %781 = vst [vmem:[#allocation2 + $0x110] sm:$0xff] %v561
      %782 = vst [vmem:[#allocation2 + $0x158] sm:$0xff] %v564
      %783 = vst [vmem:[#allocation2 + $0x1a0] sm:$0xff] %v566
      %784 = vst [vmem:[#allocation2 + $0x1e8] sm:$0xff] %v569
      %785 = vst [vmem:[#allocation2 + $0x230] sm:$0xff] %v571
      %786 = vst [vmem:[#allocation2 + $0x278] sm:$0xff] %v574
      %787 = vst [vmem:[#allocation2 + $0x2c0] sm:$0xff] %v576
      %788 = vst [vmem:[#allocation2 + $0x308] sm:$0xff] %v579
      %789 = vst [vmem:[#allocation2 + $0x350] sm:$0xff] %v581
      %790 = vst [vmem:[#allocation2 + $0x398] sm:$0xff] %v708
      %791 = vst [vmem:[#allocation2 + $0x3e0] sm:$0xff] %v710
      %792 = vst [vmem:[#allocation2 + $0x428] sm:$0xff] %v773
      %793 = vst [vmem:[#allocation2 + $0x470] sm:$0xff] %v775
      %v794 = vrot.slane %v498, 2
      %v795 = vrot.slane %v499, 2
      %v796 = vsel %vm614, %v794, %v795
      %v797 = vrot.slane %v500, 2
      %v798 = vsel %vm614, %v795, %v797
      %801 = vst [vmem:[#allocation2 + $0x40] sm:$0xff] %v627
      %802 = vst [vmem:[#allocation2 + $0x88] sm:$0xff] %v629
      %803 = vst [vmem:[#allocation2 + $0xd0] sm:$0xff] %v632
      %804 = vst [vmem:[#allocation2 + $0x118] sm:$0xff] %v634
      %805 = vst [vmem:[#allocation2 + $0x160] sm:$0xff] %v637
      %806 = vst [vmem:[#allocation2 + $0x1a8] sm:$0xff] %v639
      %807 = vst [vmem:[#allocation2 + $0x1f0] sm:$0xff] %v642
      %808 = vst [vmem:[#allocation2 + $0x238] sm:$0xff] %v644
      %809 = vst [vmem:[#allocation2 + $0x280] sm:$0xff] %v647
      %810 = vst [vmem:[#allocation2 + $0x2c8] sm:$0xff] %v649
      %811 = vst [vmem:[#allocation2 + $0x310] sm:$0xff] %v652
      %812 = vst [vmem:[#allocation2 + $0x358] sm:$0xff] %v654
      %813 = vst [vmem:[#allocation2 + $0x3a0] sm:$0xff] %v731
      %814 = vst [vmem:[#allocation2 + $0x3e8] sm:$0xff] %v733
      %815 = vst [vmem:[#allocation2 + $0x430] sm:$0xff] %v796
      %816 = vst [vmem:[#allocation2 + $0x478] sm:$0xff] %v798
      %v817 = vld [vmem:[#allocation2] sm:$0xff]
      %v818 = vld [vmem:[#allocation2 + $0x8] sm:$0xff]
      %v819 = vld [vmem:[#allocation2 + $0x10] sm:$0xff]
      %v820 = vld [vmem:[#allocation2 + $0x18] sm:$0xff]
      %v821 = vld [vmem:[#allocation2 + $0x20] sm:$0xff]
      %v822 = vld [vmem:[#allocation2 + $0x28] sm:$0xff]
      %v823 = vld [vmem:[#allocation2 + $0x30] sm:$0xff]
      %v824 = vld [vmem:[#allocation2 + $0x38] sm:$0xff]
      %v825 = vld [vmem:[#allocation2 + $0x40] sm:$0xff]
      %v826 = vld [vmem:[#allocation2 + $0x48] sm:$0xff]
      %v827 = vld [vmem:[#allocation2 + $0x50] sm:$0xff]
      %v828 = vld [vmem:[#allocation2 + $0x58] sm:$0xff]
      %v829 = vld [vmem:[#allocation2 + $0x60] sm:$0xff]
      %v830 = vld [vmem:[#allocation2 + $0x68] sm:$0xff]
      %v831 = vld [vmem:[#allocation2 + $0x70] sm:$0xff]
      %v832 = vld [vmem:[#allocation2 + $0x78] sm:$0xff]
      %v833 = vld [vmem:[#allocation2 + $0x80] sm:$0xff]
      %v834 = vld [vmem:[#allocation2 + $0x88] sm:$0xff]
      %v835 = vld [vmem:[#allocation2 + $0x90] sm:$0xff]
      %v836 = vld [vmem:[#allocation2 + $0x98] sm:$0xff]
      %v837 = vld [vmem:[#allocation2 + $0xa0] sm:$0xff]
      %v838 = vld [vmem:[#allocation2 + $0xa8] sm:$0xff]
      %v839 = vld [vmem:[#allocation2 + $0xb0] sm:$0xff]
      %v840 = vld [vmem:[#allocation2 + $0xb8] sm:$0xff]
      %v841 = vld [vmem:[#allocation2 + $0xc0] sm:$0xff]
      %v842 = vld [vmem:[#allocation2 + $0xc8] sm:$0xff]
      %v843 = vld [vmem:[#allocation2 + $0xd0] sm:$0xff]
      %v844 = vld [vmem:[#allocation2 + $0xd8] sm:$0xff]
      %v845 = vld [vmem:[#allocation2 + $0xe0] sm:$0xff]
      %v846 = vld [vmem:[#allocation2 + $0xe8] sm:$0xff]
      %v847 = vld [vmem:[#allocation2 + $0xf0] sm:$0xff]
      %v848 = vld [vmem:[#allocation2 + $0xf8] sm:$0xff]
      %v849 = vld [vmem:[#allocation2 + $0x100] sm:$0xff]
      %v850 = vld [vmem:[#allocation2 + $0x108] sm:$0xff]
      %v851 = vld [vmem:[#allocation2 + $0x110] sm:$0xff]
      %v852 = vld [vmem:[#allocation2 + $0x118] sm:$0xff]
      %v853 = vld [vmem:[#allocation2 + $0x120] sm:$0xff]
      %v854 = vld [vmem:[#allocation2 + $0x128] sm:$0xff]
      %v855 = vld [vmem:[#allocation2 + $0x130] sm:$0xff]
      %v856 = vld [vmem:[#allocation2 + $0x138] sm:$0xff]
      %v857 = vld [vmem:[#allocation2 + $0x140] sm:$0xff]
      %v858 = vld [vmem:[#allocation2 + $0x148] sm:$0xff]
      %v859 = vld [vmem:[#allocation2 + $0x150] sm:$0xff]
      %v860 = vld [vmem:[#allocation2 + $0x158] sm:$0xff]
      %v861 = vld [vmem:[#allocation2 + $0x160] sm:$0xff]
      %v862 = vld [vmem:[#allocation2 + $0x168] sm:$0xff]
      %v863 = vld [vmem:[#allocation2 + $0x170] sm:$0xff]
      %v864 = vld [vmem:[#allocation2 + $0x178] sm:$0xff]
      %v865 = vld [vmem:[#allocation2 + $0x180] sm:$0xff]
      %v866 = vld [vmem:[#allocation2 + $0x188] sm:$0xff]
      %v867 = vld [vmem:[#allocation2 + $0x190] sm:$0xff]
      %v868 = vld [vmem:[#allocation2 + $0x198] sm:$0xff]
      %v869 = vld [vmem:[#allocation2 + $0x1a0] sm:$0xff]
      %v870 = vld [vmem:[#allocation2 + $0x1a8] sm:$0xff]
      %v871 = vld [vmem:[#allocation2 + $0x1b0] sm:$0xff]
      %v872 = vld [vmem:[#allocation2 + $0x1b8] sm:$0xff]
      %v873 = vld [vmem:[#allocation2 + $0x1c0] sm:$0xff]
      %v874 = vld [vmem:[#allocation2 + $0x1c8] sm:$0xff]
      %v875 = vld [vmem:[#allocation2 + $0x1d0] sm:$0xff]
      %v876 = vld [vmem:[#allocation2 + $0x1d8] sm:$0xff]
      %v877 = vld [vmem:[#allocation2 + $0x1e0] sm:$0xff]
      %v878 = vld [vmem:[#allocation2 + $0x1e8] sm:$0xff]
      %v879 = vld [vmem:[#allocation2 + $0x1f0] sm:$0xff]
      %v880 = vld [vmem:[#allocation2 + $0x1f8] sm:$0xff]
      %v881 = vld [vmem:[#allocation2 + $0x200] sm:$0xff]
      %v882 = vld [vmem:[#allocation2 + $0x208] sm:$0xff]
      %v883 = vld [vmem:[#allocation2 + $0x210] sm:$0xff]
      %v884 = vld [vmem:[#allocation2 + $0x218] sm:$0xff]
      %v885 = vld [vmem:[#allocation2 + $0x220] sm:$0xff]
      %v886 = vld [vmem:[#allocation2 + $0x228] sm:$0xff]
      %v887 = vld [vmem:[#allocation2 + $0x230] sm:$0xff]
      %v888 = vld [vmem:[#allocation2 + $0x238] sm:$0xff]
      %v889 = vld [vmem:[#allocation2 + $0x240] sm:$0xff]
      %v890 = vld [vmem:[#allocation2 + $0x248] sm:$0xff]
      %v891 = vld [vmem:[#allocation2 + $0x250] sm:$0xff]
      %v892 = vld [vmem:[#allocation2 + $0x258] sm:$0xff]
      %v893 = vld [vmem:[#allocation2 + $0x260] sm:$0xff]
      %v894 = vld [vmem:[#allocation2 + $0x268] sm:$0xff]
      %v895 = vld [vmem:[#allocation2 + $0x270] sm:$0xff]
      %v896 = vld [vmem:[#allocation2 + $0x278] sm:$0xff]
      %v897 = vld [vmem:[#allocation2 + $0x280] sm:$0xff]
      %v898 = vld [vmem:[#allocation2 + $0x288] sm:$0xff]
      %v899 = vld [vmem:[#allocation2 + $0x290] sm:$0xff]
      %v900 = vld [vmem:[#allocation2 + $0x298] sm:$0xff]
      %v901 = vld [vmem:[#allocation2 + $0x2a0] sm:$0xff]
      %v902 = vld [vmem:[#allocation2 + $0x2a8] sm:$0xff]
      %v903 = vld [vmem:[#allocation2 + $0x2b0] sm:$0xff]
      %v904 = vld [vmem:[#allocation2 + $0x2b8] sm:$0xff]
      %v905 = vld [vmem:[#allocation2 + $0x2c0] sm:$0xff]
      %v906 = vld [vmem:[#allocation2 + $0x2c8] sm:$0xff]
      %v907 = vld [vmem:[#allocation2 + $0x2d0] sm:$0xff]
      %v908 = vld [vmem:[#allocation2 + $0x2d8] sm:$0xff]
      %v909 = vld [vmem:[#allocation2 + $0x2e0] sm:$0xff]
      %v910 = vld [vmem:[#allocation2 + $0x2e8] sm:$0xff]
      %v911 = vld [vmem:[#allocation2 + $0x2f0] sm:$0xff]
      %v912 = vld [vmem:[#allocation2 + $0x2f8] sm:$0xff]
      %v913 = vld [vmem:[#allocation2 + $0x300] sm:$0xff]
      %v914 = vld [vmem:[#allocation2 + $0x308] sm:$0xff]
      %v915 = vld [vmem:[#allocation2 + $0x310] sm:$0xff]
      %v916 = vld [vmem:[#allocation2 + $0x318] sm:$0xff]
      %v917 = vld [vmem:[#allocation2 + $0x320] sm:$0xff]
      %v918 = vld [vmem:[#allocation2 + $0x328] sm:$0xff]
      %v919 = vld [vmem:[#allocation2 + $0x330] sm:$0xff]
      %v920 = vld [vmem:[#allocation2 + $0x338] sm:$0xff]
      %v921 = vld [vmem:[#allocation2 + $0x340] sm:$0xff]
      %v922 = vld [vmem:[#allocation2 + $0x348] sm:$0xff]
      %v923 = vld [vmem:[#allocation2 + $0x350] sm:$0xff]
      %v924 = vld [vmem:[#allocation2 + $0x358] sm:$0xff]
      %v925 = vld [vmem:[#allocation2 + $0x360] sm:$0xff]
      %v926 = vld [vmem:[#allocation2 + $0x368] sm:$0xff]
      %v927 = vld [vmem:[#allocation2 + $0x370] sm:$0xff]
      %v928 = vld [vmem:[#allocation2 + $0x378] sm:$0xff]
      %v929 = vld [vmem:[#allocation2 + $0x380] sm:$0xff]
      %v930 = vld [vmem:[#allocation2 + $0x388] sm:$0xff]
      %v931 = vld [vmem:[#allocation2 + $0x390] sm:$0xff]
      %v932 = vld [vmem:[#allocation2 + $0x398] sm:$0xff]
      %v933 = vld [vmem:[#allocation2 + $0x3a0] sm:$0xff]
      %v934 = vld [vmem:[#allocation2 + $0x3a8] sm:$0xff]
      %v935 = vld [vmem:[#allocation2 + $0x3b0] sm:$0xff]
      %v936 = vld [vmem:[#allocation2 + $0x3b8] sm:$0xff]
      %v937 = vld [vmem:[#allocation2 + $0x3c0] sm:$0xff]
      %v938 = vld [vmem:[#allocation2 + $0x3c8] sm:$0xff]
      %v939 = vld [vmem:[#allocation2 + $0x3d0] sm:$0xff]
      %v940 = vld [vmem:[#allocation2 + $0x3d8] sm:$0xff]
      %v941 = vld [vmem:[#allocation2 + $0x3e0] sm:$0xff]
      %v942 = vld [vmem:[#allocation2 + $0x3e8] sm:$0xff]
      %v943 = vld [vmem:[#allocation2 + $0x3f0] sm:$0xff]
      %v944 = vld [vmem:[#allocation2 + $0x3f8] sm:$0xff]
      %v945 = vld [vmem:[#allocation2 + $0x400] sm:$0xff]
      %v946 = vld [vmem:[#allocation2 + $0x408] sm:$0xff]
      %v947 = vld [vmem:[#allocation2 + $0x410] sm:$0xff]
      %v948 = vld [vmem:[#allocation2 + $0x418] sm:$0xff]
      %v949 = vld [vmem:[#allocation2 + $0x420] sm:$0xff]
      %v950 = vld [vmem:[#allocation2 + $0x428] sm:$0xff]
      %v951 = vld [vmem:[#allocation2 + $0x430] sm:$0xff]
      %v952 = vld [vmem:[#allocation2 + $0x438] sm:$0xff]
      %v953 = vld [vmem:[#allocation2 + $0x440] sm:$0xff]
      %v954 = vld [vmem:[#allocation2 + $0x448] sm:$0xff]
      %v955 = vld [vmem:[#allocation2 + $0x450] sm:$0xff]
      %v956 = vld [vmem:[#allocation2 + $0x458] sm:$0xff]
      %v957 = vld [vmem:[#allocation2 + $0x460] sm:$0xff]
      %v958 = vld [vmem:[#allocation2 + $0x468] sm:$0xff]
      %v959 = vld [vmem:[#allocation2 + $0x470] sm:$0xff]
      %v960 = vld [vmem:[#allocation2 + $0x478] sm:$0xff]
      %v961 = vld [vmem:[%s2] sm:$0xff]
      %v962 = vld [vmem:[%s2 + $0x8] sm:$0xff]
      %v963 = vld [vmem:[%s2 + $0x10] sm:$0xff]
      %v964 = vld [vmem:[%s2 + $0x18] sm:$0xff]
      %v965 = vld [vmem:[%s2 + $0x20] sm:$0xff]
      %v966 = vld [vmem:[%s2 + $0x28] sm:$0xff]
      %v967 = vld [vmem:[%s2 + $0x30] sm:$0xff]
      %v968 = vld [vmem:[%s2 + $0x38] sm:$0xff]
      %v969 = vld [vmem:[%s2 + $0x40] sm:$0xff]
      %v970 = vld [vmem:[%s2 + $0x48] sm:$0xff]
      %v971 = vld [vmem:[%s2 + $0x50] sm:$0xff]
      %v972 = vld [vmem:[%s2 + $0x58] sm:$0xff]
      %v973 = vld [vmem:[%s2 + $0x60] sm:$0xff]
      %v974 = vld [vmem:[%s2 + $0x68] sm:$0xff]
      %v975 = vld [vmem:[%s2 + $0x70] sm:$0xff]
      %v976 = vld [vmem:[%s2 + $0x78] sm:$0xff]
      %v977 = vld [vmem:[%s2 + $0x80] sm:$0xff]
      %v978 = vld [vmem:[%s2 + $0x88] sm:$0xff]
      %v979 = vld [vmem:[%s2 + $0x90] sm:$0xff]
      %v980 = vld [vmem:[%s2 + $0x98] sm:$0xff]
      %v981 = vld [vmem:[%s2 + $0xa0] sm:$0xff]
      %v982 = vld [vmem:[%s2 + $0xa8] sm:$0xff]
      %v983 = vld [vmem:[%s2 + $0xb0] sm:$0xff]
      %v984 = vld [vmem:[%s2 + $0xb8] sm:$0xff]
      %v985 = vld [vmem:[%s2 + $0xc0] sm:$0xff]
      %v986 = vld [vmem:[%s2 + $0xc8] sm:$0xff]
      %v987 = vld [vmem:[%s2 + $0xd0] sm:$0xff]
      %v988 = vld [vmem:[%s2 + $0xd8] sm:$0xff]
      %v989 = vld [vmem:[%s2 + $0xe0] sm:$0xff]
      %v990 = vld [vmem:[%s2 + $0xe8] sm:$0xff]
      %v991 = vld [vmem:[%s2 + $0xf0] sm:$0xff]
      %v992 = vld [vmem:[%s2 + $0xf8] sm:$0xff]
      %v993 = vld [vmem:[%s2 + $0x100] sm:$0xff]
      %v994 = vld [vmem:[%s2 + $0x108] sm:$0xff]
      %v995 = vld [vmem:[%s2 + $0x110] sm:$0xff]
      %v996 = vld [vmem:[%s2 + $0x118] sm:$0xff]
      %v997 = vld [vmem:[%s2 + $0x120] sm:$0xff]
      %v998 = vld [vmem:[%s2 + $0x128] sm:$0xff]
      %v999 = vld [vmem:[%s2 + $0x130] sm:$0xff]
      %v1000 = vld [vmem:[%s2 + $0x138] sm:$0xff]
      %v1001 = vld [vmem:[%s2 + $0x140] sm:$0xff]
      %v1002 = vld [vmem:[%s2 + $0x148] sm:$0xff]
      %v1003 = vld [vmem:[%s2 + $0x150] sm:$0xff]
      %v1004 = vld [vmem:[%s2 + $0x158] sm:$0xff]
      %v1005 = vld [vmem:[%s2 + $0x160] sm:$0xff]
      %v1006 = vld [vmem:[%s2 + $0x168] sm:$0xff]
      %v1007 = vld [vmem:[%s2 + $0x170] sm:$0xff]
      %v1008 = vld [vmem:[%s2 + $0x178] sm:$0xff]
      %v1009 = vld [vmem:[%s2 + $0x180] sm:$0xff]
      %v1010 = vld [vmem:[%s2 + $0x188] sm:$0xff]
      %v1011 = vld [vmem:[%s2 + $0x190] sm:$0xff]
      %v1012 = vld [vmem:[%s2 + $0x198] sm:$0xff]
      %v1013 = vld [vmem:[%s2 + $0x1a0] sm:$0xff]
      %v1014 = vld [vmem:[%s2 + $0x1a8] sm:$0xff]
      %v1015 = vld [vmem:[%s2 + $0x1b0] sm:$0xff]
      %v1016 = vld [vmem:[%s2 + $0x1b8] sm:$0xff]
      %v1017 = vld [vmem:[%s2 + $0x1c0] sm:$0xff]
      %v1018 = vld [vmem:[%s2 + $0x1c8] sm:$0xff]
      %v1019 = vld [vmem:[%s2 + $0x1d0] sm:$0xff]
      %v1020 = vld [vmem:[%s2 + $0x1d8] sm:$0xff]
      %v1021 = vld [vmem:[%s2 + $0x1e0] sm:$0xff]
      %v1022 = vld [vmem:[%s2 + $0x1e8] sm:$0xff]
      %v1023 = vld [vmem:[%s2 + $0x1f0] sm:$0xff]
      %v1024 = vld [vmem:[%s2 + $0x1f8] sm:$0xff]
      %v1025 = vld [vmem:[%s2 + $0x200] sm:$0xff]
      %v1026 = vld [vmem:[%s2 + $0x208] sm:$0xff]
      %v1027 = vld [vmem:[%s2 + $0x210] sm:$0xff]
      %v1028 = vld [vmem:[%s2 + $0x218] sm:$0xff]
      %v1029 = vld [vmem:[%s2 + $0x220] sm:$0xff]
      %v1030 = vld [vmem:[%s2 + $0x228] sm:$0xff]
      %v1031 = vld [vmem:[%s2 + $0x230] sm:$0xff]
      %v1032 = vld [vmem:[%s2 + $0x238] sm:$0xff]
      %v1033 = vld [vmem:[%s2 + $0x240] sm:$0xff]
      %v1034 = vld [vmem:[%s2 + $0x248] sm:$0xff]
      %v1035 = vld [vmem:[%s2 + $0x250] sm:$0xff]
      %v1036 = vld [vmem:[%s2 + $0x258] sm:$0xff]
      %v1037 = vld [vmem:[%s2 + $0x260] sm:$0xff]
      %v1038 = vld [vmem:[%s2 + $0x268] sm:$0xff]
      %v1039 = vld [vmem:[%s2 + $0x270] sm:$0xff]
      %v1040 = vld [vmem:[%s2 + $0x278] sm:$0xff]
      %v1041 = vld [vmem:[%s2 + $0x280] sm:$0xff]
      %v1042 = vld [vmem:[%s2 + $0x288] sm:$0xff]
      %v1043 = vld [vmem:[%s2 + $0x290] sm:$0xff]
      %v1044 = vld [vmem:[%s2 + $0x298] sm:$0xff]
      %v1045 = vld [vmem:[%s2 + $0x2a0] sm:$0xff]
      %v1046 = vld [vmem:[%s2 + $0x2a8] sm:$0xff]
      %v1047 = vld [vmem:[%s2 + $0x2b0] sm:$0xff]
      %v1048 = vld [vmem:[%s2 + $0x2b8] sm:$0xff]
      %v1049 = vld [vmem:[%s2 + $0x2c0] sm:$0xff]
      %v1050 = vld [vmem:[%s2 + $0x2c8] sm:$0xff]
      %v1051 = vld [vmem:[%s2 + $0x2d0] sm:$0xff]
      %v1052 = vld [vmem:[%s2 + $0x2d8] sm:$0xff]
      %v1053 = vld [vmem:[%s2 + $0x2e0] sm:$0xff]
      %v1054 = vld [vmem:[%s2 + $0x2e8] sm:$0xff]
      %v1055 = vld [vmem:[%s2 + $0x2f0] sm:$0xff]
      %v1056 = vld [vmem:[%s2 + $0x2f8] sm:$0xff]
      %v1057 = vld [vmem:[%s2 + $0x300] sm:$0xff]
      %v1058 = vld [vmem:[%s2 + $0x308] sm:$0xff]
      %v1059 = vld [vmem:[%s2 + $0x310] sm:$0xff]
      %v1060 = vld [vmem:[%s2 + $0x318] sm:$0xff]
      %v1061 = vld [vmem:[%s2 + $0x320] sm:$0xff]
      %v1062 = vld [vmem:[%s2 + $0x328] sm:$0xff]
      %v1063 = vld [vmem:[%s2 + $0x330] sm:$0xff]
      %v1064 = vld [vmem:[%s2 + $0x338] sm:$0xff]
      %v1065 = vld [vmem:[%s2 + $0x340] sm:$0xff]
      %v1066 = vld [vmem:[%s2 + $0x348] sm:$0xff]
      %v1067 = vld [vmem:[%s2 + $0x350] sm:$0xff]
      %v1068 = vld [vmem:[%s2 + $0x358] sm:$0xff]
      %v1069 = vld [vmem:[%s2 + $0x360] sm:$0xff]
      %v1070 = vld [vmem:[%s2 + $0x368] sm:$0xff]
      %v1071 = vld [vmem:[%s2 + $0x370] sm:$0xff]
      %v1072 = vld [vmem:[%s2 + $0x378] sm:$0xff]
      %v1073 = vld [vmem:[%s2 + $0x380] sm:$0xff]
      %v1074 = vld [vmem:[%s2 + $0x388] sm:$0xff]
      %v1075 = vld [vmem:[%s2 + $0x390] sm:$0xff]
      %v1076 = vld [vmem:[%s2 + $0x398] sm:$0xff]
      %v1077 = vld [vmem:[%s2 + $0x3a0] sm:$0xff]
      %v1078 = vld [vmem:[%s2 + $0x3a8] sm:$0xff]
      %v1079 = vld [vmem:[%s2 + $0x3b0] sm:$0xff]
      %v1080 = vld [vmem:[%s2 + $0x3b8] sm:$0xff]
      %v1081 = vld [vmem:[%s2 + $0x3c0] sm:$0xff]
      %v1082 = vld [vmem:[%s2 + $0x3c8] sm:$0xff]
      %v1083 = vld [vmem:[%s2 + $0x3d0] sm:$0xff]
      %v1084 = vld [vmem:[%s2 + $0x3d8] sm:$0xff]
      %v1085 = vld [vmem:[%s2 + $0x3e0] sm:$0xff]
      %v1086 = vld [vmem:[%s2 + $0x3e8] sm:$0xff]
      %v1087 = vld [vmem:[%s2 + $0x3f0] sm:$0xff]
      %v1088 = vld [vmem:[%s2 + $0x3f8] sm:$0xff]
      %v1089 = vld [vmem:[%s2 + $0x400] sm:$0xff]
      %v1090 = vld [vmem:[%s2 + $0x408] sm:$0xff]
      %v1091 = vld [vmem:[%s2 + $0x410] sm:$0xff]
      %v1092 = vld [vmem:[%s2 + $0x418] sm:$0xff]
      %v1093 = vld [vmem:[%s2 + $0x420] sm:$0xff]
      %v1094 = vld [vmem:[%s2 + $0x428] sm:$0xff]
      %v1095 = vld [vmem:[%s2 + $0x430] sm:$0xff]
      %v1096 = vld [vmem:[%s2 + $0x438] sm:$0xff]
      %v1097 = vld [vmem:[%s2 + $0x440] sm:$0xff]
      %v1098 = vld [vmem:[%s2 + $0x448] sm:$0xff]
      %v1099 = vld [vmem:[%s2 + $0x450] sm:$0xff]
      %v1100 = vld [vmem:[%s2 + $0x458] sm:$0xff]
      %v1101 = vld [vmem:[%s2 + $0x460] sm:$0xff]
      %v1102 = vld [vmem:[%s2 + $0x468] sm:$0xff]
      %v1103 = vld [vmem:[%s2 + $0x470] sm:$0xff]
      %v1104 = vld [vmem:[%s2 + $0x478] sm:$0xff]
      %1105 = vmatpush.msra.mxu0 %v976
      %1106 = vmatpush.msra.mxu0 %v975
      %1107 = vmatpush.msra.mxu0 %v974
      %1108 = vmatpush.msra.mxu0 %v973
      %1109 = vmatpush.msra.mxu0 %v972
      %1110 = vmatpush.msra.mxu0 %v971
      %1111 = vmatpush.msra.mxu0 %v970
      %1112 = vmatpush.msra.mxu0 %v969
      %1113 = vmatpush.msra.mxu0 %v968
      %1114 = vmatpush.msra.mxu0 %v967
      %1115 = vmatpush.msra.mxu0 %v966
      %1116 = vmatpush.msra.mxu0 %v965
      %1117 = vmatpush.msra.mxu0 %v964
      %1118 = vmatpush.msra.mxu0 %v963
      %1119 = vmatpush.msra.mxu0 %v962
      %1120 = vmatpush.msra.mxu0 %v961
      %1121 = vmatmul.f32.gmra.mxu0 %v817
      %v1122 = vpop.f32.mrf.mxu0
      %v1123 = vadd.f32 0.0, %v1122
      %1124 = vmatmul.f32.gmra.mxu0 %v826
      %v1125 = vpop.f32.mrf.mxu0
      %v1126 = vadd.f32 0.0, %v1125
      %1127 = vmatmul.f32.gmra.mxu0 %v835
      %v1128 = vpop.f32.mrf.mxu0
      %v1129 = vadd.f32 0.0, %v1128
      %1130 = vmatmul.f32.gmra.mxu0 %v844
      %v1131 = vpop.f32.mrf.mxu0
      %v1132 = vadd.f32 0.0, %v1131
      %1133 = vmatmul.f32.gmra.mxu0 %v853
      %v1134 = vpop.f32.mrf.mxu0
      %v1135 = vadd.f32 0.0, %v1134
      %1136 = vmatmul.f32.gmra.mxu0 %v862
      %v1137 = vpop.f32.mrf.mxu0
      %v1138 = vadd.f32 0.0, %v1137
      %1139 = vmatmul.f32.gmra.mxu0 %v871
      %v1140 = vpop.f32.mrf.mxu0
      %v1141 = vadd.f32 0.0, %v1140
      %1142 = vmatmul.f32.gmra.mxu0 %v880
      %v1143 = vpop.f32.mrf.mxu0
      %v1144 = vadd.f32 0.0, %v1143
      %1145 = vmatmul.f32.gmra.mxu0 %v889
      %v1146 = vpop.f32.mrf.mxu0
      %v1147 = vadd.f32 0.0, %v1146
      %1148 = vmatmul.f32.gmra.mxu0 %v898
      %v1149 = vpop.f32.mrf.mxu0
      %v1150 = vadd.f32 0.0, %v1149
      %1151 = vmatmul.f32.gmra.mxu0 %v907
      %v1152 = vpop.f32.mrf.mxu0
      %v1153 = vadd.f32 0.0, %v1152
      %1154 = vmatmul.f32.gmra.mxu0 %v916
      %v1155 = vpop.f32.mrf.mxu0
      %v1156 = vadd.f32 0.0, %v1155
      %1157 = vmatmul.f32.gmra.mxu0 %v925
      %v1158 = vpop.f32.mrf.mxu0
      %v1159 = vadd.f32 0.0, %v1158
      %1160 = vmatmul.f32.gmra.mxu0 %v934
      %v1161 = vpop.f32.mrf.mxu0
      %v1162 = vadd.f32 0.0, %v1161
      %1163 = vmatmul.f32.gmra.mxu0 %v943
      %v1164 = vpop.f32.mrf.mxu0
      %v1165 = vadd.f32 0.0, %v1164
      %1166 = vmatmul.f32.gmra.mxu0 %v952
      %v1167 = vpop.f32.mrf.mxu0
      %v1168 = vadd.f32 0.0, %v1167
      %1169 = vdwg.mxu0
      %1170 = vmatpush.msra.mxu0 %v992
      %1171 = vmatpush.msra.mxu0 %v991
      %1172 = vmatpush.msra.mxu0 %v990
      %1173 = vmatpush.msra.mxu0 %v989
      %1174 = vmatpush.msra.mxu0 %v988
      %1175 = vmatpush.msra.mxu0 %v987
      %1176 = vmatpush.msra.mxu0 %v986
      %1177 = vmatpush.msra.mxu0 %v985
      %1178 = vmatpush.msra.mxu0 %v984
      %1179 = vmatpush.msra.mxu0 %v983
      %1180 = vmatpush.msra.mxu0 %v982
      %1181 = vmatpush.msra.mxu0 %v981
      %1182 = vmatpush.msra.mxu0 %v980
      %1183 = vmatpush.msra.mxu0 %v979
      %1184 = vmatpush.msra.mxu0 %v978
      %1185 = vmatpush.msra.mxu0 %v977
      %1186 = vmatmul.f32.gmra.mxu0 %v818
      %v1187 = vpop.f32.mrf.mxu0
      %v1188 = vadd.f32 %v1123, %v1187
      %1189 = vmatmul.f32.gmra.mxu0 %v827
      %v1190 = vpop.f32.mrf.mxu0
      %v1191 = vadd.f32 %v1126, %v1190
      %1192 = vmatmul.f32.gmra.mxu0 %v836
      %v1193 = vpop.f32.mrf.mxu0
      %v1194 = vadd.f32 %v1129, %v1193
      %1195 = vmatmul.f32.gmra.mxu0 %v845
      %v1196 = vpop.f32.mrf.mxu0
      %v1197 = vadd.f32 %v1132, %v1196
      %1198 = vmatmul.f32.gmra.mxu0 %v854
      %v1199 = vpop.f32.mrf.mxu0
      %v1200 = vadd.f32 %v1135, %v1199
      %1201 = vmatmul.f32.gmra.mxu0 %v863
      %v1202 = vpop.f32.mrf.mxu0
      %v1203 = vadd.f32 %v1138, %v1202
      %1204 = vmatmul.f32.gmra.mxu0 %v872
      %v1205 = vpop.f32.mrf.mxu0
      %v1206 = vadd.f32 %v1141, %v1205
      %1207 = vmatmul.f32.gmra.mxu0 %v881
      %v1208 = vpop.f32.mrf.mxu0
      %v1209 = vadd.f32 %v1144, %v1208
      %1210 = vmatmul.f32.gmra.mxu0 %v890
      %v1211 = vpop.f32.mrf.mxu0
      %v1212 = vadd.f32 %v1147, %v1211
      %1213 = vmatmul.f32.gmra.mxu0 %v899
      %v1214 = vpop.f32.mrf.mxu0
      %v1215 = vadd.f32 %v1150, %v1214
      %1216 = vmatmul.f32.gmra.mxu0 %v908
      %v1217 = vpop.f32.mrf.mxu0
      %v1218 = vadd.f32 %v1153, %v1217
      %1219 = vmatmul.f32.gmra.mxu0 %v917
      %v1220 = vpop.f32.mrf.mxu0
      %v1221 = vadd.f32 %v1156, %v1220
      %1222 = vmatmul.f32.gmra.mxu0 %v926
      %v1223 = vpop.f32.mrf.mxu0
      %v1224 = vadd.f32 %v1159, %v1223
      %1225 = vmatmul.f32.gmra.mxu0 %v935
      %v1226 = vpop.f32.mrf.mxu0
      %v1227 = vadd.f32 %v1162, %v1226
      %1228 = vmatmul.f32.gmra.mxu0 %v944
      %v1229 = vpop.f32.mrf.mxu0
      %v1230 = vadd.f32 %v1165, %v1229
      %1231 = vmatmul.f32.gmra.mxu0 %v953
      %v1232 = vpop.f32.mrf.mxu0
      %v1233 = vadd.f32 %v1168, %v1232
      %1234 = vdwg.mxu0
      %1235 = vmatpush.msra.mxu0 %v1008
      %1236 = vmatpush.msra.mxu0 %v1007
      %1237 = vmatpush.msra.mxu0 %v1006
      %1238 = vmatpush.msra.mxu0 %v1005
      %1239 = vmatpush.msra.mxu0 %v1004
      %1240 = vmatpush.msra.mxu0 %v1003
      %1241 = vmatpush.msra.mxu0 %v1002
      %1242 = vmatpush.msra.mxu0 %v1001
      %1243 = vmatpush.msra.mxu0 %v1000
      %1244 = vmatpush.msra.mxu0 %v999
      %1245 = vmatpush.msra.mxu0 %v998
      %1246 = vmatpush.msra.mxu0 %v997
      %1247 = vmatpush.msra.mxu0 %v996
      %1248 = vmatpush.msra.mxu0 %v995
      %1249 = vmatpush.msra.mxu0 %v994
      %1250 = vmatpush.msra.mxu0 %v993
      %1251 = vmatmul.f32.gmra.mxu0 %v819
      %v1252 = vpop.f32.mrf.mxu0
      %v1253 = vadd.f32 %v1188, %v1252
      %1254 = vmatmul.f32.gmra.mxu0 %v828
      %v1255 = vpop.f32.mrf.mxu0
      %v1256 = vadd.f32 %v1191, %v1255
      %1257 = vmatmul.f32.gmra.mxu0 %v837
      %v1258 = vpop.f32.mrf.mxu0
      %v1259 = vadd.f32 %v1194, %v1258
      %1260 = vmatmul.f32.gmra.mxu0 %v846
      %v1261 = vpop.f32.mrf.mxu0
      %v1262 = vadd.f32 %v1197, %v1261
      %1263 = vmatmul.f32.gmra.mxu0 %v855
      %v1264 = vpop.f32.mrf.mxu0
      %v1265 = vadd.f32 %v1200, %v1264
      %1266 = vmatmul.f32.gmra.mxu0 %v864
      %v1267 = vpop.f32.mrf.mxu0
      %v1268 = vadd.f32 %v1203, %v1267
      %1269 = vmatmul.f32.gmra.mxu0 %v873
      %v1270 = vpop.f32.mrf.mxu0
      %v1271 = vadd.f32 %v1206, %v1270
      %1272 = vmatmul.f32.gmra.mxu0 %v882
      %v1273 = vpop.f32.mrf.mxu0
      %v1274 = vadd.f32 %v1209, %v1273
      %1275 = vmatmul.f32.gmra.mxu0 %v891
      %v1276 = vpop.f32.mrf.mxu0
      %v1277 = vadd.f32 %v1212, %v1276
      %1278 = vmatmul.f32.gmra.mxu0 %v900
      %v1279 = vpop.f32.mrf.mxu0
      %v1280 = vadd.f32 %v1215, %v1279
      %1281 = vmatmul.f32.gmra.mxu0 %v909
      %v1282 = vpop.f32.mrf.mxu0
      %v1283 = vadd.f32 %v1218, %v1282
      %1284 = vmatmul.f32.gmra.mxu0 %v918
      %v1285 = vpop.f32.mrf.mxu0
      %v1286 = vadd.f32 %v1221, %v1285
      %1287 = vmatmul.f32.gmra.mxu0 %v927
      %v1288 = vpop.f32.mrf.mxu0
      %v1289 = vadd.f32 %v1224, %v1288
      %1290 = vmatmul.f32.gmra.mxu0 %v936
      %v1291 = vpop.f32.mrf.mxu0
      %v1292 = vadd.f32 %v1227, %v1291
      %1293 = vmatmul.f32.gmra.mxu0 %v945
      %v1294 = vpop.f32.mrf.mxu0
      %v1295 = vadd.f32 %v1230, %v1294
      %1296 = vmatmul.f32.gmra.mxu0 %v954
      %v1297 = vpop.f32.mrf.mxu0
      %v1298 = vadd.f32 %v1233, %v1297
      %1299 = vdwg.mxu0
      %1300 = vmatpush.msra.mxu0 %v1024
      %1301 = vmatpush.msra.mxu0 %v1023
      %1302 = vmatpush.msra.mxu0 %v1022
      %1303 = vmatpush.msra.mxu0 %v1021
      %1304 = vmatpush.msra.mxu0 %v1020
      %1305 = vmatpush.msra.mxu0 %v1019
      %1306 = vmatpush.msra.mxu0 %v1018
      %1307 = vmatpush.msra.mxu0 %v1017
      %1308 = vmatpush.msra.mxu0 %v1016
      %1309 = vmatpush.msra.mxu0 %v1015
      %1310 = vmatpush.msra.mxu0 %v1014
      %1311 = vmatpush.msra.mxu0 %v1013
      %1312 = vmatpush.msra.mxu0 %v1012
      %1313 = vmatpush.msra.mxu0 %v1011
      %1314 = vmatpush.msra.mxu0 %v1010
      %1315 = vmatpush.msra.mxu0 %v1009
      %1316 = vmatmul.f32.gmra.mxu0 %v820
      %v1317 = vpop.f32.mrf.mxu0
      %v1318 = vadd.f32 %v1253, %v1317
      %1319 = vmatmul.f32.gmra.mxu0 %v829
      %v1320 = vpop.f32.mrf.mxu0
      %v1321 = vadd.f32 %v1256, %v1320
      %1322 = vmatmul.f32.gmra.mxu0 %v838
      %v1323 = vpop.f32.mrf.mxu0
      %v1324 = vadd.f32 %v1259, %v1323
      %1325 = vmatmul.f32.gmra.mxu0 %v847
      %v1326 = vpop.f32.mrf.mxu0
      %v1327 = vadd.f32 %v1262, %v1326
      %1328 = vmatmul.f32.gmra.mxu0 %v856
      %v1329 = vpop.f32.mrf.mxu0
      %v1330 = vadd.f32 %v1265, %v1329
      %1331 = vmatmul.f32.gmra.mxu0 %v865
      %v1332 = vpop.f32.mrf.mxu0
      %v1333 = vadd.f32 %v1268, %v1332
      %1334 = vmatmul.f32.gmra.mxu0 %v874
      %v1335 = vpop.f32.mrf.mxu0
      %v1336 = vadd.f32 %v1271, %v1335
      %1337 = vmatmul.f32.gmra.mxu0 %v883
      %v1338 = vpop.f32.mrf.mxu0
      %v1339 = vadd.f32 %v1274, %v1338
      %1340 = vmatmul.f32.gmra.mxu0 %v892
      %v1341 = vpop.f32.mrf.mxu0
      %v1342 = vadd.f32 %v1277, %v1341
      %1343 = vmatmul.f32.gmra.mxu0 %v901
      %v1344 = vpop.f32.mrf.mxu0
      %v1345 = vadd.f32 %v1280, %v1344
      %1346 = vmatmul.f32.gmra.mxu0 %v910
      %v1347 = vpop.f32.mrf.mxu0
      %v1348 = vadd.f32 %v1283, %v1347
      %1349 = vmatmul.f32.gmra.mxu0 %v919
      %v1350 = vpop.f32.mrf.mxu0
      %v1351 = vadd.f32 %v1286, %v1350
      %1352 = vmatmul.f32.gmra.mxu0 %v928
      %v1353 = vpop.f32.mrf.mxu0
      %v1354 = vadd.f32 %v1289, %v1353
      %1355 = vmatmul.f32.gmra.mxu0 %v937
      %v1356 = vpop.f32.mrf.mxu0
      %v1357 = vadd.f32 %v1292, %v1356
      %1358 = vmatmul.f32.gmra.mxu0 %v946
      %v1359 = vpop.f32.mrf.mxu0
      %v1360 = vadd.f32 %v1295, %v1359
      %1361 = vmatmul.f32.gmra.mxu0 %v955
      %v1362 = vpop.f32.mrf.mxu0
      %v1363 = vadd.f32 %v1298, %v1362
      %1364 = vdwg.mxu0
      %1365 = vmatpush.msra.mxu0 %v1040
      %1366 = vmatpush.msra.mxu0 %v1039
      %1367 = vmatpush.msra.mxu0 %v1038
      %1368 = vmatpush.msra.mxu0 %v1037
      %1369 = vmatpush.msra.mxu0 %v1036
      %1370 = vmatpush.msra.mxu0 %v1035
      %1371 = vmatpush.msra.mxu0 %v1034
      %1372 = vmatpush.msra.mxu0 %v1033
      %1373 = vmatpush.msra.mxu0 %v1032
      %1374 = vmatpush.msra.mxu0 %v1031
      %1375 = vmatpush.msra.mxu0 %v1030
      %1376 = vmatpush.msra.mxu0 %v1029
      %1377 = vmatpush.msra.mxu0 %v1028
      %1378 = vmatpush.msra.mxu0 %v1027
      %1379 = vmatpush.msra.mxu0 %v1026
      %1380 = vmatpush.msra.mxu0 %v1025
      %1381 = vmatmul.f32.gmra.mxu0 %v821
      %v1382 = vpop.f32.mrf.mxu0
      %v1383 = vadd.f32 %v1318, %v1382
      %1384 = vmatmul.f32.gmra.mxu0 %v830
      %v1385 = vpop.f32.mrf.mxu0
      %v1386 = vadd.f32 %v1321, %v1385
      %1387 = vmatmul.f32.gmra.mxu0 %v839
      %v1388 = vpop.f32.mrf.mxu0
      %v1389 = vadd.f32 %v1324, %v1388
      %1390 = vmatmul.f32.gmra.mxu0 %v848
      %v1391 = vpop.f32.mrf.mxu0
      %v1392 = vadd.f32 %v1327, %v1391
      %1393 = vmatmul.f32.gmra.mxu0 %v857
      %v1394 = vpop.f32.mrf.mxu0
      %v1395 = vadd.f32 %v1330, %v1394
      %1396 = vmatmul.f32.gmra.mxu0 %v866
      %v1397 = vpop.f32.mrf.mxu0
      %v1398 = vadd.f32 %v1333, %v1397
      %1399 = vmatmul.f32.gmra.mxu0 %v875
      %v1400 = vpop.f32.mrf.mxu0
      %v1401 = vadd.f32 %v1336, %v1400
      %1402 = vmatmul.f32.gmra.mxu0 %v884
      %v1403 = vpop.f32.mrf.mxu0
      %v1404 = vadd.f32 %v1339, %v1403
      %1405 = vmatmul.f32.gmra.mxu0 %v893
      %v1406 = vpop.f32.mrf.mxu0
      %v1407 = vadd.f32 %v1342, %v1406
      %1408 = vmatmul.f32.gmra.mxu0 %v902
      %v1409 = vpop.f32.mrf.mxu0
      %v1410 = vadd.f32 %v1345, %v1409
      %1411 = vmatmul.f32.gmra.mxu0 %v911
      %v1412 = vpop.f32.mrf.mxu0
      %v1413 = vadd.f32 %v1348, %v1412
      %1414 = vmatmul.f32.gmra.mxu0 %v920
      %v1415 = vpop.f32.mrf.mxu0
      %v1416 = vadd.f32 %v1351, %v1415
      %1417 = vmatmul.f32.gmra.mxu0 %v929
      %v1418 = vpop.f32.mrf.mxu0
      %v1419 = vadd.f32 %v1354, %v1418
      %1420 = vmatmul.f32.gmra.mxu0 %v938
      %v1421 = vpop.f32.mrf.mxu0
      %v1422 = vadd.f32 %v1357, %v1421
      %1423 = vmatmul.f32.gmra.mxu0 %v947
      %v1424 = vpop.f32.mrf.mxu0
      %v1425 = vadd.f32 %v1360, %v1424
      %1426 = vmatmul.f32.gmra.mxu0 %v956
      %v1427 = vpop.f32.mrf.mxu0
      %v1428 = vadd.f32 %v1363, %v1427
      %1429 = vdwg.mxu0
      %1430 = vmatpush.msra.mxu0 %v1056
      %1431 = vmatpush.msra.mxu0 %v1055
      %1432 = vmatpush.msra.mxu0 %v1054
      %1433 = vmatpush.msra.mxu0 %v1053
      %1434 = vmatpush.msra.mxu0 %v1052
      %1435 = vmatpush.msra.mxu0 %v1051
      %1436 = vmatpush.msra.mxu0 %v1050
      %1437 = vmatpush.msra.mxu0 %v1049
      %1438 = vmatpush.msra.mxu0 %v1048
      %1439 = vmatpush.msra.mxu0 %v1047
      %1440 = vmatpush.msra.mxu0 %v1046
      %1441 = vmatpush.msra.mxu0 %v1045
      %1442 = vmatpush.msra.mxu0 %v1044
      %1443 = vmatpush.msra.mxu0 %v1043
      %1444 = vmatpush.msra.mxu0 %v1042
      %1445 = vmatpush.msra.mxu0 %v1041
      %1446 = vmatmul.f32.gmra.mxu0 %v822
      %v1447 = vpop.f32.mrf.mxu0
      %v1448 = vadd.f32 %v1383, %v1447
      %1449 = vmatmul.f32.gmra.mxu0 %v831
      %v1450 = vpop.f32.mrf.mxu0
      %v1451 = vadd.f32 %v1386, %v1450
      %1452 = vmatmul.f32.gmra.mxu0 %v840
      %v1453 = vpop.f32.mrf.mxu0
      %v1454 = vadd.f32 %v1389, %v1453
      %1455 = vmatmul.f32.gmra.mxu0 %v849
      %v1456 = vpop.f32.mrf.mxu0
      %v1457 = vadd.f32 %v1392, %v1456
      %1458 = vmatmul.f32.gmra.mxu0 %v858
      %v1459 = vpop.f32.mrf.mxu0
      %v1460 = vadd.f32 %v1395, %v1459
      %1461 = vmatmul.f32.gmra.mxu0 %v867
      %v1462 = vpop.f32.mrf.mxu0
      %v1463 = vadd.f32 %v1398, %v1462
      %1464 = vmatmul.f32.gmra.mxu0 %v876
      %v1465 = vpop.f32.mrf.mxu0
      %v1466 = vadd.f32 %v1401, %v1465
      %1467 = vmatmul.f32.gmra.mxu0 %v885
      %v1468 = vpop.f32.mrf.mxu0
      %v1469 = vadd.f32 %v1404, %v1468
      %1470 = vmatmul.f32.gmra.mxu0 %v894
      %v1471 = vpop.f32.mrf.mxu0
      %v1472 = vadd.f32 %v1407, %v1471
      %1473 = vmatmul.f32.gmra.mxu0 %v903
      %v1474 = vpop.f32.mrf.mxu0
      %v1475 = vadd.f32 %v1410, %v1474
      %1476 = vmatmul.f32.gmra.mxu0 %v912
      %v1477 = vpop.f32.mrf.mxu0
      %v1478 = vadd.f32 %v1413, %v1477
      %1479 = vmatmul.f32.gmra.mxu0 %v921
      %v1480 = vpop.f32.mrf.mxu0
      %v1481 = vadd.f32 %v1416, %v1480
      %1482 = vmatmul.f32.gmra.mxu0 %v930
      %v1483 = vpop.f32.mrf.mxu0
      %v1484 = vadd.f32 %v1419, %v1483
      %1485 = vmatmul.f32.gmra.mxu0 %v939
      %v1486 = vpop.f32.mrf.mxu0
      %v1487 = vadd.f32 %v1422, %v1486
      %1488 = vmatmul.f32.gmra.mxu0 %v948
      %v1489 = vpop.f32.mrf.mxu0
      %v1490 = vadd.f32 %v1425, %v1489
      %1491 = vmatmul.f32.gmra.mxu0 %v957
      %v1492 = vpop.f32.mrf.mxu0
      %v1493 = vadd.f32 %v1428, %v1492
      %1494 = vdwg.mxu0
      %1495 = vmatpush.msra.mxu0 %v1072
      %1496 = vmatpush.msra.mxu0 %v1071
      %1497 = vmatpush.msra.mxu0 %v1070
      %1498 = vmatpush.msra.mxu0 %v1069
      %1499 = vmatpush.msra.mxu0 %v1068
      %1500 = vmatpush.msra.mxu0 %v1067
      %1501 = vmatpush.msra.mxu0 %v1066
      %1502 = vmatpush.msra.mxu0 %v1065
      %1503 = vmatpush.msra.mxu0 %v1064
      %1504 = vmatpush.msra.mxu0 %v1063
      %1505 = vmatpush.msra.mxu0 %v1062
      %1506 = vmatpush.msra.mxu0 %v1061
      %1507 = vmatpush.msra.mxu0 %v1060
      %1508 = vmatpush.msra.mxu0 %v1059
      %1509 = vmatpush.msra.mxu0 %v1058
      %1510 = vmatpush.msra.mxu0 %v1057
      %1511 = vmatmul.f32.gmra.mxu0 %v823
      %v1512 = vpop.f32.mrf.mxu0
      %v1513 = vadd.f32 %v1448, %v1512
      %1514 = vmatmul.f32.gmra.mxu0 %v832
      %v1515 = vpop.f32.mrf.mxu0
      %v1516 = vadd.f32 %v1451, %v1515
      %1517 = vmatmul.f32.gmra.mxu0 %v841
      %v1518 = vpop.f32.mrf.mxu0
      %v1519 = vadd.f32 %v1454, %v1518
      %1520 = vmatmul.f32.gmra.mxu0 %v850
      %v1521 = vpop.f32.mrf.mxu0
      %v1522 = vadd.f32 %v1457, %v1521
      %1523 = vmatmul.f32.gmra.mxu0 %v859
      %v1524 = vpop.f32.mrf.mxu0
      %v1525 = vadd.f32 %v1460, %v1524
      %1526 = vmatmul.f32.gmra.mxu0 %v868
      %v1527 = vpop.f32.mrf.mxu0
      %v1528 = vadd.f32 %v1463, %v1527
      %1529 = vmatmul.f32.gmra.mxu0 %v877
      %v1530 = vpop.f32.mrf.mxu0
      %v1531 = vadd.f32 %v1466, %v1530
      %1532 = vmatmul.f32.gmra.mxu0 %v886
      %v1533 = vpop.f32.mrf.mxu0
      %v1534 = vadd.f32 %v1469, %v1533
      %1535 = vmatmul.f32.gmra.mxu0 %v895
      %v1536 = vpop.f32.mrf.mxu0
      %v1537 = vadd.f32 %v1472, %v1536
      %1538 = vmatmul.f32.gmra.mxu0 %v904
      %v1539 = vpop.f32.mrf.mxu0
      %v1540 = vadd.f32 %v1475, %v1539
      %1541 = vmatmul.f32.gmra.mxu0 %v913
      %v1542 = vpop.f32.mrf.mxu0
      %v1543 = vadd.f32 %v1478, %v1542
      %1544 = vmatmul.f32.gmra.mxu0 %v922
      %v1545 = vpop.f32.mrf.mxu0
      %v1546 = vadd.f32 %v1481, %v1545
      %1547 = vmatmul.f32.gmra.mxu0 %v931
      %v1548 = vpop.f32.mrf.mxu0
      %v1549 = vadd.f32 %v1484, %v1548
      %1550 = vmatmul.f32.gmra.mxu0 %v940
      %v1551 = vpop.f32.mrf.mxu0
      %v1552 = vadd.f32 %v1487, %v1551
      %1553 = vmatmul.f32.gmra.mxu0 %v949
      %v1554 = vpop.f32.mrf.mxu0
      %v1555 = vadd.f32 %v1490, %v1554
      %1556 = vmatmul.f32.gmra.mxu0 %v958
      %v1557 = vpop.f32.mrf.mxu0
      %v1558 = vadd.f32 %v1493, %v1557
      %1559 = vdwg.mxu0
      %1560 = vmatpush.msra.mxu0 %v1088
      %1561 = vmatpush.msra.mxu0 %v1087
      %1562 = vmatpush.msra.mxu0 %v1086
      %1563 = vmatpush.msra.mxu0 %v1085
      %1564 = vmatpush.msra.mxu0 %v1084
      %1565 = vmatpush.msra.mxu0 %v1083
      %1566 = vmatpush.msra.mxu0 %v1082
      %1567 = vmatpush.msra.mxu0 %v1081
      %1568 = vmatpush.msra.mxu0 %v1080
      %1569 = vmatpush.msra.mxu0 %v1079
      %1570 = vmatpush.msra.mxu0 %v1078
      %1571 = vmatpush.msra.mxu0 %v1077
      %1572 = vmatpush.msra.mxu0 %v1076
      %1573 = vmatpush.msra.mxu0 %v1075
      %1574 = vmatpush.msra.mxu0 %v1074
      %1575 = vmatpush.msra.mxu0 %v1073
      %1576 = vmatmul.f32.gmra.mxu0 %v824
      %v1577 = vpop.f32.mrf.mxu0
      %v1578 = vadd.f32 %v1513, %v1577
      %1579 = vmatmul.f32.gmra.mxu0 %v833
      %v1580 = vpop.f32.mrf.mxu0
      %v1581 = vadd.f32 %v1516, %v1580
      %1582 = vmatmul.f32.gmra.mxu0 %v842
      %v1583 = vpop.f32.mrf.mxu0
      %v1584 = vadd.f32 %v1519, %v1583
      %1585 = vmatmul.f32.gmra.mxu0 %v851
      %v1586 = vpop.f32.mrf.mxu0
      %v1587 = vadd.f32 %v1522, %v1586
      %1588 = vmatmul.f32.gmra.mxu0 %v860
      %v1589 = vpop.f32.mrf.mxu0
      %v1590 = vadd.f32 %v1525, %v1589
      %1591 = vmatmul.f32.gmra.mxu0 %v869
      %v1592 = vpop.f32.mrf.mxu0
      %v1593 = vadd.f32 %v1528, %v1592
      %1594 = vmatmul.f32.gmra.mxu0 %v878
      %v1595 = vpop.f32.mrf.mxu0
      %v1596 = vadd.f32 %v1531, %v1595
      %1597 = vmatmul.f32.gmra.mxu0 %v887
      %v1598 = vpop.f32.mrf.mxu0
      %v1599 = vadd.f32 %v1534, %v1598
      %1600 = vmatmul.f32.gmra.mxu0 %v896
      %v1601 = vpop.f32.mrf.mxu0
      %v1602 = vadd.f32 %v1537, %v1601
      %1603 = vmatmul.f32.gmra.mxu0 %v905
      %v1604 = vpop.f32.mrf.mxu0
      %v1605 = vadd.f32 %v1540, %v1604
      %1606 = vmatmul.f32.gmra.mxu0 %v914
      %v1607 = vpop.f32.mrf.mxu0
      %v1608 = vadd.f32 %v1543, %v1607
      %1609 = vmatmul.f32.gmra.mxu0 %v923
      %v1610 = vpop.f32.mrf.mxu0
      %v1611 = vadd.f32 %v1546, %v1610
      %1612 = vmatmul.f32.gmra.mxu0 %v932
      %v1613 = vpop.f32.mrf.mxu0
      %v1614 = vadd.f32 %v1549, %v1613
      %1615 = vmatmul.f32.gmra.mxu0 %v941
      %v1616 = vpop.f32.mrf.mxu0
      %v1617 = vadd.f32 %v1552, %v1616
      %1618 = vmatmul.f32.gmra.mxu0 %v950
      %v1619 = vpop.f32.mrf.mxu0
      %v1620 = vadd.f32 %v1555, %v1619
      %1621 = vmatmul.f32.gmra.mxu0 %v959
      %v1622 = vpop.f32.mrf.mxu0
      %v1623 = vadd.f32 %v1558, %v1622
      %1624 = vdwg.mxu0
      %1625 = vmatpush.msra.mxu0 %v1104
      %1626 = vmatpush.msra.mxu0 %v1103
      %1627 = vmatpush.msra.mxu0 %v1102
      %1628 = vmatpush.msra.mxu0 %v1101
      %1629 = vmatpush.msra.mxu0 %v1100
      %1630 = vmatpush.msra.mxu0 %v1099
      %1631 = vmatpush.msra.mxu0 %v1098
      %1632 = vmatpush.msra.mxu0 %v1097
      %1633 = vmatpush.msra.mxu0 %v1096
      %1634 = vmatpush.msra.mxu0 %v1095
      %1635 = vmatpush.msra.mxu0 %v1094
      %1636 = vmatpush.msra.mxu0 %v1093
      %1637 = vmatpush.msra.mxu0 %v1092
      %1638 = vmatpush.msra.mxu0 %v1091
      %1639 = vmatpush.msra.mxu0 %v1090
      %1640 = vmatpush.msra.mxu0 %v1089
      %1641 = vmatmul.f32.gmra.mxu0 %v825
      %v1642 = vpop.f32.mrf.mxu0
      %v1643 = vadd.f32 %v1578, %v1642
      %1644 = vmatmul.f32.gmra.mxu0 %v834
      %v1645 = vpop.f32.mrf.mxu0
      %v1646 = vadd.f32 %v1581, %v1645
      %1647 = vmatmul.f32.gmra.mxu0 %v843
      %v1648 = vpop.f32.mrf.mxu0
      %v1649 = vadd.f32 %v1584, %v1648
      %1650 = vmatmul.f32.gmra.mxu0 %v852
      %v1651 = vpop.f32.mrf.mxu0
      %v1652 = vadd.f32 %v1587, %v1651
      %1653 = vmatmul.f32.gmra.mxu0 %v861
      %v1654 = vpop.f32.mrf.mxu0
      %v1655 = vadd.f32 %v1590, %v1654
      %1656 = vmatmul.f32.gmra.mxu0 %v870
      %v1657 = vpop.f32.mrf.mxu0
      %v1658 = vadd.f32 %v1593, %v1657
      %1659 = vmatmul.f32.gmra.mxu0 %v879
      %v1660 = vpop.f32.mrf.mxu0
      %v1661 = vadd.f32 %v1596, %v1660
      %1662 = vmatmul.f32.gmra.mxu0 %v888
      %v1663 = vpop.f32.mrf.mxu0
      %v1664 = vadd.f32 %v1599, %v1663
      %1665 = vmatmul.f32.gmra.mxu0 %v897
      %v1666 = vpop.f32.mrf.mxu0
      %v1667 = vadd.f32 %v1602, %v1666
      %1668 = vmatmul.f32.gmra.mxu0 %v906
      %v1669 = vpop.f32.mrf.mxu0
      %v1670 = vadd.f32 %v1605, %v1669
      %1671 = vmatmul.f32.gmra.mxu0 %v915
      %v1672 = vpop.f32.mrf.mxu0
      %v1673 = vadd.f32 %v1608, %v1672
      %1674 = vmatmul.f32.gmra.mxu0 %v924
      %v1675 = vpop.f32.mrf.mxu0
      %v1676 = vadd.f32 %v1611, %v1675
      %1677 = vmatmul.f32.gmra.mxu0 %v933
      %v1678 = vpop.f32.mrf.mxu0
      %v1679 = vadd.f32 %v1614, %v1678
      %1680 = vmatmul.f32.gmra.mxu0 %v942
      %v1681 = vpop.f32.mrf.mxu0
      %v1682 = vadd.f32 %v1617, %v1681
      %1683 = vmatmul.f32.gmra.mxu0 %v951
      %v1684 = vpop.f32.mrf.mxu0
      %v1685 = vadd.f32 %v1620, %v1684
      %1686 = vmatmul.f32.gmra.mxu0 %v960
      %v1687 = vpop.f32.mrf.mxu0
      %v1688 = vadd.f32 %v1623, %v1687
      %1689 = vdwg.mxu0
      %v1690 = vadd.f32 %v1643, %v1646
      %v1691 = vadd.f32 %v1690, %v1649
      %v1692 = vadd.f32 %v1691, %v1652
      %v1693 = vadd.f32 %v1692, %v1655
      %v1694 = vadd.f32 %v1693, %v1658
      %v1695 = vadd.f32 %v1694, %v1661
      %v1696 = vadd.f32 %v1695, %v1664
      %v1697 = vadd.f32 %v1696, %v1667
      %v1698 = vadd.f32 %v1697, %v1670
      %v1699 = vadd.f32 %v1698, %v1673
      %v1700 = vadd.f32 %v1699, %v1676
      %v1701 = vadd.f32 %v1700, %v1679
      %v1702 = vadd.f32 %v1701, %v1682
      %v1703 = vadd.f32 %v1702, %v1685
      %v1704 = vadd.f32 %v1703, %v1688
      %v1705 = vrot.slane %v1704, 4
      %v1706 = vadd.f32 %v1704, %v1705
      %v1707 = vrot.slane %v1706, 2
      %v1708 = vadd.f32 %v1706, %v1707
      %v1709 = vrot.slane %v1708, 1
      %v1710 = vadd.f32 %v1708, %v1709
      %v1711 = vmul.f32 %v1643, %v1643
      %v1712 = vmul.f32 %v1646, %v1646
      %v1713 = vmul.f32 %v1649, %v1649
      %v1714 = vmul.f32 %v1652, %v1652
      %v1715 = vmul.f32 %v1655, %v1655
      %v1716 = vmul.f32 %v1658, %v1658
      %v1717 = vmul.f32 %v1661, %v1661
      %v1718 = vmul.f32 %v1664, %v1664
      %v1719 = vmul.f32 %v1667, %v1667
      %v1720 = vmul.f32 %v1670, %v1670
      %v1721 = vmul.f32 %v1673, %v1673
      %v1722 = vmul.f32 %v1676, %v1676
      %v1723 = vmul.f32 %v1679, %v1679
      %v1724 = vmul.f32 %v1682, %v1682
      %v1725 = vmul.f32 %v1685, %v1685
      %v1726 = vmul.f32 %v1688, %v1688
      %v1727 = vadd.f32 %v1711, %v1712
      %v1728 = vadd.f32 %v1727, %v1713
      %v1729 = vadd.f32 %v1728, %v1714
      %v1730 = vadd.f32 %v1729, %v1715
      %v1731 = vadd.f32 %v1730, %v1716
      %v1732 = vadd.f32 %v1731, %v1717
      %v1733 = vadd.f32 %v1732, %v1718
      %v1734 = vadd.f32 %v1733, %v1719
      %v1735 = vadd.f32 %v1734, %v1720
      %v1736 = vadd.f32 %v1735, %v1721
      %v1737 = vadd.f32 %v1736, %v1722
      %v1738 = vadd.f32 %v1737, %v1723
      %v1739 = vadd.f32 %v1738, %v1724
      %v1740 = vadd.f32 %v1739, %v1725
      %v1741 = vadd.f32 %v1740, %v1726
      %v1742 = vrot.slane %v1741, 4
      %v1743 = vadd.f32 %v1741, %v1742
      %v1744 = vrot.slane %v1743, 2
      %v1745 = vadd.f32 %v1743, %v1744
      %v1746 = vrot.slane %v1745, 1
      %v1747 = vadd.f32 %v1745, %v1746
      %vm1748 = vcmask 1040384
      %v1749 = vsel %vm1748, %v1710, %v1747
      %1750 = vst [vmem:[%s362] sm:$0x3] %v1749
      %1751 = vst [vmem:[%s353] sm:$0xff] %v1643
      %1752 = vst [vmem:[%s353 + $0x8] sm:$0xff] %v1646
      %1753 = vst [vmem:[%s353 + $0x10] sm:$0xff] %v1649
      %1754 = vst [vmem:[%s353 + $0x18] sm:$0xff] %v1652
      %1755 = vst [vmem:[%s353 + $0x20] sm:$0xff] %v1655
      %1756 = vst [vmem:[%s353 + $0x28] sm:$0xff] %v1658
      %1757 = vst [vmem:[%s353 + $0x30] sm:$0xff] %v1661
      %1758 = vst [vmem:[%s353 + $0x38] sm:$0xff] %v1664
      %1759 = vst [vmem:[%s353 + $0x40] sm:$0xff] %v1667
      %1760 = vst [vmem:[%s353 + $0x48] sm:$0xff] %v1670
      %1761 = vst [vmem:[%s353 + $0x50] sm:$0xff] %v1673
      %1762 = vst [vmem:[%s353 + $0x58] sm:$0xff] %v1676
      %1763 = vst [vmem:[%s353 + $0x60] sm:$0xff] %v1679
      %1764 = vst [vmem:[%s353 + $0x68] sm:$0xff] %v1682
      %1765 = vst [vmem:[%s353 + $0x70] sm:$0xff] %v1685
      %1766 = vst [vmem:[%s353 + $0x78] sm:$0xff] %v1688
      %s1767 = smul.u32 8, %s23
      %p1768 = scmp.lt.s32.totalorder %s22, 1
      %s1769 = scalar_select %p1768, %s22, 1
      %p1770 = scmp.lt.s32.totalorder %s1767, 15
      %s1771 = scalar_select %p1770, %s1767, 15
      %s1772 = smul.addr %s1771, 2
      %s1773 = smul.addr %s1769, 32
      %s1774 = sadd.s32 %s1772, %s1773
      %s1775 = smul.addr %s1774, 8
      %s1776 = scalar_lea.vmem %s5, %s1775
      %p1777 = scmp.lt.s32.totalorder %s22, 1
      %s1778 = scalar_select %p1777, %s22, 1
      %p1779 = scmp.lt.s32.totalorder %s23, 1
      %s1780 = scalar_select %p1779, %s23, 1
      %s1781 = smul.addr %s1778, 2
      %s1782 = sadd.s32 %s1780, %s1781
      %s1783 = smul.addr %s1782, 2
      %s1784 = scalar_lea.vmem %s6, %s1783
      // Predicated region
      $region41: #{_double_conv_impl.4} parent=39 // pred_check
        %p1785 = pneg %p171
      $region42: #{_double_conv_impl.4} parent=39 // pred_check_branch
        %1787 = sbr.rel (%p1785) target = $region44
      $region43: #{_double_conv_impl.4} parent=39 // pred_region
        %s1788 = smul.u32 8, %s23
      $region44: #{_double_conv_impl.4} parent=39 // pred_fallthru
        _
      // Predicated region
      $region45: #{_double_conv_impl.4} parent=39 // pred_check
        %p1789 = pneg %p199
      $region46: #{_double_conv_impl.4} parent=39 // pred_check_branch
        %1791 = sbr.rel (%p1789) target = $region48
      $region47: #{_double_conv_impl.4} parent=39 // pred_region
        _
      $region48: #{_double_conv_impl.4} parent=39 // pred_fallthru
        _
    $region40: #{_double_conv_impl.4} parent=5 // pred_fallthru
      _
    %p1792 = scmp.le.s32.totalorder 2, %s13
    // Predicated region
    $region49: #{_double_conv_impl.4} parent=5 // pred_check
      %p1793 = pneg %p1792
    $region50: #{_double_conv_impl.4} parent=5 // pred_check_branch
      %1795 = sbr.rel (%p1793) target = $region52
    $region51: #{_double_conv_impl.4} parent=5 // pred_region
      %s1796 = ssub.s32 %s13, 2
      // Predicated region
      $region53: #{_double_conv_impl.4} parent=51 // pred_check
        %p1797 = pneg %p177
      $region54: #{_double_conv_impl.4} parent=51 // pred_check_branch
        %1799 = sbr.rel (%p1797) target = $region56
      $region55: #{_double_conv_impl.4} parent=51 // pred_region
        %s1800 = smul.u32 8, %s25
        %p1801 = scmp.lt.s32.totalorder %s24, 1
        %s1802 = scalar_select %p1801, %s24, 1
        %p1803 = scmp.lt.s32.totalorder %s1800, 15
        %s1804 = scalar_select %p1803, %s1800, 15
        %s1805 = smul.addr %s1804, 2
        %s1806 = smul.addr %s1802, 32
        %s1807 = sadd.s32 %s1805, %s1806
        %s1808 = smul.addr %s1807, 8
        %s1809 = scalar_lea.vmem %s5, %s1808
      $region56: #{_double_conv_impl.4} parent=51 // pred_fallthru
        _
      // Predicated region
      $region57: #{_double_conv_impl.4} parent=51 // pred_check
        %p1810 = pneg %p205
      $region58: #{_double_conv_impl.4} parent=51 // pred_check_branch
        %1812 = sbr.rel (%p1810) target = $region60
      $region59: #{_double_conv_impl.4} parent=51 // pred_region
        %p1813 = scmp.lt.s32.totalorder %s24, 1
        %s1814 = scalar_select %p1813, %s24, 1
        %p1815 = scmp.lt.s32.totalorder %s25, 1
        %s1816 = scalar_select %p1815, %s25, 1
        %s1817 = smul.addr %s1814, 2
        %s1818 = sadd.s32 %s1816, %s1817
        %s1819 = smul.addr %s1818, 2
        %s1820 = scalar_lea.vmem %s6, %s1819
      $region60: #{_double_conv_impl.4} parent=51 // pred_fallthru
        _
    $region52: #{_double_conv_impl.4} parent=5 // pred_fallthru
      _
  $region6: #{_double_conv_impl.4} parent=0 // loop_footer
    %s17 = sadd.s32 1, %s13
  $region7: #{_double_conv_impl.4} parent=0 // loop_footer_branch
    %12 = sbr.rel target = $region3
  $region8: #{_double_conv_impl.4} parent=0 // loop_exit
    _

</llo_original>
